<compile_context>
chip_gen: v7x
topology: tpu7x:2x2x1
jax: 0.10.0
libtpu: 0.0.40
codegen_flags: <defaults>
</compile_context>

<pallas_src>
import functools

import jax
import jax.numpy as jnp
from jax.experimental import pallas as pl
from jax.experimental.pallas import tpu as pltpu


def pcs_head_kernel(
    x_ref,
    wxf_ref, bxf_ref,          # fused [local layer1 (BN folded) | residual]  : (F, 512), (1, 512)
    w2l_ref, b2l_ref,          # local layer2 (BN folded)                     : (256, 128), (1, 128)
    w1g_ref, b1g_ref,          # global layer1                                : (F, 256), (1, 256)
    w2g_ref, b2g_ref,          # global layer2                                : (256, 128), (1, 128)
    wqkv_l_ref,                # local half of in_proj (Q|K|V fused, Q scaled): (128, 768)
    wqkv_g_ref, bqkv_ref,      # global half of in_proj + in_proj bias        : (128, 768), (1, 768)
    wo_ref, bo_ref,            # attention out_proj                           : (256, 256), (1, 256)
    wc_ref, bc_ref,            # classifier, zero-padded to 128 lanes         : (256, 128), (1, 128)
    o_ref,                     # (1, N, 128)
    *, num_heads, kv_chunk,
):
    x = x_ref[0].astype(jnp.float32)                 # (N, F)
    n = x.shape[0]
    embed = wo_ref.shape[0]                          # 256
    head_dim = embed // num_heads                    # 64
    c_mid = w2l_ref.shape[0]                         # 256 (local layer1 width)

    # ---- fused x-contracting matmul: [local layer1 (BN folded) | residual conv1x1]
    xw = jnp.dot(x, wxf_ref[...], preferred_element_type=jnp.float32) + bxf_ref[...]
    h1 = jnp.maximum(xw[:, :c_mid], 0.0)             # (N, 256)
    res = xw[:, c_mid:c_mid + embed]                 # (N, 256)

    # ---- local layer2 (BN folded) + ReLU; Dropout is identity at inference
    local = jnp.maximum(
        jnp.dot(h1, w2l_ref[...], preferred_element_type=jnp.float32) + b2l_ref[...],
        0.0)                                          # (N, 128)

    # ---- global branch: channelwise max over points, then 2-layer MLP (one row per batch)
    g = jnp.max(x, axis=0, keepdims=True)            # (1, F)
    g = jnp.maximum(
        jnp.dot(g, w1g_ref[...], preferred_element_type=jnp.float32) + b1g_ref[...], 0.0)
    g = jnp.maximum(
        jnp.dot(g, w2g_ref[...], preferred_element_type=jnp.float32) + b2g_ref[...], 0.0)  # (1, 128)

    # ---- QKV: concat([local, glob]) @ Wqkv == local @ Wqkv_top + (g @ Wqkv_bot + b)
    qkv_g = jnp.dot(g, wqkv_g_ref[...], preferred_element_type=jnp.float32) + bqkv_ref[...]   # (1, 768)
    qkv = jnp.dot(local, wqkv_l_ref[...], preferred_element_type=jnp.float32) + qkv_g         # (N, 768)
    q_bf = qkv[:, :embed].astype(jnp.bfloat16)            # already scaled by 1/sqrt(hd)
    k_bf = qkv[:, embed:2 * embed].astype(jnp.bfloat16)
    v_bf = qkv[:, 2 * embed:].astype(jnp.bfloat16)

    wo = wo_ref[...]                                       # (256, 256), hoisted once

    # Accumulate out_proj per head: concat(heads) @ Wo == sum_h head_h @ Wo[rows of head h]
    attn = jnp.zeros((n, embed), jnp.float32)
    for hid in range(num_heads):
        lo = hid * head_dim
        qh = q_bf[:, lo:lo + head_dim]                     # (N, 64) bf16
        kh = k_bf[:, lo:lo + head_dim]
        vh = v_bf[:, lo:lo + head_dim]

        # Online (flash-style) softmax over KV chunks; VMEM stays O(N * kv_chunk).
        m_i = jnp.full((n, 1), -jnp.inf, jnp.float32)
        l_i = jnp.zeros((n, 1), jnp.float32)
        acc = jnp.zeros((n, head_dim), jnp.float32)
        for c0 in range(0, n, kv_chunk):
            c1 = min(c0 + kv_chunk, n)
            s = jnp.dot(qh, kh[c0:c1].T, preferred_element_type=jnp.float32)   # (N, ck) f32
            m_new = jnp.maximum(m_i, jnp.max(s, axis=-1, keepdims=True))
            alpha = jnp.exp(m_i - m_new)
            p = jnp.exp(s - m_new)
            l_i = alpha * l_i + jnp.sum(p, axis=-1, keepdims=True)
            acc = alpha * acc + jnp.dot(p.astype(jnp.bfloat16), vh[c0:c1],
                                        preferred_element_type=jnp.float32)
            m_i = m_new
        head_out = acc * pl.reciprocal(l_i, approx=True)                       # (N, 64)
        attn = attn + jnp.dot(head_out, wo[lo:lo + head_dim, :],
                              preferred_element_type=jnp.float32)

    # ---- out_proj bias + residual, then lane-padded classifier
    y = attn + bo_ref[...] + res                                               # (N, 256)
    out = jnp.dot(y, wc_ref[...], preferred_element_type=jnp.float32) + bc_ref[...]
    o_ref[0] = out.astype(o_ref.dtype)                                         # (N, 128)


_WEIGHT_ORDER = [
    "wxf", "bxf", "w2l", "b2l",
    "w1g", "b1g", "w2g", "b2g",
    "wqkv_l", "wqkv_g", "bqkv",
    "wo", "bo", "wc", "bc",
]


def fold_params(p, *, num_heads=4):
    """Host-side constant folding: BN fold, matmul fusion, attn scale fold, lane padding."""
    f = {}
    # local_mlp layer1 with BN folded, fused with the residual conv (both contract x)
    w1lf = p["w1l"] * p["s1"]
    b1lf = p["b1l"] * p["s1"] + p["t1"]
    f["wxf"] = jnp.concatenate([w1lf, p["wr"]], axis=1)       # (F, 512)
    f["bxf"] = jnp.concatenate([b1lf, p["br"]], axis=1)       # (1, 512)
    # local_mlp layer2 with BN folded
    f["w2l"] = p["w2l"] * p["s2"]
    f["b2l"] = p["b2l"] * p["s2"] + p["t2"]
    # global_mlp unchanged
    f["w1g"], f["b1g"] = p["w1g"], p["b1g"]
    f["w2g"], f["b2g"] = p["w2g"], p["b2g"]
    # fold the 1/sqrt(head_dim) attention scale into Wq / bq
    embed = p["wq"].shape[1]
    head_dim = embed // num_heads
    qscale = 1.0 / (float(head_dim) ** 0.5)
    wq, bq = p["wq"] * qscale, p["bq"] * qscale
    # split the QKV contraction into local / global halves and fuse Q|K|V
    half = p["w2l"].shape[1]                                  # 128
    f["wqkv_l"] = jnp.concatenate(
        [wq[:half], p["wk"][:half], p["wv"][:half]], axis=1)        # (128, 768)
    f["wqkv_g"] = jnp.concatenate(
        [wq[half:], p["wk"][half:], p["wv"][half:]], axis=1)        # (128, 768)
    f["bqkv"] = jnp.concatenate([bq, p["bk"], p["bv"]], axis=1)     # (1, 768)
    f["wo"], f["bo"] = p["wo"], p["bo"]
    # classifier zero-padded to a lane-dense (multiple-of-128) output width
    num_parts = p["wc"].shape[1]
    p_pad = max(128, -(-num_parts // 128) * 128)
    f["wc"] = jnp.pad(p["wc"], ((0, 0), (0, p_pad - num_parts)))
    f["bc"] = jnp.pad(p["bc"], ((0, 0), (0, p_pad - num_parts)))
    return f


def pcs_head_forward(point_features, params, *, num_heads=4, kv_chunk=512):
    """point_features: (B, N, F) -> logits (B, N, num_parts)."""
    B, N, F = point_features.shape
    P = params["wc"].shape[1]
    folded = fold_params(params, num_heads=num_heads)
    P_pad = folded["wc"].shape[1]
    kv_chunk = max(1, min(kv_chunk, N))

    weights = [folded[k] for k in _WEIGHT_ORDER]

    in_specs = [pl.BlockSpec((1, N, F), lambda b: (b, 0, 0))]
    # Weight index maps are constant across the grid, so Pallas DMAs them once.
    in_specs += [pl.BlockSpec(w.shape, lambda b: (0, 0)) for w in weights]

    kernel = functools.partial(pcs_head_kernel, num_heads=num_heads, kv_chunk=kv_chunk)
    out = pl.pallas_call(
        kernel,
        out_shape=jax.ShapeDtypeStruct((B, N, P_pad), jnp.float32),
        grid=(B,),
        in_specs=in_specs,
        out_specs=pl.BlockSpec((1, N, P_pad), lambda b: (b, 0, 0)),
        compiler_params=pltpu.CompilerParams(dimension_semantics=("parallel",)),
    )(point_features, *weights)
    return out[..., :P]


def pcs_head_reference(point_features, params, *, num_heads=4):
    """Pure-JAX (f32) mirror of the PyTorch forward, inference semantics."""
    x = point_features                                        # (B, N, F)
    h = jnp.maximum((x @ params["w1l"] + params["b1l"]) * params["s1"] + params["t1"], 0.0)
    local = jnp.maximum((h @ params["w2l"] + params["b2l"]) * params["s2"] + params["t2"], 0.0)
    g = jnp.max(x, axis=1, keepdims=True)                     # (B, 1, F)
    g = jnp.maximum(g @ params["w1g"] + params["b1g"], 0.0)
    g = jnp.maximum(g @ params["w2g"] + params["b2g"], 0.0)   # (B, 1, 128)
    g = jnp.broadcast_to(g, local.shape)
    fused = jnp.concatenate([local, g], axis=-1)              # (B, N, 256)
    q = fused @ params["wq"] + params["bq"]
    k = fused @ params["wk"] + params["bk"]
    v = fused @ params["wv"] + params["bv"]
    B, N, E = q.shape
    hd = E // num_heads
    q = q.reshape(B, N, num_heads, hd).transpose(0, 2, 1, 3)
    k = k.reshape(B, N, num_heads, hd).transpose(0, 2, 1, 3)
    v = v.reshape(B, N, num_heads, hd).transpose(0, 2, 1, 3)
    s = jnp.einsum("bhqd,bhkd->bhqk", q, k) / jnp.sqrt(jnp.float32(hd))
    p = jax.nn.softmax(s, axis=-1)
    o = jnp.einsum("bhqk,bhkd->bhqd", p, v)
    o = o.transpose(0, 2, 1, 3).reshape(B, N, E)
    attn = o @ params["wo"] + params["bo"]
    res = x @ params["wr"] + params["br"]
    return (attn + res) @ params["wc"] + params["bc"]


def init_params(key, in_channels, num_parts, embed=256, eps=1e-5):
    """Deterministic synthetic parameters (kernel-ready layout: W stored as (Cin, Cout))."""
    ks = iter(jax.random.split(key, 64))

    def lin(cin, cout, scale=0.1):
        w = jax.random.normal(next(ks), (cin, cout), jnp.float32) * scale
        b = jax.random.normal(next(ks), (1, cout), jnp.float32) * scale
        return w, b

    def bn_fold(c):
        gamma = jax.random.uniform(next(ks), (1, c), jnp.float32, 0.5, 1.5)
        beta = jax.random.normal(next(ks), (1, c), jnp.float32) * 0.1
        mean = jax.random.normal(next(ks), (1, c), jnp.float32) * 0.1
        var = jax.random.uniform(next(ks), (1, c), jnp.float32, 0.5, 1.5)
        scale = gamma / jnp.sqrt(var + eps)
        shift = beta - mean * scale
        return scale, shift

    p = {}
    # local_mlp
    p["w1l"], p["b1l"] = lin(in_channels, 256)
    p["s1"], p["t1"] = bn_fold(256)
    p["w2l"], p["b2l"] = lin(256, 128)
    p["s2"], p["t2"] = bn_fold(128)
    # global_mlp
    p["w1g"], p["b1g"] = lin(in_channels, 256)
    p["w2g"], p["b2g"] = lin(256, 128)
    # attention (in_proj split into Q/K/V, plus out_proj)
    p["wq"], p["bq"] = lin(embed, embed)
    p["wk"], p["bk"] = lin(embed, embed)
    p["wv"], p["bv"] = lin(embed, embed)
    p["wo"], p["bo"] = lin(embed, embed)
    # residual block
    p["wr"], p["br"] = lin(in_channels, 256)
    # classifier
    p["wc"], p["bc"] = lin(256, num_parts)
    return p


if __name__ == "__main__":
    B, N, F = 2, 16, 32          # batch, points, input feature channels
    NUM_PARTS = 50

    key = jax.random.PRNGKey(0)
    k_x, k_p = jax.random.split(key)
    point_features = jax.random.normal(k_x, (B, N, F), jnp.float32)
    params = init_params(k_p, in_channels=F, num_parts=NUM_PARTS)

    out = jax.block_until_ready(pcs_head_forward(point_features, params))
    assert out.shape == (B, N, NUM_PARTS), out.shape
    assert jnp.all(jnp.isfinite(out))

    # Correctness vs. the pure-JAX reference (loose tol: bf16 attention + approx recip).
    ref = jax.block_until_ready(pcs_head_reference(point_features, params))
    max_err = float(jnp.max(jnp.abs(out - ref)))
    assert max_err < 5e-2, f"max abs error vs reference: {max_err}"

    print("KERNEL_OK")
</pallas_src>

<mosaic_0001>
module attributes {stable_mosaic.version = 11 : i64} {
  func.func @pcs_head_kernel(%arg0: i32, %arg1: memref<1x16x32xf32, #tpu.memory_space<vmem>>, %arg2: memref<32x512xf32, #tpu.memory_space<vmem>>, %arg3: memref<1x512xf32, #tpu.memory_space<vmem>>, %arg4: memref<256x128xf32, #tpu.memory_space<vmem>>, %arg5: memref<1x128xf32, #tpu.memory_space<vmem>>, %arg6: memref<32x256xf32, #tpu.memory_space<vmem>>, %arg7: memref<1x256xf32, #tpu.memory_space<vmem>>, %arg8: memref<256x128xf32, #tpu.memory_space<vmem>>, %arg9: memref<1x128xf32, #tpu.memory_space<vmem>>, %arg10: memref<128x768xf32, #tpu.memory_space<vmem>>, %arg11: memref<128x768xf32, #tpu.memory_space<vmem>>, %arg12: memref<1x768xf32, #tpu.memory_space<vmem>>, %arg13: memref<256x256xf32, #tpu.memory_space<vmem>>, %arg14: memref<1x256xf32, #tpu.memory_space<vmem>>, %arg15: memref<256x128xf32, #tpu.memory_space<vmem>>, %arg16: memref<1x128xf32, #tpu.memory_space<vmem>>, %arg17: memref<1x16x128xf32, #tpu.memory_space<vmem>>) attributes {dimension_semantics = [#tpu.dimension_semantics<parallel>], iteration_bounds = array<i64: 2>, scalar_prefetch = 0 : i64, scratch_operands = 0 : i64, tpu.core_type = #tpu.core_type<tc>, window_params = [{transform_indices = @transform_0, window_bounds = array<i64: 1, 16, 32>}, {pipeline_mode = #tpu.pipeline_mode<synchronous>, transform_indices = @transform_1, window_bounds = array<i64: 32, 512>}, {pipeline_mode = #tpu.pipeline_mode<synchronous>, transform_indices = @transform_2, window_bounds = array<i64: 1, 512>}, {pipeline_mode = #tpu.pipeline_mode<synchronous>, transform_indices = @transform_3, window_bounds = array<i64: 256, 128>}, {pipeline_mode = #tpu.pipeline_mode<synchronous>, transform_indices = @transform_4, window_bounds = array<i64: 1, 128>}, {pipeline_mode = #tpu.pipeline_mode<synchronous>, transform_indices = @transform_5, window_bounds = array<i64: 32, 256>}, {pipeline_mode = #tpu.pipeline_mode<synchronous>, transform_indices = @transform_6, window_bounds = array<i64: 1, 256>}, {pipeline_mode = #tpu.pipeline_mode<synchronous>, transform_indices = @transform_7, window_bounds = array<i64: 256, 128>}, {pipeline_mode = #tpu.pipeline_mode<synchronous>, transform_indices = @transform_8, window_bounds = array<i64: 1, 128>}, {pipeline_mode = #tpu.pipeline_mode<synchronous>, transform_indices = @transform_9, window_bounds = array<i64: 128, 768>}, {pipeline_mode = #tpu.pipeline_mode<synchronous>, transform_indices = @transform_10, window_bounds = array<i64: 128, 768>}, {pipeline_mode = #tpu.pipeline_mode<synchronous>, transform_indices = @transform_11, window_bounds = array<i64: 1, 768>}, {pipeline_mode = #tpu.pipeline_mode<synchronous>, transform_indices = @transform_12, window_bounds = array<i64: 256, 256>}, {pipeline_mode = #tpu.pipeline_mode<synchronous>, transform_indices = @transform_13, window_bounds = array<i64: 1, 256>}, {pipeline_mode = #tpu.pipeline_mode<synchronous>, transform_indices = @transform_14, window_bounds = array<i64: 256, 128>}, {pipeline_mode = #tpu.pipeline_mode<synchronous>, transform_indices = @transform_15, window_bounds = array<i64: 1, 128>}, {transform_indices = @transform_16, window_bounds = array<i64: 1, 16, 128>}]} {
    %c0 = arith.constant 0 : index
    %c0_0 = arith.constant 0 : index
    %c0_1 = arith.constant 0 : index
    %0 = vector.load %arg1[%c0, %c0_0, %c0_1] : memref<1x16x32xf32, #tpu.memory_space<vmem>>, vector<1x16x32xf32>
    %1 = vector.shape_cast %0 : vector<1x16x32xf32> to vector<16x32xf32>
    %c0_2 = arith.constant 0 : index
    %c0_3 = arith.constant 0 : index
    %2 = vector.load %arg2[%c0_2, %c0_3] : memref<32x512xf32, #tpu.memory_space<vmem>>, vector<32x512xf32>
    %cst = arith.constant dense<0.000000e+00> : vector<16x512xf32>
    %3 = tpu.matmul %1, %2, %cst {dimension_numbers = #tpu.dot_dimension_numbers<[1], [0], [0], [1], [0, 0, 1, 1], [], []>} : vector<16x32xf32>, vector<32x512xf32>, vector<16x512xf32> -> vector<16x512xf32>
    %c0_4 = arith.constant 0 : index
    %c0_5 = arith.constant 0 : index
    %4 = vector.load %arg3[%c0_4, %c0_5] : memref<1x512xf32, #tpu.memory_space<vmem>>, vector<1x512xf32>
    %5 = vector.broadcast %4 : vector<1x512xf32> to vector<16x512xf32>
    %6 = arith.addf %3, %5 : vector<16x512xf32>
    %7 = vector.extract_strided_slice %6 {offsets = [0, 0], sizes = [16, 256], strides = [1, 1]} : vector<16x512xf32> to vector<16x256xf32>
    %cst_6 = arith.constant 0.000000e+00 : f32
    %8 = vector.broadcast %cst_6 : f32 to vector<16x256xf32>
    %9 = arith.maximumf %7, %8 : vector<16x256xf32>
    %10 = vector.extract_strided_slice %6 {offsets = [0, 256], sizes = [16, 256], strides = [1, 1]} : vector<16x512xf32> to vector<16x256xf32>
    %c0_7 = arith.constant 0 : index
    %c0_8 = arith.constant 0 : index
    %11 = vector.load %arg4[%c0_7, %c0_8] : memref<256x128xf32, #tpu.memory_space<vmem>>, vector<256x128xf32>
    %cst_9 = arith.constant dense<0.000000e+00> : vector<16x128xf32>
    %12 = tpu.matmul %9, %11, %cst_9 {dimension_numbers = #tpu.dot_dimension_numbers<[1], [0], [0], [1], [0, 0, 1, 1], [], []>} : vector<16x256xf32>, vector<256x128xf32>, vector<16x128xf32> -> vector<16x128xf32>
    %c0_10 = arith.constant 0 : index
    %c0_11 = arith.constant 0 : index
    %13 = vector.load %arg5[%c0_10, %c0_11] : memref<1x128xf32, #tpu.memory_space<vmem>>, vector<1x128xf32>
    %14 = vector.broadcast %13 : vector<1x128xf32> to vector<16x128xf32>
    %15 = arith.addf %12, %14 : vector<16x128xf32>
    %cst_12 = arith.constant 0.000000e+00 : f32
    %16 = vector.broadcast %cst_12 : f32 to vector<16x128xf32>
    %17 = arith.maximumf %15, %16 : vector<16x128xf32>
    %cst_13 = arith.constant dense<0xFF800000> : vector<32xf32>
    %18 = vector.multi_reduction <maximumf>, %1, %cst_13 [0] : vector<16x32xf32> to vector<32xf32>
    %19 = vector.shape_cast %18 : vector<32xf32> to vector<1x32xf32>
    %c0_14 = arith.constant 0 : index
    %c0_15 = arith.constant 0 : index
    %20 = vector.load %arg6[%c0_14, %c0_15] : memref<32x256xf32, #tpu.memory_space<vmem>>, vector<32x256xf32>
    %cst_16 = arith.constant dense<0.000000e+00> : vector<1x256xf32>
    %21 = tpu.matmul %19, %20, %cst_16 {dimension_numbers = #tpu.dot_dimension_numbers<[1], [0], [0], [1], [0, 0, 1, 1], [], []>} : vector<1x32xf32>, vector<32x256xf32>, vector<1x256xf32> -> vector<1x256xf32>
    %c0_17 = arith.constant 0 : index
    %c0_18 = arith.constant 0 : index
    %22 = vector.load %arg7[%c0_17, %c0_18] : memref<1x256xf32, #tpu.memory_space<vmem>>, vector<1x256xf32>
    %23 = arith.addf %21, %22 : vector<1x256xf32>
    %cst_19 = arith.constant 0.000000e+00 : f32
    %24 = vector.broadcast %cst_19 : f32 to vector<1x256xf32>
    %25 = arith.maximumf %23, %24 : vector<1x256xf32>
    %c0_20 = arith.constant 0 : index
    %c0_21 = arith.constant 0 : index
    %26 = vector.load %arg8[%c0_20, %c0_21] : memref<256x128xf32, #tpu.memory_space<vmem>>, vector<256x128xf32>
    %cst_22 = arith.constant dense<0.000000e+00> : vector<1x128xf32>
    %27 = tpu.matmul %25, %26, %cst_22 {dimension_numbers = #tpu.dot_dimension_numbers<[1], [0], [0], [1], [0, 0, 1, 1], [], []>} : vector<1x256xf32>, vector<256x128xf32>, vector<1x128xf32> -> vector<1x128xf32>
    %c0_23 = arith.constant 0 : index
    %c0_24 = arith.constant 0 : index
    %28 = vector.load %arg9[%c0_23, %c0_24] : memref<1x128xf32, #tpu.memory_space<vmem>>, vector<1x128xf32>
    %29 = arith.addf %27, %28 : vector<1x128xf32>
    %cst_25 = arith.constant 0.000000e+00 : f32
    %30 = vector.broadcast %cst_25 : f32 to vector<1x128xf32>
    %31 = arith.maximumf %29, %30 : vector<1x128xf32>
    %c0_26 = arith.constant 0 : index
    %c0_27 = arith.constant 0 : index
    %32 = vector.load %arg11[%c0_26, %c0_27] : memref<128x768xf32, #tpu.memory_space<vmem>>, vector<128x768xf32>
    %cst_28 = arith.constant dense<0.000000e+00> : vector<1x768xf32>
    %33 = tpu.matmul %31, %32, %cst_28 {dimension_numbers = #tpu.dot_dimension_numbers<[1], [0], [0], [1], [0, 0, 1, 1], [], []>} : vector<1x128xf32>, vector<128x768xf32>, vector<1x768xf32> -> vector<1x768xf32>
    %c0_29 = arith.constant 0 : index
    %c0_30 = arith.constant 0 : index
    %34 = vector.load %arg12[%c0_29, %c0_30] : memref<1x768xf32, #tpu.memory_space<vmem>>, vector<1x768xf32>
    %35 = arith.addf %33, %34 : vector<1x768xf32>
    %c0_31 = arith.constant 0 : index
    %c0_32 = arith.constant 0 : index
    %36 = vector.load %arg10[%c0_31, %c0_32] : memref<128x768xf32, #tpu.memory_space<vmem>>, vector<128x768xf32>
    %cst_33 = arith.constant dense<0.000000e+00> : vector<16x768xf32>
    %37 = tpu.matmul %17, %36, %cst_33 {dimension_numbers = #tpu.dot_dimension_numbers<[1], [0], [0], [1], [0, 0, 1, 1], [], []>} : vector<16x128xf32>, vector<128x768xf32>, vector<16x768xf32> -> vector<16x768xf32>
    %38 = vector.broadcast %35 : vector<1x768xf32> to vector<16x768xf32>
    %39 = arith.addf %37, %38 : vector<16x768xf32>
    %40 = vector.extract_strided_slice %39 {offsets = [0, 0], sizes = [16, 256], strides = [1, 1]} : vector<16x768xf32> to vector<16x256xf32>
    %41 = arith.truncf %40 : vector<16x256xf32> to vector<16x256xbf16>
    %42 = vector.extract_strided_slice %39 {offsets = [0, 256], sizes = [16, 256], strides = [1, 1]} : vector<16x768xf32> to vector<16x256xf32>
    %43 = arith.truncf %42 : vector<16x256xf32> to vector<16x256xbf16>
    %44 = vector.extract_strided_slice %39 {offsets = [0, 512], sizes = [16, 256], strides = [1, 1]} : vector<16x768xf32> to vector<16x256xf32>
    %45 = arith.truncf %44 : vector<16x256xf32> to vector<16x256xbf16>
    %c0_34 = arith.constant 0 : index
    %c0_35 = arith.constant 0 : index
    %46 = vector.load %arg13[%c0_34, %c0_35] : memref<256x256xf32, #tpu.memory_space<vmem>>, vector<256x256xf32>
    %cst_36 = arith.constant 0.000000e+00 : f32
    %47 = vector.broadcast %cst_36 : f32 to vector<16x256xf32>
    %48 = vector.extract_strided_slice %41 {offsets = [0, 0], sizes = [16, 64], strides = [1, 1]} : vector<16x256xbf16> to vector<16x64xbf16>
    %49 = vector.extract_strided_slice %43 {offsets = [0, 0], sizes = [16, 64], strides = [1, 1]} : vector<16x256xbf16> to vector<16x64xbf16>
    %50 = vector.extract_strided_slice %45 {offsets = [0, 0], sizes = [16, 64], strides = [1, 1]} : vector<16x256xbf16> to vector<16x64xbf16>
    %cst_37 = arith.constant 0xFF800000 : f32
    %51 = vector.broadcast %cst_37 : f32 to vector<16x1xf32>
    %cst_38 = arith.constant 0.000000e+00 : f32
    %52 = vector.broadcast %cst_38 : f32 to vector<16x1xf32>
    %cst_39 = arith.constant 0.000000e+00 : f32
    %53 = vector.broadcast %cst_39 : f32 to vector<16x64xf32>
    %54 = tpu.transpose %49, [1, 0] : vector<16x64xbf16> -> vector<64x16xbf16>
    %cst_40 = arith.constant dense<0.000000e+00> : vector<16x16xf32>
    %55 = tpu.matmul %48, %54, %cst_40 {dimension_numbers = #tpu.dot_dimension_numbers<[1], [0], [0], [1], [0, 0, 1, 1], [], []>} : vector<16x64xbf16>, vector<64x16xbf16>, vector<16x16xf32> -> vector<16x16xf32>
    %cst_41 = arith.constant dense<0xFF800000> : vector<16xf32>
    %56 = vector.multi_reduction <maximumf>, %55, %cst_41 [1] : vector<16x16xf32> to vector<16xf32>
    %57 = vector.shape_cast %56 : vector<16xf32> to vector<16x1xf32>
    %58 = arith.maximumf %51, %57 : vector<16x1xf32>
    %59 = arith.subf %51, %58 : vector<16x1xf32>
    %60 = math.exp %59 : vector<16x1xf32>
    %61 = vector.broadcast %58 : vector<16x1xf32> to vector<16x16xf32>
    %62 = arith.subf %55, %61 : vector<16x16xf32>
    %63 = math.exp %62 : vector<16x16xf32>
    %64 = arith.mulf %60, %52 : vector<16x1xf32>
    %cst_42 = arith.constant dense<0.000000e+00> : vector<16xf32>
    %65 = vector.multi_reduction <add>, %63, %cst_42 [1] : vector<16x16xf32> to vector<16xf32>
    %66 = vector.shape_cast %65 : vector<16xf32> to vector<16x1xf32>
    %67 = arith.addf %64, %66 : vector<16x1xf32>
    %68 = vector.broadcast %60 : vector<16x1xf32> to vector<16x64xf32>
    %69 = arith.mulf %68, %53 : vector<16x64xf32>
    %70 = arith.truncf %63 : vector<16x16xf32> to vector<16x16xbf16>
    %cst_43 = arith.constant dense<0.000000e+00> : vector<16x64xf32>
    %71 = tpu.matmul %70, %50, %cst_43 {dimension_numbers = #tpu.dot_dimension_numbers<[1], [0], [0], [1], [0, 0, 1, 1], [], []>} : vector<16x16xbf16>, vector<16x64xbf16>, vector<16x64xf32> -> vector<16x64xf32>
    %72 = arith.addf %69, %71 : vector<16x64xf32>
    %73 = tpu.reciprocal %67 {approx = true} : vector<16x1xf32> -> vector<16x1xf32>
    %74 = vector.broadcast %73 : vector<16x1xf32> to vector<16x64xf32>
    %75 = arith.mulf %72, %74 : vector<16x64xf32>
    %76 = vector.extract_strided_slice %46 {offsets = [0, 0], sizes = [64, 256], strides = [1, 1]} : vector<256x256xf32> to vector<64x256xf32>
    %cst_44 = arith.constant dense<0.000000e+00> : vector<16x256xf32>
    %77 = tpu.matmul %75, %76, %cst_44 {dimension_numbers = #tpu.dot_dimension_numbers<[1], [0], [0], [1], [0, 0, 1, 1], [], []>} : vector<16x64xf32>, vector<64x256xf32>, vector<16x256xf32> -> vector<16x256xf32>
    %78 = arith.addf %47, %77 : vector<16x256xf32>
    %79 = vector.extract_strided_slice %41 {offsets = [0, 64], sizes = [16, 64], strides = [1, 1]} : vector<16x256xbf16> to vector<16x64xbf16>
    %80 = vector.extract_strided_slice %43 {offsets = [0, 64], sizes = [16, 64], strides = [1, 1]} : vector<16x256xbf16> to vector<16x64xbf16>
    %81 = vector.extract_strided_slice %45 {offsets = [0, 64], sizes = [16, 64], strides = [1, 1]} : vector<16x256xbf16> to vector<16x64xbf16>
    %cst_45 = arith.constant 0xFF800000 : f32
    %82 = vector.broadcast %cst_45 : f32 to vector<16x1xf32>
    %cst_46 = arith.constant 0.000000e+00 : f32
    %83 = vector.broadcast %cst_46 : f32 to vector<16x1xf32>
    %cst_47 = arith.constant 0.000000e+00 : f32
    %84 = vector.broadcast %cst_47 : f32 to vector<16x64xf32>
    %85 = tpu.transpose %80, [1, 0] : vector<16x64xbf16> -> vector<64x16xbf16>
    %cst_48 = arith.constant dense<0.000000e+00> : vector<16x16xf32>
    %86 = tpu.matmul %79, %85, %cst_48 {dimension_numbers = #tpu.dot_dimension_numbers<[1], [0], [0], [1], [0, 0, 1, 1], [], []>} : vector<16x64xbf16>, vector<64x16xbf16>, vector<16x16xf32> -> vector<16x16xf32>
    %cst_49 = arith.constant dense<0xFF800000> : vector<16xf32>
    %87 = vector.multi_reduction <maximumf>, %86, %cst_49 [1] : vector<16x16xf32> to vector<16xf32>
    %88 = vector.shape_cast %87 : vector<16xf32> to vector<16x1xf32>
    %89 = arith.maximumf %82, %88 : vector<16x1xf32>
    %90 = arith.subf %82, %89 : vector<16x1xf32>
    %91 = math.exp %90 : vector<16x1xf32>
    %92 = vector.broadcast %89 : vector<16x1xf32> to vector<16x16xf32>
    %93 = arith.subf %86, %92 : vector<16x16xf32>
    %94 = math.exp %93 : vector<16x16xf32>
    %95 = arith.mulf %91, %83 : vector<16x1xf32>
    %cst_50 = arith.constant dense<0.000000e+00> : vector<16xf32>
    %96 = vector.multi_reduction <add>, %94, %cst_50 [1] : vector<16x16xf32> to vector<16xf32>
    %97 = vector.shape_cast %96 : vector<16xf32> to vector<16x1xf32>
    %98 = arith.addf %95, %97 : vector<16x1xf32>
    %99 = vector.broadcast %91 : vector<16x1xf32> to vector<16x64xf32>
    %100 = arith.mulf %99, %84 : vector<16x64xf32>
    %101 = arith.truncf %94 : vector<16x16xf32> to vector<16x16xbf16>
    %cst_51 = arith.constant dense<0.000000e+00> : vector<16x64xf32>
    %102 = tpu.matmul %101, %81, %cst_51 {dimension_numbers = #tpu.dot_dimension_numbers<[1], [0], [0], [1], [0, 0, 1, 1], [], []>} : vector<16x16xbf16>, vector<16x64xbf16>, vector<16x64xf32> -> vector<16x64xf32>
    %103 = arith.addf %100, %102 : vector<16x64xf32>
    %104 = tpu.reciprocal %98 {approx = true} : vector<16x1xf32> -> vector<16x1xf32>
    %105 = vector.broadcast %104 : vector<16x1xf32> to vector<16x64xf32>
    %106 = arith.mulf %103, %105 : vector<16x64xf32>
    %107 = vector.extract_strided_slice %46 {offsets = [64, 0], sizes = [64, 256], strides = [1, 1]} : vector<256x256xf32> to vector<64x256xf32>
    %cst_52 = arith.constant dense<0.000000e+00> : vector<16x256xf32>
    %108 = tpu.matmul %106, %107, %cst_52 {dimension_numbers = #tpu.dot_dimension_numbers<[1], [0], [0], [1], [0, 0, 1, 1], [], []>} : vector<16x64xf32>, vector<64x256xf32>, vector<16x256xf32> -> vector<16x256xf32>
    %109 = arith.addf %78, %108 : vector<16x256xf32>
    %110 = vector.extract_strided_slice %41 {offsets = [0, 128], sizes = [16, 64], strides = [1, 1]} : vector<16x256xbf16> to vector<16x64xbf16>
    %111 = vector.extract_strided_slice %43 {offsets = [0, 128], sizes = [16, 64], strides = [1, 1]} : vector<16x256xbf16> to vector<16x64xbf16>
    %112 = vector.extract_strided_slice %45 {offsets = [0, 128], sizes = [16, 64], strides = [1, 1]} : vector<16x256xbf16> to vector<16x64xbf16>
    %cst_53 = arith.constant 0xFF800000 : f32
    %113 = vector.broadcast %cst_53 : f32 to vector<16x1xf32>
    %cst_54 = arith.constant 0.000000e+00 : f32
    %114 = vector.broadcast %cst_54 : f32 to vector<16x1xf32>
    %cst_55 = arith.constant 0.000000e+00 : f32
    %115 = vector.broadcast %cst_55 : f32 to vector<16x64xf32>
    %116 = tpu.transpose %111, [1, 0] : vector<16x64xbf16> -> vector<64x16xbf16>
    %cst_56 = arith.constant dense<0.000000e+00> : vector<16x16xf32>
    %117 = tpu.matmul %110, %116, %cst_56 {dimension_numbers = #tpu.dot_dimension_numbers<[1], [0], [0], [1], [0, 0, 1, 1], [], []>} : vector<16x64xbf16>, vector<64x16xbf16>, vector<16x16xf32> -> vector<16x16xf32>
    %cst_57 = arith.constant dense<0xFF800000> : vector<16xf32>
    %118 = vector.multi_reduction <maximumf>, %117, %cst_57 [1] : vector<16x16xf32> to vector<16xf32>
    %119 = vector.shape_cast %118 : vector<16xf32> to vector<16x1xf32>
    %120 = arith.maximumf %113, %119 : vector<16x1xf32>
    %121 = arith.subf %113, %120 : vector<16x1xf32>
    %122 = math.exp %121 : vector<16x1xf32>
    %123 = vector.broadcast %120 : vector<16x1xf32> to vector<16x16xf32>
    %124 = arith.subf %117, %123 : vector<16x16xf32>
    %125 = math.exp %124 : vector<16x16xf32>
    %126 = arith.mulf %122, %114 : vector<16x1xf32>
    %cst_58 = arith.constant dense<0.000000e+00> : vector<16xf32>
    %127 = vector.multi_reduction <add>, %125, %cst_58 [1] : vector<16x16xf32> to vector<16xf32>
    %128 = vector.shape_cast %127 : vector<16xf32> to vector<16x1xf32>
    %129 = arith.addf %126, %128 : vector<16x1xf32>
    %130 = vector.broadcast %122 : vector<16x1xf32> to vector<16x64xf32>
    %131 = arith.mulf %130, %115 : vector<16x64xf32>
    %132 = arith.truncf %125 : vector<16x16xf32> to vector<16x16xbf16>
    %cst_59 = arith.constant dense<0.000000e+00> : vector<16x64xf32>
    %133 = tpu.matmul %132, %112, %cst_59 {dimension_numbers = #tpu.dot_dimension_numbers<[1], [0], [0], [1], [0, 0, 1, 1], [], []>} : vector<16x16xbf16>, vector<16x64xbf16>, vector<16x64xf32> -> vector<16x64xf32>
    %134 = arith.addf %131, %133 : vector<16x64xf32>
    %135 = tpu.reciprocal %129 {approx = true} : vector<16x1xf32> -> vector<16x1xf32>
    %136 = vector.broadcast %135 : vector<16x1xf32> to vector<16x64xf32>
    %137 = arith.mulf %134, %136 : vector<16x64xf32>
    %138 = vector.extract_strided_slice %46 {offsets = [128, 0], sizes = [64, 256], strides = [1, 1]} : vector<256x256xf32> to vector<64x256xf32>
    %cst_60 = arith.constant dense<0.000000e+00> : vector<16x256xf32>
    %139 = tpu.matmul %137, %138, %cst_60 {dimension_numbers = #tpu.dot_dimension_numbers<[1], [0], [0], [1], [0, 0, 1, 1], [], []>} : vector<16x64xf32>, vector<64x256xf32>, vector<16x256xf32> -> vector<16x256xf32>
    %140 = arith.addf %109, %139 : vector<16x256xf32>
    %141 = vector.extract_strided_slice %41 {offsets = [0, 192], sizes = [16, 64], strides = [1, 1]} : vector<16x256xbf16> to vector<16x64xbf16>
    %142 = vector.extract_strided_slice %43 {offsets = [0, 192], sizes = [16, 64], strides = [1, 1]} : vector<16x256xbf16> to vector<16x64xbf16>
    %143 = vector.extract_strided_slice %45 {offsets = [0, 192], sizes = [16, 64], strides = [1, 1]} : vector<16x256xbf16> to vector<16x64xbf16>
    %cst_61 = arith.constant 0xFF800000 : f32
    %144 = vector.broadcast %cst_61 : f32 to vector<16x1xf32>
    %cst_62 = arith.constant 0.000000e+00 : f32
    %145 = vector.broadcast %cst_62 : f32 to vector<16x1xf32>
    %cst_63 = arith.constant 0.000000e+00 : f32
    %146 = vector.broadcast %cst_63 : f32 to vector<16x64xf32>
    %147 = tpu.transpose %142, [1, 0] : vector<16x64xbf16> -> vector<64x16xbf16>
    %cst_64 = arith.constant dense<0.000000e+00> : vector<16x16xf32>
    %148 = tpu.matmul %141, %147, %cst_64 {dimension_numbers = #tpu.dot_dimension_numbers<[1], [0], [0], [1], [0, 0, 1, 1], [], []>} : vector<16x64xbf16>, vector<64x16xbf16>, vector<16x16xf32> -> vector<16x16xf32>
    %cst_65 = arith.constant dense<0xFF800000> : vector<16xf32>
    %149 = vector.multi_reduction <maximumf>, %148, %cst_65 [1] : vector<16x16xf32> to vector<16xf32>
    %150 = vector.shape_cast %149 : vector<16xf32> to vector<16x1xf32>
    %151 = arith.maximumf %144, %150 : vector<16x1xf32>
    %152 = arith.subf %144, %151 : vector<16x1xf32>
    %153 = math.exp %152 : vector<16x1xf32>
    %154 = vector.broadcast %151 : vector<16x1xf32> to vector<16x16xf32>
    %155 = arith.subf %148, %154 : vector<16x16xf32>
    %156 = math.exp %155 : vector<16x16xf32>
    %157 = arith.mulf %153, %145 : vector<16x1xf32>
    %cst_66 = arith.constant dense<0.000000e+00> : vector<16xf32>
    %158 = vector.multi_reduction <add>, %156, %cst_66 [1] : vector<16x16xf32> to vector<16xf32>
    %159 = vector.shape_cast %158 : vector<16xf32> to vector<16x1xf32>
    %160 = arith.addf %157, %159 : vector<16x1xf32>
    %161 = vector.broadcast %153 : vector<16x1xf32> to vector<16x64xf32>
    %162 = arith.mulf %161, %146 : vector<16x64xf32>
    %163 = arith.truncf %156 : vector<16x16xf32> to vector<16x16xbf16>
    %cst_67 = arith.constant dense<0.000000e+00> : vector<16x64xf32>
    %164 = tpu.matmul %163, %143, %cst_67 {dimension_numbers = #tpu.dot_dimension_numbers<[1], [0], [0], [1], [0, 0, 1, 1], [], []>} : vector<16x16xbf16>, vector<16x64xbf16>, vector<16x64xf32> -> vector<16x64xf32>
    %165 = arith.addf %162, %164 : vector<16x64xf32>
    %166 = tpu.reciprocal %160 {approx = true} : vector<16x1xf32> -> vector<16x1xf32>
    %167 = vector.broadcast %166 : vector<16x1xf32> to vector<16x64xf32>
    %168 = arith.mulf %165, %167 : vector<16x64xf32>
    %169 = vector.extract_strided_slice %46 {offsets = [192, 0], sizes = [64, 256], strides = [1, 1]} : vector<256x256xf32> to vector<64x256xf32>
    %cst_68 = arith.constant dense<0.000000e+00> : vector<16x256xf32>
    %170 = tpu.matmul %168, %169, %cst_68 {dimension_numbers = #tpu.dot_dimension_numbers<[1], [0], [0], [1], [0, 0, 1, 1], [], []>} : vector<16x64xf32>, vector<64x256xf32>, vector<16x256xf32> -> vector<16x256xf32>
    %171 = arith.addf %140, %170 : vector<16x256xf32>
    %c0_69 = arith.constant 0 : index
    %c0_70 = arith.constant 0 : index
    %172 = vector.load %arg14[%c0_69, %c0_70] : memref<1x256xf32, #tpu.memory_space<vmem>>, vector<1x256xf32>
    %173 = vector.broadcast %172 : vector<1x256xf32> to vector<16x256xf32>
    %174 = arith.addf %171, %173 : vector<16x256xf32>
    %175 = arith.addf %174, %10 : vector<16x256xf32>
    %c0_71 = arith.constant 0 : index
    %c0_72 = arith.constant 0 : index
    %176 = vector.load %arg15[%c0_71, %c0_72] : memref<256x128xf32, #tpu.memory_space<vmem>>, vector<256x128xf32>
    %cst_73 = arith.constant dense<0.000000e+00> : vector<16x128xf32>
    %177 = tpu.matmul %175, %176, %cst_73 {dimension_numbers = #tpu.dot_dimension_numbers<[1], [0], [0], [1], [0, 0, 1, 1], [], []>} : vector<16x256xf32>, vector<256x128xf32>, vector<16x128xf32> -> vector<16x128xf32>
    %c0_74 = arith.constant 0 : index
    %c0_75 = arith.constant 0 : index
    %178 = vector.load %arg16[%c0_74, %c0_75] : memref<1x128xf32, #tpu.memory_space<vmem>>, vector<1x128xf32>
    %179 = vector.broadcast %178 : vector<1x128xf32> to vector<16x128xf32>
    %180 = arith.addf %177, %179 : vector<16x128xf32>
    %c0_76 = arith.constant 0 : index
    %c0_77 = arith.constant 0 : index
    %c0_78 = arith.constant 0 : index
    %181 = vector.load %arg17[%c0_76, %c0_77, %c0_78] : memref<1x16x128xf32, #tpu.memory_space<vmem>>, vector<1x16x128xf32>
    %182 = vector.shape_cast %181 : vector<1x16x128xf32> to vector<16x128xf32>
    %183 = vector.shape_cast %180 : vector<16x128xf32> to vector<1x16x128xf32>
    tpu.vector_store %arg17[%c0_76, %c0_77, %c0_78], %183 {strides = array<i32>} : memref<1x16x128xf32, #tpu.memory_space<vmem>>, vector<1x16x128xf32>,
    return
  }
  func.func @transform_0(%arg0: i32) -> (i32, i32, i32) {
    %c0_i32 = arith.constant 0 : i32
    %c0_i32_0 = arith.constant 0 : i32
    %c0_i32_1 = arith.constant 0 : i32
    return %arg0, %c0_i32, %c0_i32_0 : i32, i32, i32
  }
  func.func @transform_1(%arg0: i32) -> (i32, i32) {
    %c0_i32 = arith.constant 0 : i32
    %c0_i32_0 = arith.constant 0 : i32
    %c0_i32_1 = arith.constant 0 : i32
    return %c0_i32, %c0_i32_0 : i32, i32
  }
  func.func @transform_2(%arg0: i32) -> (i32, i32) {
    %c0_i32 = arith.constant 0 : i32
    %c0_i32_0 = arith.constant 0 : i32
    %c0_i32_1 = arith.constant 0 : i32
    return %c0_i32, %c0_i32_0 : i32, i32
  }
  func.func @transform_3(%arg0: i32) -> (i32, i32) {
    %c0_i32 = arith.constant 0 : i32
    %c0_i32_0 = arith.constant 0 : i32
    %c0_i32_1 = arith.constant 0 : i32
    return %c0_i32, %c0_i32_0 : i32, i32
  }
  func.func @transform_4(%arg0: i32) -> (i32, i32) {
    %c0_i32 = arith.constant 0 : i32
    %c0_i32_0 = arith.constant 0 : i32
    %c0_i32_1 = arith.constant 0 : i32
    return %c0_i32, %c0_i32_0 : i32, i32
  }
  func.func @transform_5(%arg0: i32) -> (i32, i32) {
    %c0_i32 = arith.constant 0 : i32
    %c0_i32_0 = arith.constant 0 : i32
    %c0_i32_1 = arith.constant 0 : i32
    return %c0_i32, %c0_i32_0 : i32, i32
  }
  func.func @transform_6(%arg0: i32) -> (i32, i32) {
    %c0_i32 = arith.constant 0 : i32
    %c0_i32_0 = arith.constant 0 : i32
    %c0_i32_1 = arith.constant 0 : i32
    return %c0_i32, %c0_i32_0 : i32, i32
  }
  func.func @transform_7(%arg0: i32) -> (i32, i32) {
    %c0_i32 = arith.constant 0 : i32
    %c0_i32_0 = arith.constant 0 : i32
    %c0_i32_1 = arith.constant 0 : i32
    return %c0_i32, %c0_i32_0 : i32, i32
  }
  func.func @transform_8(%arg0: i32) -> (i32, i32) {
    %c0_i32 = arith.constant 0 : i32
    %c0_i32_0 = arith.constant 0 : i32
    %c0_i32_1 = arith.constant 0 : i32
    return %c0_i32, %c0_i32_0 : i32, i32
  }
  func.func @transform_9(%arg0: i32) -> (i32, i32) {
    %c0_i32 = arith.constant 0 : i32
    %c0_i32_0 = arith.constant 0 : i32
    %c0_i32_1 = arith.constant 0 : i32
    return %c0_i32, %c0_i32_0 : i32, i32
  }
  func.func @transform_10(%arg0: i32) -> (i32, i32) {
    %c0_i32 = arith.constant 0 : i32
    %c0_i32_0 = arith.constant 0 : i32
    %c0_i32_1 = arith.constant 0 : i32
    return %c0_i32, %c0_i32_0 : i32, i32
  }
  func.func @transform_11(%arg0: i32) -> (i32, i32) {
    %c0_i32 = arith.constant 0 : i32
    %c0_i32_0 = arith.constant 0 : i32
    %c0_i32_1 = arith.constant 0 : i32
    return %c0_i32, %c0_i32_0 : i32, i32
  }
  func.func @transform_12(%arg0: i32) -> (i32, i32) {
    %c0_i32 = arith.constant 0 : i32
    %c0_i32_0 = arith.constant 0 : i32
    %c0_i32_1 = arith.constant 0 : i32
    return %c0_i32, %c0_i32_0 : i32, i32
  }
  func.func @transform_13(%arg0: i32) -> (i32, i32) {
    %c0_i32 = arith.constant 0 : i32
    %c0_i32_0 = arith.constant 0 : i32
    %c0_i32_1 = arith.constant 0 : i32
    return %c0_i32, %c0_i32_0 : i32, i32
  }
  func.func @transform_14(%arg0: i32) -> (i32, i32) {
    %c0_i32 = arith.constant 0 : i32
    %c0_i32_0 = arith.constant 0 : i32
    %c0_i32_1 = arith.constant 0 : i32
    return %c0_i32, %c0_i32_0 : i32, i32
  }
  func.func @transform_15(%arg0: i32) -> (i32, i32) {
    %c0_i32 = arith.constant 0 : i32
    %c0_i32_0 = arith.constant 0 : i32
    %c0_i32_1 = arith.constant 0 : i32
    return %c0_i32, %c0_i32_0 : i32, i32
  }
  func.func @transform_16(%arg0: i32) -> (i32, i32, i32) {
    %c0_i32 = arith.constant 0 : i32
    %c0_i32_0 = arith.constant 0 : i32
    %c0_i32_1 = arith.constant 0 : i32
    return %arg0, %c0_i32, %c0_i32_0 : i32, i32, i32
  }
}

</mosaic_0001>

<llo_original>
// kernel: tpu_custom_call.1
$region0: #{tpu_custom_call.1}
  #allocation0 [shape = 'u32[]', space=smem, size = 0x4, offset = 0x4, fixed_abs, tag = 'smem constant byte address 0x4 - core index']
  #allocation1 [shape = 'u32[144,128]{1,0:T(1,128)}', space=vmem, size = 0x12000, scoped, tag = 'internal scratch']
  %s0 = inlined_call_operand.hbm [shape: f32[2,16,32], index: 0, kind: input, shape index: {}]
  %s1 = inlined_call_operand.hbm [shape: f32[32,512], index: 1, kind: input, shape index: {}]
  %s2 = inlined_call_operand.vmem [shape: f32[1,512], index: 2, kind: input, shape index: {}]
  %s3 = inlined_call_operand.hbm [shape: f32[256,128], index: 3, kind: input, shape index: {}]
  %s4 = inlined_call_operand.vmem [shape: f32[1,128], index: 4, kind: input, shape index: {}]
  %s5 = inlined_call_operand.hbm [shape: f32[32,256], index: 5, kind: input, shape index: {}]
  %s6 = inlined_call_operand.vmem [shape: f32[1,256], index: 6, kind: input, shape index: {}]
  %s7 = inlined_call_operand.hbm [shape: f32[256,128], index: 7, kind: input, shape index: {}]
  %s8 = inlined_call_operand.vmem [shape: f32[1,128], index: 8, kind: input, shape index: {}]
  %s9 = inlined_call_operand.hbm [shape: f32[128,768], index: 9, kind: input, shape index: {}]
  %s10 = inlined_call_operand.hbm [shape: f32[128,768], index: 10, kind: input, shape index: {}]
  %s11 = inlined_call_operand.vmem [shape: f32[1,768], index: 11, kind: input, shape index: {}]
  %s12 = inlined_call_operand.hbm [shape: f32[256,256], index: 12, kind: input, shape index: {}]
  %s13 = inlined_call_operand.vmem [shape: f32[1,256], index: 13, kind: input, shape index: {}]
  %s14 = inlined_call_operand.hbm [shape: f32[256,128], index: 14, kind: input, shape index: {}]
  %s15 = inlined_call_operand.vmem [shape: f32[1,128], index: 15, kind: input, shape index: {}]
  %s16 = inlined_call_operand.hbm [shape: f32[2,16,128], index: 16, kind: output, shape index: {}]
  %s17 = sld [smem:[#allocation0]]
  $region133: #{tpu_custom_call.1} parent=0
    _
  %s19 = ssub.s32 1, %s17
  %s20 = scalar_select 0, %s19, %s17
  $region1: #{tpu_custom_call.1} parent=0
    #allocation2 [shape = 'u8[16384]{0}', space=vmem, size = 0x4000, scoped, tag = 'input window, operand 0']
    #allocation3 [shape = 's32[2]{0}', space=sflag, size = 0x8, scoped, tag = 'scoped memory for tpu_custom_call.1']
    #allocation4 [shape = 's32[2]{0}', space=sflag, size = 0x8, scoped, tag = 'scoped memory for tpu_custom_call.1']
    #allocation5 [shape = 'u8[65536]{0}', space=vmem, size = 0x10000, scoped, tag = 'input window, operand 1, single buffered']
    #allocation6 [shape = 's32[1]{0}', space=sflag, size = 0x4, scoped, tag = 'scoped memory for tpu_custom_call.1']
    #allocation7 [shape = 'u8[131072]{0}', space=vmem, size = 0x20000, scoped, tag = 'input window, operand 3, single buffered']
    #allocation8 [shape = 'u8[32768]{0}', space=vmem, size = 0x8000, scoped, tag = 'input window, operand 5, single buffered']
    #allocation9 [shape = 's32[1]{0}', space=sflag, size = 0x4, scoped, tag = 'scoped memory for tpu_custom_call.1']
    #allocation10 [shape = 'u8[131072]{0}', space=vmem, size = 0x20000, scoped, tag = 'input window, operand 7, single buffered']
    #allocation11 [shape = 'u8[393216]{0}', space=vmem, size = 0x60000, scoped, tag = 'input window, operand 9, single buffered']
    #allocation12 [shape = 's32[1]{0}', space=sflag, size = 0x4, scoped, tag = 'scoped memory for tpu_custom_call.1']
    #allocation13 [shape = 'u8[393216]{0}', space=vmem, size = 0x60000, scoped, tag = 'input window, operand 10, single buffered']
    #allocation14 [shape = 'u8[262144]{0}', space=vmem, size = 0x40000, scoped, tag = 'input window, operand 12, single buffered']
    #allocation15 [shape = 's32[1]{0}', space=sflag, size = 0x4, scoped, tag = 'scoped memory for tpu_custom_call.1']
    #allocation16 [shape = 'u8[131072]{0}', space=vmem, size = 0x20000, scoped, tag = 'input window, operand 14, single buffered']
    #allocation17 [shape = 'u8[16384]{0}', space=vmem, size = 0x4000, scoped, tag = 'output window, operand 0']
    %21 = vsyncpa [#allocation3], 0
    %s22 = scalar_lea.sflag [#allocation3], 1
    %23 = vsyncpa %s22, 0
    %24 = vsyncpa [#allocation6], 0
    %25 = vsyncpa [#allocation9], 0
    %26 = vsyncpa [#allocation12], 0
    %27 = vsyncpa [#allocation15], 0
    %28 = vsyncpa [#allocation4], 0
    %s29 = scalar_lea.sflag [#allocation4], 1
    %30 = vsyncpa %s29, 0
    loop: start=0, step=1, limit=4
    $region2: #{tpu_custom_call.1} parent=1 // loop_pre_header
      _
    $region3: #{tpu_custom_call.1} parent=1 // loop_header
      %s32 = sphi 0, %s36
      %p33 = scmp.ge.s32.totalorder %s32, 4
      %s42 = sphi 0, %s44
      %s45 = sphi 0, %s42
      %s46 = sphi 0, %s45
      %s62 = sphi 0, %s46
      %s66 = sphi 0, %s66
      %s68 = sphi 0, %s66
      %s69 = sphi 0, %s68
      %s83 = sphi 0, %s69
      %s87 = sphi 0, %s87
      %s89 = sphi 0, %s87
      %s90 = sphi 0, %s89
      %s104 = sphi 0, %s90
      %s108 = sphi 0, %s108
      %s110 = sphi 0, %s108
      %s111 = sphi 0, %s110
      %s125 = sphi 0, %s111
      %s129 = sphi 0, %s129
      %s131 = sphi 0, %s129
      %s132 = sphi 0, %s131
      %s146 = sphi 0, %s132
      %s150 = sphi 0, %s150
      %s152 = sphi 0, %s150
      %s153 = sphi 0, %s152
      %s167 = sphi 0, %s153
      %s171 = sphi 0, %s171
      %s173 = sphi 0, %s171
      %s174 = sphi 0, %s173
      %s188 = sphi 0, %s174
      %s192 = sphi 0, %s192
      %s194 = sphi 0, %s192
      %s195 = sphi 0, %s194
      %s209 = sphi 0, %s195
      %s213 = sphi 0, %s213
      %s215 = sphi 0, %s213
      %s216 = sphi 0, %s215
      %s230 = sphi 0, %s216
      %s234 = sphi 0, %s234
      %s236 = sphi 0, %s234
      %s237 = sphi 0, %s236
      %s251 = sphi 0, %s237
      %s255 = sphi 0, %s255
      %s257 = sphi 0, %s255
      %s258 = sphi 0, %s257
      %s272 = sphi 0, %s258
      %s276 = sphi 0, %s276
      %s278 = sphi 0, %s276
      %s279 = sphi 0, %s278
      %s293 = sphi 0, %s279
      %s297 = sphi 0, %s297
      %s299 = sphi 0, %s297
      %s300 = sphi 0, %s299
      %s314 = sphi 0, %s300
      %s318 = sphi 0, %s318
      %s320 = sphi 0, %s318
      %s321 = sphi 0, %s320
      %s335 = sphi 0, %s321
      %s339 = sphi 0, %s339
      %s341 = sphi 0, %s339
      %s342 = sphi 0, %s341
      %s356 = sphi 0, %s342
      %s360 = sphi 0, %s360
      %s362 = sphi 0, %s360
      %s363 = sphi 0, %s362
      %s377 = sphi 0, %s363
      %s383 = sphi 0, %s385
      %s386 = sphi 0, %s383
      %s387 = sphi 0, %s386
      %s403 = sphi 0, %s387
    $region4: #{tpu_custom_call.1} parent=1 // loop_header_branch
      %35 = sbr.rel (%p33) target = $region8
    $region5: #{tpu_custom_call.1} parent=1 // loop_body
      %s37 = ssub.s32 %s32, 1
      %s38 = ssub.s32 %s32, 2
      %s39 = sadd.s32 %s32, 1
      %s40 = ssub.s32 %s32, %s39
      %p41 = scmp.eq.s32.totalorder %s40, 0
      %s43 = sadd.s32 %s42, 1
      %s44 = scalar_select %p41, %s42, %s43
      %p47 = pneg %p41
      %p48 = scmp.eq.s32.totalorder %s32, 1
      %p49 = por %p47, %p48
      %p50 = scmp.ne.s32.totalorder %s42, %s45
      %p51 = scmp.eq.s32.totalorder %s32, 0
      %p52 = por %p50, %p51
      %p53 = scmp.ne.s32.totalorder %s42, %s45
      %p54 = scmp.eq.s32.totalorder %s37, 1
      %p55 = por %p53, %p54
      %p56 = scmp.ne.s32.totalorder %s45, %s46
      %p57 = scmp.eq.s32.totalorder %s37, 0
      %p58 = por %p56, %p57
      %p59 = scmp.ne.s32.totalorder %s45, %s46
      %p60 = scmp.eq.s32.totalorder %s38, 1
      %p61 = por %p59, %p60
      %p63 = scmp.ne.s32.totalorder %s46, %s62
      %p64 = scmp.eq.s32.totalorder %s38, 0
      %p65 = por %p63, %p64
      %s67 = sadd.s32 %s66, 1
      %p70 = scmp.eq.s32.totalorder %s32, 1
      %p71 = scmp.ne.s32.totalorder %s66, %s68
      %p72 = scmp.eq.s32.totalorder %s32, 0
      %p73 = por %p71, %p72
      %p74 = scmp.ne.s32.totalorder %s66, %s68
      %p75 = scmp.eq.s32.totalorder %s37, 1
      %p76 = por %p74, %p75
      %p77 = scmp.ne.s32.totalorder %s68, %s69
      %p78 = scmp.eq.s32.totalorder %s37, 0
      %p79 = por %p77, %p78
      %p80 = scmp.ne.s32.totalorder %s68, %s69
      %p81 = scmp.eq.s32.totalorder %s38, 1
      %p82 = por %p80, %p81
      %p84 = scmp.ne.s32.totalorder %s69, %s83
      %p85 = scmp.eq.s32.totalorder %s38, 0
      %p86 = por %p84, %p85
      %s88 = sadd.s32 %s87, 1
      %p91 = scmp.eq.s32.totalorder %s32, 1
      %p92 = scmp.ne.s32.totalorder %s87, %s89
      %p93 = scmp.eq.s32.totalorder %s32, 0
      %p94 = por %p92, %p93
      %p95 = scmp.ne.s32.totalorder %s87, %s89
      %p96 = scmp.eq.s32.totalorder %s37, 1
      %p97 = por %p95, %p96
      %p98 = scmp.ne.s32.totalorder %s89, %s90
      %p99 = scmp.eq.s32.totalorder %s37, 0
      %p100 = por %p98, %p99
      %p101 = scmp.ne.s32.totalorder %s89, %s90
      %p102 = scmp.eq.s32.totalorder %s38, 1
      %p103 = por %p101, %p102
      %p105 = scmp.ne.s32.totalorder %s90, %s104
      %p106 = scmp.eq.s32.totalorder %s38, 0
      %p107 = por %p105, %p106
      %s109 = sadd.s32 %s108, 1
      %p112 = scmp.eq.s32.totalorder %s32, 1
      %p113 = scmp.ne.s32.totalorder %s108, %s110
      %p114 = scmp.eq.s32.totalorder %s32, 0
      %p115 = por %p113, %p114
      %p116 = scmp.ne.s32.totalorder %s108, %s110
      %p117 = scmp.eq.s32.totalorder %s37, 1
      %p118 = por %p116, %p117
      %p119 = scmp.ne.s32.totalorder %s110, %s111
      %p120 = scmp.eq.s32.totalorder %s37, 0
      %p121 = por %p119, %p120
      %p122 = scmp.ne.s32.totalorder %s110, %s111
      %p123 = scmp.eq.s32.totalorder %s38, 1
      %p124 = por %p122, %p123
      %p126 = scmp.ne.s32.totalorder %s111, %s125
      %p127 = scmp.eq.s32.totalorder %s38, 0
      %p128 = por %p126, %p127
      %s130 = sadd.s32 %s129, 1
      %p133 = scmp.eq.s32.totalorder %s32, 1
      %p134 = scmp.ne.s32.totalorder %s129, %s131
      %p135 = scmp.eq.s32.totalorder %s32, 0
      %p136 = por %p134, %p135
      %p137 = scmp.ne.s32.totalorder %s129, %s131
      %p138 = scmp.eq.s32.totalorder %s37, 1
      %p139 = por %p137, %p138
      %p140 = scmp.ne.s32.totalorder %s131, %s132
      %p141 = scmp.eq.s32.totalorder %s37, 0
      %p142 = por %p140, %p141
      %p143 = scmp.ne.s32.totalorder %s131, %s132
      %p144 = scmp.eq.s32.totalorder %s38, 1
      %p145 = por %p143, %p144
      %p147 = scmp.ne.s32.totalorder %s132, %s146
      %p148 = scmp.eq.s32.totalorder %s38, 0
      %p149 = por %p147, %p148
      %s151 = sadd.s32 %s150, 1
      %p154 = scmp.eq.s32.totalorder %s32, 1
      %p155 = scmp.ne.s32.totalorder %s150, %s152
      %p156 = scmp.eq.s32.totalorder %s32, 0
      %p157 = por %p155, %p156
      %p158 = scmp.ne.s32.totalorder %s150, %s152
      %p159 = scmp.eq.s32.totalorder %s37, 1
      %p160 = por %p158, %p159
      %p161 = scmp.ne.s32.totalorder %s152, %s153
      %p162 = scmp.eq.s32.totalorder %s37, 0
      %p163 = por %p161, %p162
      %p164 = scmp.ne.s32.totalorder %s152, %s153
      %p165 = scmp.eq.s32.totalorder %s38, 1
      %p166 = por %p164, %p165
      %p168 = scmp.ne.s32.totalorder %s153, %s167
      %p169 = scmp.eq.s32.totalorder %s38, 0
      %p170 = por %p168, %p169
      %s172 = sadd.s32 %s171, 1
      %p175 = scmp.eq.s32.totalorder %s32, 1
      %p176 = scmp.ne.s32.totalorder %s171, %s173
      %p177 = scmp.eq.s32.totalorder %s32, 0
      %p178 = por %p176, %p177
      %p179 = scmp.ne.s32.totalorder %s171, %s173
      %p180 = scmp.eq.s32.totalorder %s37, 1
      %p181 = por %p179, %p180
      %p182 = scmp.ne.s32.totalorder %s173, %s174
      %p183 = scmp.eq.s32.totalorder %s37, 0
      %p184 = por %p182, %p183
      %p185 = scmp.ne.s32.totalorder %s173, %s174
      %p186 = scmp.eq.s32.totalorder %s38, 1
      %p187 = por %p185, %p186
      %p189 = scmp.ne.s32.totalorder %s174, %s188
      %p190 = scmp.eq.s32.totalorder %s38, 0
      %p191 = por %p189, %p190
      %s193 = sadd.s32 %s192, 1
      %p196 = scmp.eq.s32.totalorder %s32, 1
      %p197 = scmp.ne.s32.totalorder %s192, %s194
      %p198 = scmp.eq.s32.totalorder %s32, 0
      %p199 = por %p197, %p198
      %p200 = scmp.ne.s32.totalorder %s192, %s194
      %p201 = scmp.eq.s32.totalorder %s37, 1
      %p202 = por %p200, %p201
      %p203 = scmp.ne.s32.totalorder %s194, %s195
      %p204 = scmp.eq.s32.totalorder %s37, 0
      %p205 = por %p203, %p204
      %p206 = scmp.ne.s32.totalorder %s194, %s195
      %p207 = scmp.eq.s32.totalorder %s38, 1
      %p208 = por %p206, %p207
      %p210 = scmp.ne.s32.totalorder %s195, %s209
      %p211 = scmp.eq.s32.totalorder %s38, 0
      %p212 = por %p210, %p211
      %s214 = sadd.s32 %s213, 1
      %p217 = scmp.eq.s32.totalorder %s32, 1
      %p218 = scmp.ne.s32.totalorder %s213, %s215
      %p219 = scmp.eq.s32.totalorder %s32, 0
      %p220 = por %p218, %p219
      %p221 = scmp.ne.s32.totalorder %s213, %s215
      %p222 = scmp.eq.s32.totalorder %s37, 1
      %p223 = por %p221, %p222
      %p224 = scmp.ne.s32.totalorder %s215, %s216
      %p225 = scmp.eq.s32.totalorder %s37, 0
      %p226 = por %p224, %p225
      %p227 = scmp.ne.s32.totalorder %s215, %s216
      %p228 = scmp.eq.s32.totalorder %s38, 1
      %p229 = por %p227, %p228
      %p231 = scmp.ne.s32.totalorder %s216, %s230
      %p232 = scmp.eq.s32.totalorder %s38, 0
      %p233 = por %p231, %p232
      %s235 = sadd.s32 %s234, 1
      %p238 = scmp.eq.s32.totalorder %s32, 1
      %p239 = scmp.ne.s32.totalorder %s234, %s236
      %p240 = scmp.eq.s32.totalorder %s32, 0
      %p241 = por %p239, %p240
      %p242 = scmp.ne.s32.totalorder %s234, %s236
      %p243 = scmp.eq.s32.totalorder %s37, 1
      %p244 = por %p242, %p243
      %p245 = scmp.ne.s32.totalorder %s236, %s237
      %p246 = scmp.eq.s32.totalorder %s37, 0
      %p247 = por %p245, %p246
      %p248 = scmp.ne.s32.totalorder %s236, %s237
      %p249 = scmp.eq.s32.totalorder %s38, 1
      %p250 = por %p248, %p249
      %p252 = scmp.ne.s32.totalorder %s237, %s251
      %p253 = scmp.eq.s32.totalorder %s38, 0
      %p254 = por %p252, %p253
      %s256 = sadd.s32 %s255, 1
      %p259 = scmp.eq.s32.totalorder %s32, 1
      %p260 = scmp.ne.s32.totalorder %s255, %s257
      %p261 = scmp.eq.s32.totalorder %s32, 0
      %p262 = por %p260, %p261
      %p263 = scmp.ne.s32.totalorder %s255, %s257
      %p264 = scmp.eq.s32.totalorder %s37, 1
      %p265 = por %p263, %p264
      %p266 = scmp.ne.s32.totalorder %s257, %s258
      %p267 = scmp.eq.s32.totalorder %s37, 0
      %p268 = por %p266, %p267
      %p269 = scmp.ne.s32.totalorder %s257, %s258
      %p270 = scmp.eq.s32.totalorder %s38, 1
      %p271 = por %p269, %p270
      %p273 = scmp.ne.s32.totalorder %s258, %s272
      %p274 = scmp.eq.s32.totalorder %s38, 0
      %p275 = por %p273, %p274
      %s277 = sadd.s32 %s276, 1
      %p280 = scmp.eq.s32.totalorder %s32, 1
      %p281 = scmp.ne.s32.totalorder %s276, %s278
      %p282 = scmp.eq.s32.totalorder %s32, 0
      %p283 = por %p281, %p282
      %p284 = scmp.ne.s32.totalorder %s276, %s278
      %p285 = scmp.eq.s32.totalorder %s37, 1
      %p286 = por %p284, %p285
      %p287 = scmp.ne.s32.totalorder %s278, %s279
      %p288 = scmp.eq.s32.totalorder %s37, 0
      %p289 = por %p287, %p288
      %p290 = scmp.ne.s32.totalorder %s278, %s279
      %p291 = scmp.eq.s32.totalorder %s38, 1
      %p292 = por %p290, %p291
      %p294 = scmp.ne.s32.totalorder %s279, %s293
      %p295 = scmp.eq.s32.totalorder %s38, 0
      %p296 = por %p294, %p295
      %s298 = sadd.s32 %s297, 1
      %p301 = scmp.eq.s32.totalorder %s32, 1
      %p302 = scmp.ne.s32.totalorder %s297, %s299
      %p303 = scmp.eq.s32.totalorder %s32, 0
      %p304 = por %p302, %p303
      %p305 = scmp.ne.s32.totalorder %s297, %s299
      %p306 = scmp.eq.s32.totalorder %s37, 1
      %p307 = por %p305, %p306
      %p308 = scmp.ne.s32.totalorder %s299, %s300
      %p309 = scmp.eq.s32.totalorder %s37, 0
      %p310 = por %p308, %p309
      %p311 = scmp.ne.s32.totalorder %s299, %s300
      %p312 = scmp.eq.s32.totalorder %s38, 1
      %p313 = por %p311, %p312
      %p315 = scmp.ne.s32.totalorder %s300, %s314
      %p316 = scmp.eq.s32.totalorder %s38, 0
      %p317 = por %p315, %p316
      %s319 = sadd.s32 %s318, 1
      %p322 = scmp.eq.s32.totalorder %s32, 1
      %p323 = scmp.ne.s32.totalorder %s318, %s320
      %p324 = scmp.eq.s32.totalorder %s32, 0
      %p325 = por %p323, %p324
      %p326 = scmp.ne.s32.totalorder %s318, %s320
      %p327 = scmp.eq.s32.totalorder %s37, 1
      %p328 = por %p326, %p327
      %p329 = scmp.ne.s32.totalorder %s320, %s321
      %p330 = scmp.eq.s32.totalorder %s37, 0
      %p331 = por %p329, %p330
      %p332 = scmp.ne.s32.totalorder %s320, %s321
      %p333 = scmp.eq.s32.totalorder %s38, 1
      %p334 = por %p332, %p333
      %p336 = scmp.ne.s32.totalorder %s321, %s335
      %p337 = scmp.eq.s32.totalorder %s38, 0
      %p338 = por %p336, %p337
      %s340 = sadd.s32 %s339, 1
      %p343 = scmp.eq.s32.totalorder %s32, 1
      %p344 = scmp.ne.s32.totalorder %s339, %s341
      %p345 = scmp.eq.s32.totalorder %s32, 0
      %p346 = por %p344, %p345
      %p347 = scmp.ne.s32.totalorder %s339, %s341
      %p348 = scmp.eq.s32.totalorder %s37, 1
      %p349 = por %p347, %p348
      %p350 = scmp.ne.s32.totalorder %s341, %s342
      %p351 = scmp.eq.s32.totalorder %s37, 0
      %p352 = por %p350, %p351
      %p353 = scmp.ne.s32.totalorder %s341, %s342
      %p354 = scmp.eq.s32.totalorder %s38, 1
      %p355 = por %p353, %p354
      %p357 = scmp.ne.s32.totalorder %s342, %s356
      %p358 = scmp.eq.s32.totalorder %s38, 0
      %p359 = por %p357, %p358
      %s361 = sadd.s32 %s360, 1
      %p364 = scmp.eq.s32.totalorder %s32, 1
      %p365 = scmp.ne.s32.totalorder %s360, %s362
      %p366 = scmp.eq.s32.totalorder %s32, 0
      %p367 = por %p365, %p366
      %p368 = scmp.ne.s32.totalorder %s360, %s362
      %p369 = scmp.eq.s32.totalorder %s37, 1
      %p370 = por %p368, %p369
      %p371 = scmp.ne.s32.totalorder %s362, %s363
      %p372 = scmp.eq.s32.totalorder %s37, 0
      %p373 = por %p371, %p372
      %p374 = scmp.ne.s32.totalorder %s362, %s363
      %p375 = scmp.eq.s32.totalorder %s38, 1
      %p376 = por %p374, %p375
      %p378 = scmp.ne.s32.totalorder %s363, %s377
      %p379 = scmp.eq.s32.totalorder %s38, 0
      %p380 = por %p378, %p379
      %s381 = ssub.s32 %s32, %s39
      %p382 = scmp.eq.s32.totalorder %s381, 0
      %s384 = sadd.s32 %s383, 1
      %s385 = scalar_select %p382, %s383, %s384
      %p388 = pneg %p382
      %p389 = scmp.eq.s32.totalorder %s32, 1
      %p390 = por %p388, %p389
      %p391 = scmp.ne.s32.totalorder %s383, %s386
      %p392 = scmp.eq.s32.totalorder %s32, 0
      %p393 = por %p391, %p392
      %p394 = scmp.ne.s32.totalorder %s383, %s386
      %p395 = scmp.eq.s32.totalorder %s37, 1
      %p396 = por %p394, %p395
      %p397 = scmp.ne.s32.totalorder %s386, %s387
      %p398 = scmp.eq.s32.totalorder %s37, 0
      %p399 = por %p397, %p398
      %p400 = scmp.ne.s32.totalorder %s386, %s387
      %p401 = scmp.eq.s32.totalorder %s38, 1
      %p402 = por %p400, %p401
      %p404 = scmp.ne.s32.totalorder %s387, %s403
      %p405 = scmp.eq.s32.totalorder %s38, 0
      %p406 = por %p404, %p405
      %p407 = scmp.le.s32.totalorder 1, %s32
      %p408 = scmp.lt.s32.totalorder %s32, 3
      %p409 = pnand %p407, %p408
      %p410 = pneg %p409
      // Predicated region
      $region9: #{tpu_custom_call.1} parent=5 // pred_check
        _
      $region10: #{tpu_custom_call.1} parent=5 // pred_check_branch
        %412 = sbr.rel (%p409) target = $region12
      $region11: #{tpu_custom_call.1} parent=5 // pred_region
        %s413 = ssub.s32 %s32, 1
        // Predicated region
        $region13: #{tpu_custom_call.1} parent=11 // pred_check
          %p414 = pneg %p79
        $region14: #{tpu_custom_call.1} parent=11 // pred_check_branch
          %416 = sbr.rel (%p414) target = $region16
        $region15: #{tpu_custom_call.1} parent=11 // pred_region
          %s418 = ssub.s32 2048, 2048
          %419 = vsyncadd [#allocation6], %s418
          %s420 = sshll.u32 [#allocation5], 4
          %s421 = int_to_ptr.vmem [resolvable:$true] %s420
          %426 = dma.hbm_to_vmem [thread:$0]  %s1, 2048, %s421, [#allocation6], 512, 512, 32
        $region16: #{tpu_custom_call.1} parent=11 // pred_fallthru
          _
        // Predicated region
        $region17: #{tpu_custom_call.1} parent=11 // pred_check
          %p427 = pneg %p100
        $region18: #{tpu_custom_call.1} parent=11 // pred_check_branch
          %429 = sbr.rel (%p427) target = $region20
        $region19: #{tpu_custom_call.1} parent=11 // pred_region
          _
        $region20: #{tpu_custom_call.1} parent=11 // pred_fallthru
          _
        // Predicated region
        $region21: #{tpu_custom_call.1} parent=11 // pred_check
          %p430 = pneg %p121
        $region22: #{tpu_custom_call.1} parent=11 // pred_check_branch
          %432 = sbr.rel (%p430) target = $region24
        $region23: #{tpu_custom_call.1} parent=11 // pred_region
          %s434 = ssub.s32 4096, 4096
          %435 = vsyncadd [#allocation6], %s434
          %s436 = sshll.u32 [#allocation7], 4
          %s437 = int_to_ptr.vmem [resolvable:$true] %s436
          %442 = dma.hbm_to_vmem [thread:$0]  %s3, 4096, %s437, [#allocation6], 128, 128, 8
        $region24: #{tpu_custom_call.1} parent=11 // pred_fallthru
          _
        // Predicated region
        $region25: #{tpu_custom_call.1} parent=11 // pred_check
          %p443 = pneg %p142
        $region26: #{tpu_custom_call.1} parent=11 // pred_check_branch
          %445 = sbr.rel (%p443) target = $region28
        $region27: #{tpu_custom_call.1} parent=11 // pred_region
          _
        $region28: #{tpu_custom_call.1} parent=11 // pred_fallthru
          _
        // Predicated region
        $region29: #{tpu_custom_call.1} parent=11 // pred_check
          %p446 = pneg %p163
        $region30: #{tpu_custom_call.1} parent=11 // pred_check_branch
          %448 = sbr.rel (%p446) target = $region32
        $region31: #{tpu_custom_call.1} parent=11 // pred_region
          %s450 = ssub.s32 1024, 1024
          %451 = vsyncadd [#allocation9], %s450
          %s452 = sshll.u32 [#allocation8], 4
          %s453 = int_to_ptr.vmem [resolvable:$true] %s452
          %458 = dma.hbm_to_vmem [thread:$0]  %s5, 1024, %s453, [#allocation9], 256, 256, 16
        $region32: #{tpu_custom_call.1} parent=11 // pred_fallthru
          _
        // Predicated region
        $region33: #{tpu_custom_call.1} parent=11 // pred_check
          %p459 = pneg %p184
        $region34: #{tpu_custom_call.1} parent=11 // pred_check_branch
          %461 = sbr.rel (%p459) target = $region36
        $region35: #{tpu_custom_call.1} parent=11 // pred_region
          _
        $region36: #{tpu_custom_call.1} parent=11 // pred_fallthru
          _
        // Predicated region
        $region37: #{tpu_custom_call.1} parent=11 // pred_check
          %p462 = pneg %p205
        $region38: #{tpu_custom_call.1} parent=11 // pred_check_branch
          %464 = sbr.rel (%p462) target = $region40
        $region39: #{tpu_custom_call.1} parent=11 // pred_region
          %s466 = ssub.s32 4096, 4096
          %467 = vsyncadd [#allocation9], %s466
          %s468 = sshll.u32 [#allocation10], 4
          %s469 = int_to_ptr.vmem [resolvable:$true] %s468
          %474 = dma.hbm_to_vmem [thread:$0]  %s7, 4096, %s469, [#allocation9], 128, 128, 8
        $region40: #{tpu_custom_call.1} parent=11 // pred_fallthru
          _
        // Predicated region
        $region41: #{tpu_custom_call.1} parent=11 // pred_check
          %p475 = pneg %p226
        $region42: #{tpu_custom_call.1} parent=11 // pred_check_branch
          %477 = sbr.rel (%p475) target = $region44
        $region43: #{tpu_custom_call.1} parent=11 // pred_region
          _
        $region44: #{tpu_custom_call.1} parent=11 // pred_fallthru
          _
        // Predicated region
        $region45: #{tpu_custom_call.1} parent=11 // pred_check
          %p478 = pneg %p247
        $region46: #{tpu_custom_call.1} parent=11 // pred_check_branch
          %480 = sbr.rel (%p478) target = $region48
        $region47: #{tpu_custom_call.1} parent=11 // pred_region
          %s482 = ssub.s32 12288, 12288
          %483 = vsyncadd [#allocation12], %s482
          %s484 = sshll.u32 [#allocation11], 4
          %s485 = int_to_ptr.vmem [resolvable:$true] %s484
          %490 = dma.hbm_to_vmem [thread:$0]  %s9, 12288, %s485, [#allocation12], 768, 768, 48
        $region48: #{tpu_custom_call.1} parent=11 // pred_fallthru
          _
        // Predicated region
        $region49: #{tpu_custom_call.1} parent=11 // pred_check
          %p491 = pneg %p268
        $region50: #{tpu_custom_call.1} parent=11 // pred_check_branch
          %493 = sbr.rel (%p491) target = $region52
        $region51: #{tpu_custom_call.1} parent=11 // pred_region
          %s495 = ssub.s32 12288, 12288
          %496 = vsyncadd [#allocation12], %s495
          %s497 = sshll.u32 [#allocation13], 4
          %s498 = int_to_ptr.vmem [resolvable:$true] %s497
          %503 = dma.hbm_to_vmem [thread:$0]  %s10, 12288, %s498, [#allocation12], 768, 768, 48
        $region52: #{tpu_custom_call.1} parent=11 // pred_fallthru
          _
        // Predicated region
        $region53: #{tpu_custom_call.1} parent=11 // pred_check
          %p504 = pneg %p289
        $region54: #{tpu_custom_call.1} parent=11 // pred_check_branch
          %506 = sbr.rel (%p504) target = $region56
        $region55: #{tpu_custom_call.1} parent=11 // pred_region
          _
        $region56: #{tpu_custom_call.1} parent=11 // pred_fallthru
          _
        // Predicated region
        $region57: #{tpu_custom_call.1} parent=11 // pred_check
          %p507 = pneg %p310
        $region58: #{tpu_custom_call.1} parent=11 // pred_check_branch
          %509 = sbr.rel (%p507) target = $region60
        $region59: #{tpu_custom_call.1} parent=11 // pred_region
          %s511 = ssub.s32 8192, 8192
          %512 = vsyncadd [#allocation15], %s511
          %s513 = sshll.u32 [#allocation14], 4
          %s514 = int_to_ptr.vmem [resolvable:$true] %s513
          %519 = dma.hbm_to_vmem [thread:$0]  %s12, 8192, %s514, [#allocation15], 256, 256, 16
        $region60: #{tpu_custom_call.1} parent=11 // pred_fallthru
          _
        // Predicated region
        $region61: #{tpu_custom_call.1} parent=11 // pred_check
          %p520 = pneg %p331
        $region62: #{tpu_custom_call.1} parent=11 // pred_check_branch
          %522 = sbr.rel (%p520) target = $region64
        $region63: #{tpu_custom_call.1} parent=11 // pred_region
          _
        $region64: #{tpu_custom_call.1} parent=11 // pred_fallthru
          _
        // Predicated region
        $region65: #{tpu_custom_call.1} parent=11 // pred_check
          %p523 = pneg %p352
        $region66: #{tpu_custom_call.1} parent=11 // pred_check_branch
          %525 = sbr.rel (%p523) target = $region68
        $region67: #{tpu_custom_call.1} parent=11 // pred_region
          %s527 = ssub.s32 4096, 4096
          %528 = vsyncadd [#allocation15], %s527
          %s529 = sshll.u32 [#allocation16], 4
          %s530 = int_to_ptr.vmem [resolvable:$true] %s529
          %535 = dma.hbm_to_vmem [thread:$0]  %s14, 4096, %s530, [#allocation15], 128, 128, 8
        $region68: #{tpu_custom_call.1} parent=11 // pred_fallthru
          _
        // Predicated region
        $region69: #{tpu_custom_call.1} parent=11 // pred_check
          %p536 = pneg %p373
        $region70: #{tpu_custom_call.1} parent=11 // pred_check_branch
          %538 = sbr.rel (%p536) target = $region72
        $region71: #{tpu_custom_call.1} parent=11 // pred_region
          _
        $region72: #{tpu_custom_call.1} parent=11 // pred_fallthru
          _
      $region12: #{tpu_custom_call.1} parent=5 // pred_fallthru
        _
      %p539 = scmp.lt.s32.totalorder %s32, 2
      // Predicated region
      $region73: #{tpu_custom_call.1} parent=5 // pred_check
        %p540 = pneg %p539
      $region74: #{tpu_custom_call.1} parent=5 // pred_check_branch
        %542 = sbr.rel (%p540) target = $region76
      $region75: #{tpu_custom_call.1} parent=5 // pred_region
        // Predicated region
        $region77: #{tpu_custom_call.1} parent=75 // pred_check
          %p543 = pneg %p52
        $region78: #{tpu_custom_call.1} parent=75 // pred_check_branch
          %545 = sbr.rel (%p543) target = $region80
        $region79: #{tpu_custom_call.1} parent=75 // pred_region
          %s546 = sand.u32 %s42, 1
          %s547 = scalar_lea.sflag [#allocation3], %s546
          %s548 = sand.u32 %s42, 1
          %s549 = smul.addr %s548, 16
          %s550 = scalar_lea.vmem [#allocation2], %s549
          %s552 = ssub.s32 256, 256
          %553 = vsyncadd %s547, %s552
          %s554 = smul.addr %s32, 2
          %s555 = smul.addr %s554, 128
          %s556 = scalar_lea.hbm %s0, %s555
          %s557 = sshll.u32 %s550, 4
          %s558 = int_to_ptr.vmem [resolvable:$true] %s557
          %563 = dma.hbm_to_vmem [thread:$0]  %s556, 256, %s558, %s547, 128, 128, 8
        $region80: #{tpu_custom_call.1} parent=75 // pred_fallthru
          _
      $region76: #{tpu_custom_call.1} parent=5 // pred_fallthru
        _
      %p564 = scmp.le.s32.totalorder 1, %s32
      %p565 = scmp.lt.s32.totalorder %s32, 3
      %p566 = pnand %p564, %p565
      %p567 = pneg %p566
      // Predicated region
      $region81: #{tpu_custom_call.1} parent=5 // pred_check
        _
      $region82: #{tpu_custom_call.1} parent=5 // pred_check_branch
        %569 = sbr.rel (%p566) target = $region84
      $region83: #{tpu_custom_call.1} parent=5 // pred_region
        %s570 = ssub.s32 %s32, 1
        %s571 = sand.u32 %s45, 1
        %s572 = scalar_lea.sflag [#allocation3], %s571
        %s573 = sand.u32 %s45, 1
        %s574 = smul.addr %s573, 16
        %s575 = scalar_lea.vmem [#allocation2], %s574
        // Predicated region
        $region85: #{tpu_custom_call.1} parent=83 // pred_check
          %p576 = pneg %p58
        $region86: #{tpu_custom_call.1} parent=83 // pred_check_branch
          %578 = sbr.rel (%p576) target = $region88
        $region87: #{tpu_custom_call.1} parent=83 // pred_region
          %579 = dma.done %s572, 256
        $region88: #{tpu_custom_call.1} parent=83 // pred_fallthru
          _
        // Predicated region
        $region89: #{tpu_custom_call.1} parent=83 // pred_check
          %p580 = pneg %p79
        $region90: #{tpu_custom_call.1} parent=83 // pred_check_branch
          %582 = sbr.rel (%p580) target = $region92
        $region91: #{tpu_custom_call.1} parent=83 // pred_region
          %583 = dma.done [#allocation6], 2048
        $region92: #{tpu_custom_call.1} parent=83 // pred_fallthru
          _
        // Predicated region
        $region93: #{tpu_custom_call.1} parent=83 // pred_check
          %p584 = pneg %p121
        $region94: #{tpu_custom_call.1} parent=83 // pred_check_branch
          %586 = sbr.rel (%p584) target = $region96
        $region95: #{tpu_custom_call.1} parent=83 // pred_region
          %587 = dma.done [#allocation6], 4096
        $region96: #{tpu_custom_call.1} parent=83 // pred_fallthru
          _
        // Predicated region
        $region97: #{tpu_custom_call.1} parent=83 // pred_check
          %p588 = pneg %p163
        $region98: #{tpu_custom_call.1} parent=83 // pred_check_branch
          %590 = sbr.rel (%p588) target = $region100
        $region99: #{tpu_custom_call.1} parent=83 // pred_region
          %591 = dma.done [#allocation9], 1024
        $region100: #{tpu_custom_call.1} parent=83 // pred_fallthru
          _
        // Predicated region
        $region101: #{tpu_custom_call.1} parent=83 // pred_check
          %p592 = pneg %p205
        $region102: #{tpu_custom_call.1} parent=83 // pred_check_branch
          %594 = sbr.rel (%p592) target = $region104
        $region103: #{tpu_custom_call.1} parent=83 // pred_region
          %595 = dma.done [#allocation9], 4096
        $region104: #{tpu_custom_call.1} parent=83 // pred_fallthru
          _
        // Predicated region
        $region105: #{tpu_custom_call.1} parent=83 // pred_check
          %p596 = pneg %p247
        $region106: #{tpu_custom_call.1} parent=83 // pred_check_branch
          %598 = sbr.rel (%p596) target = $region108
        $region107: #{tpu_custom_call.1} parent=83 // pred_region
          %599 = dma.done [#allocation12], 12288
        $region108: #{tpu_custom_call.1} parent=83 // pred_fallthru
          _
        // Predicated region
        $region109: #{tpu_custom_call.1} parent=83 // pred_check
          %p600 = pneg %p268
        $region110: #{tpu_custom_call.1} parent=83 // pred_check_branch
          %602 = sbr.rel (%p600) target = $region112
        $region111: #{tpu_custom_call.1} parent=83 // pred_region
          %603 = dma.done [#allocation12], 12288
        $region112: #{tpu_custom_call.1} parent=83 // pred_fallthru
          _
        // Predicated region
        $region113: #{tpu_custom_call.1} parent=83 // pred_check
          %p604 = pneg %p310
        $region114: #{tpu_custom_call.1} parent=83 // pred_check_branch
          %606 = sbr.rel (%p604) target = $region116
        $region115: #{tpu_custom_call.1} parent=83 // pred_region
          %607 = dma.done [#allocation15], 8192
        $region116: #{tpu_custom_call.1} parent=83 // pred_fallthru
          _
        // Predicated region
        $region117: #{tpu_custom_call.1} parent=83 // pred_check
          %p608 = pneg %p352
        $region118: #{tpu_custom_call.1} parent=83 // pred_check_branch
          %610 = sbr.rel (%p608) target = $region120
        $region119: #{tpu_custom_call.1} parent=83 // pred_region
          %611 = dma.done [#allocation15], 4096
        $region120: #{tpu_custom_call.1} parent=83 // pred_fallthru
          _
        %s612 = sand.u32 %s45, 1
        %s613 = scalar_lea.sflag [#allocation3], %s612
        %s614 = sand.u32 %s45, 1
        %s615 = smul.addr %s614, 16
        %s616 = scalar_lea.vmem [#allocation2], %s615
        %p617 = pneg %p58
        %p618 = pneg %p55
        %p619 = pneg %p79
        %p620 = pneg %p76
        %p621 = pneg %p100
        %p622 = pneg %p97
        %p623 = pneg %p121
        %p624 = pneg %p118
        %p625 = pneg %p142
        %p626 = pneg %p139
        %p627 = pneg %p163
        %p628 = pneg %p160
        %p629 = pneg %p184
        %p630 = pneg %p181
        %p631 = pneg %p205
        %p632 = pneg %p202
        %p633 = pneg %p226
        %p634 = pneg %p223
        %p635 = pneg %p247
        %p636 = pneg %p244
        %p637 = pneg %p268
        %p638 = pneg %p265
        %p639 = pneg %p289
        %p640 = pneg %p286
        %p641 = pneg %p310
        %p642 = pneg %p307
        %p643 = pneg %p331
        %p644 = pneg %p328
        %p645 = pneg %p352
        %p646 = pneg %p349
        %p647 = pneg %p373
        %p648 = pneg %p370
        %p649 = pneg %p399
        %p650 = pneg %p396
        %s651 = sand.u32 %s386, 1
        %s652 = scalar_lea.sflag [#allocation4], %s651
        %s653 = sand.u32 %s386, 1
        %s654 = smul.addr %s653, 16
        %s655 = scalar_lea.vmem [#allocation17], %s654
        %v657 = vld [vmem:[%s575] sm:$0xff]
        %v658 = vld [vmem:[%s575 + $0x8] sm:$0xff]
        %v659 = vld [vmem:[#allocation5] sm:$0xff]
        %v660 = vld [vmem:[#allocation5 + $0x8] sm:$0xff]
        %v661 = vld [vmem:[#allocation5 + $0x10] sm:$0xff]
        %v662 = vld [vmem:[#allocation5 + $0x18] sm:$0xff]
        %v663 = vld [vmem:[#allocation5 + $0x20] sm:$0xff]
        %v664 = vld [vmem:[#allocation5 + $0x28] sm:$0xff]
        %v665 = vld [vmem:[#allocation5 + $0x30] sm:$0xff]
        %v666 = vld [vmem:[#allocation5 + $0x38] sm:$0xff]
        %v667 = vld [vmem:[#allocation5 + $0x40] sm:$0xff]
        %v668 = vld [vmem:[#allocation5 + $0x48] sm:$0xff]
        %v669 = vld [vmem:[#allocation5 + $0x50] sm:$0xff]
        %v670 = vld [vmem:[#allocation5 + $0x58] sm:$0xff]
        %v671 = vld [vmem:[#allocation5 + $0x60] sm:$0xff]
        %v672 = vld [vmem:[#allocation5 + $0x68] sm:$0xff]
        %v673 = vld [vmem:[#allocation5 + $0x70] sm:$0xff]
        %v674 = vld [vmem:[#allocation5 + $0x78] sm:$0xff]
        %v675 = vld [vmem:[%s2] sm:$0xf]
        %v677 = vlaneseq
        %v678 = vshrl.u32 %v677, 7
        %v679 = vsub.s32 0, %v678
        %v680 = vrot.slane %v675, %v679
        %v681 = vlaneseq
        %v682 = vshrl.u32 %v681, 7
        %v683 = vsub.s32 1, %v682
        %v684 = vrot.slane %v675, %v683
        %v685 = vlaneseq
        %v686 = vshrl.u32 %v685, 7
        %v687 = vsub.s32 2, %v686
        %v688 = vrot.slane %v675, %v687
        %v689 = vlaneseq
        %v690 = vshrl.u32 %v689, 7
        %v691 = vsub.s32 3, %v690
        %v692 = vrot.slane %v675, %v691
        %vm697 = vcmask 261120
        %v699 = vsel %vm697, %v657, 0
        %v702 = vsel %vm697, %v658, 0
        %704 = vmatprep.subr.mxu0 %v660
        %705 = vmatpush1.msra.mxu0 %v659
        %706 = vmatprep.subr.mxu0 %v664
        %707 = vmatpush1.msra.mxu0 %v663
        %708 = vmatprep.subr.mxu0 %v668
        %709 = vmatpush1.msra.mxu0 %v667
        %710 = vmatprep.subr.mxu0 %v672
        %711 = vmatpush1.msra.mxu0 %v671
        %712 = vmatprep.subr.mxu0 0.0
        %713 = vmatpush1.msra.mxu0 0.0
        %714 = vmatprep.subr.mxu0 0.0
        %715 = vmatpush1.msra.mxu0 0.0
        %716 = vmatprep.subr.mxu0 0.0
        %717 = vmatpush1.msra.mxu0 0.0
        %718 = vmatprep.subr.mxu0 0.0
        %719 = vmatpush1.msra.mxu0 0.0
        %720 = vmatprep.subr.mxu0 0.0
        %721 = vmatpush1.msra.mxu0 0.0
        %722 = vmatprep.subr.mxu0 0.0
        %723 = vmatpush1.msra.mxu0 0.0
        %724 = vmatprep.subr.mxu0 0.0
        %725 = vmatpush1.msra.mxu0 0.0
        %726 = vmatprep.subr.mxu0 0.0
        %727 = vmatpush1.msra.mxu0 0.0
        %728 = vmatprep.subr.mxu0 0.0
        %729 = vmatpush1.msra.mxu0 0.0
        %730 = vmatprep.subr.mxu0 0.0
        %731 = vmatpush1.msra.mxu0 0.0
        %732 = vmatprep.subr.mxu0 0.0
        %733 = vmatpush1.msra.mxu0 0.0
        %734 = vmatprep.subr.mxu0 0.0
        %735 = vmatpush1.msra.mxu0 0.0
        %736 = vmatprep.subr.mxu0 0.0
        %737 = vmatpush1.msra.mxu0 0.0
        %738 = vmatprep.subr.mxu0 0.0
        %739 = vmatpush1.msra.mxu0 0.0
        %740 = vmatprep.subr.mxu0 0.0
        %741 = vmatpush1.msra.mxu0 0.0
        %742 = vmatprep.subr.mxu0 0.0
        %743 = vmatpush1.msra.mxu0 0.0
        %744 = vmatprep.subr.mxu0 0.0
        %745 = vmatpush1.msra.mxu0 0.0
        %746 = vmatprep.subr.mxu0 0.0
        %747 = vmatpush1.msra.mxu0 0.0
        %748 = vmatprep.subr.mxu0 0.0
        %749 = vmatpush1.msra.mxu0 0.0
        %750 = vmatprep.subr.mxu0 0.0
        %751 = vmatpush1.msra.mxu0 0.0
        %752 = vmatprep.subr.mxu0 0.0
        %753 = vmatpush1.msra.mxu0 0.0
        %754 = vmatprep.subr.mxu0 0.0
        %755 = vmatpush1.msra.mxu0 0.0
        %756 = vmatprep.subr.mxu0 0.0
        %757 = vmatpush1.msra.mxu0 0.0
        %758 = vmatprep.subr.mxu0 0.0
        %759 = vmatpush1.msra.mxu0 0.0
        %760 = vmatprep.subr.mxu0 0.0
        %761 = vmatpush1.msra.mxu0 0.0
        %762 = vmatprep.subr.mxu0 0.0
        %763 = vmatpush1.msra.mxu0 0.0
        %764 = vmatprep.subr.mxu0 0.0
        %765 = vmatpush1.msra.mxu0 0.0
        %766 = vmatprep.subr.mxu0 0.0
        %767 = vmatpush1.msra.mxu0 0.0
        %768 = vmatprep.mubr.f32.mxu0 0.0
        %769 = vmatmul.mubr.f32.gmra.mrb[0].mxu0 %v699
        %v770 = vpop.f32.mrb[0].mxu0
        %v771 = vadd.f32 %v680, %v770
        %v772 = vpop.f32.mrb[0].mxu0
        %v773 = vadd.f32 %v684, %v772
        %774 = vmatprep.mubr.f32.mxu0 0.0
        %775 = vmatmul.mubr.f32.gmra.mrb[0].mxu0 %v702
        %v776 = vpop.f32.mrb[0].mxu0
        %v777 = vadd.f32 %v680, %v776
        %v778 = vpop.f32.mrb[0].mxu0
        %v779 = vadd.f32 %v684, %v778
        %780 = vdwg.mxu0
        %781 = vmatprep.subr.mxu0 %v662
        %782 = vmatpush1.msra.mxu0 %v661
        %783 = vmatprep.subr.mxu0 %v666
        %784 = vmatpush1.msra.mxu0 %v665
        %785 = vmatprep.subr.mxu0 %v670
        %786 = vmatpush1.msra.mxu0 %v669
        %787 = vmatprep.subr.mxu0 %v674
        %788 = vmatpush1.msra.mxu0 %v673
        %789 = vmatprep.subr.mxu0 0.0
        %790 = vmatpush1.msra.mxu0 0.0
        %791 = vmatprep.subr.mxu0 0.0
        %792 = vmatpush1.msra.mxu0 0.0
        %793 = vmatprep.subr.mxu0 0.0
        %794 = vmatpush1.msra.mxu0 0.0
        %795 = vmatprep.subr.mxu0 0.0
        %796 = vmatpush1.msra.mxu0 0.0
        %797 = vmatprep.subr.mxu0 0.0
        %798 = vmatpush1.msra.mxu0 0.0
        %799 = vmatprep.subr.mxu0 0.0
        %800 = vmatpush1.msra.mxu0 0.0
        %801 = vmatprep.subr.mxu0 0.0
        %802 = vmatpush1.msra.mxu0 0.0
        %803 = vmatprep.subr.mxu0 0.0
        %804 = vmatpush1.msra.mxu0 0.0
        %805 = vmatprep.subr.mxu0 0.0
        %806 = vmatpush1.msra.mxu0 0.0
        %807 = vmatprep.subr.mxu0 0.0
        %808 = vmatpush1.msra.mxu0 0.0
        %809 = vmatprep.subr.mxu0 0.0
        %810 = vmatpush1.msra.mxu0 0.0
        %811 = vmatprep.subr.mxu0 0.0
        %812 = vmatpush1.msra.mxu0 0.0
        %813 = vmatprep.subr.mxu0 0.0
        %814 = vmatpush1.msra.mxu0 0.0
        %815 = vmatprep.subr.mxu0 0.0
        %816 = vmatpush1.msra.mxu0 0.0
        %817 = vmatprep.subr.mxu0 0.0
        %818 = vmatpush1.msra.mxu0 0.0
        %819 = vmatprep.subr.mxu0 0.0
        %820 = vmatpush1.msra.mxu0 0.0
        %821 = vmatprep.subr.mxu0 0.0
        %822 = vmatpush1.msra.mxu0 0.0
        %823 = vmatprep.subr.mxu0 0.0
        %824 = vmatpush1.msra.mxu0 0.0
        %825 = vmatprep.subr.mxu0 0.0
        %826 = vmatpush1.msra.mxu0 0.0
        %827 = vmatprep.subr.mxu0 0.0
        %828 = vmatpush1.msra.mxu0 0.0
        %829 = vmatprep.subr.mxu0 0.0
        %830 = vmatpush1.msra.mxu0 0.0
        %831 = vmatprep.subr.mxu0 0.0
        %832 = vmatpush1.msra.mxu0 0.0
        %833 = vmatprep.subr.mxu0 0.0
        %834 = vmatpush1.msra.mxu0 0.0
        %835 = vmatprep.subr.mxu0 0.0
        %836 = vmatpush1.msra.mxu0 0.0
        %837 = vmatprep.subr.mxu0 0.0
        %838 = vmatpush1.msra.mxu0 0.0
        %839 = vmatprep.subr.mxu0 0.0
        %840 = vmatpush1.msra.mxu0 0.0
        %841 = vmatprep.subr.mxu0 0.0
        %842 = vmatpush1.msra.mxu0 0.0
        %843 = vmatprep.subr.mxu0 0.0
        %844 = vmatpush1.msra.mxu0 0.0
        %845 = vmatprep.mubr.f32.mxu0 0.0
        %846 = vmatmul.mubr.f32.gmra.mrb[0].mxu0 %v699
        %v847 = vpop.f32.mrb[0].mxu0
        %v848 = vadd.f32 %v688, %v847
        %v849 = vpop.f32.mrb[0].mxu0
        %v850 = vadd.f32 %v692, %v849
        %851 = vmatprep.mubr.f32.mxu0 0.0
        %852 = vmatmul.mubr.f32.gmra.mrb[0].mxu0 %v702
        %v853 = vpop.f32.mrb[0].mxu0
        %v854 = vadd.f32 %v688, %v853
        %v855 = vpop.f32.mrb[0].mxu0
        %v856 = vadd.f32 %v692, %v855
        %857 = vdwg.mxu0
        %v858 = vmax.f32 %v771, 0.0
        %v859 = vmax.f32 %v773, 0.0
        %v860 = vmax.f32 %v777, 0.0
        %v861 = vmax.f32 %v779, 0.0
        %v862 = vld [vmem:[#allocation7] sm:$0xff]
        %v863 = vld [vmem:[#allocation7 + $0x8] sm:$0xff]
        %v864 = vld [vmem:[#allocation7 + $0x10] sm:$0xff]
        %v865 = vld [vmem:[#allocation7 + $0x18] sm:$0xff]
        %v866 = vld [vmem:[#allocation7 + $0x20] sm:$0xff]
        %v867 = vld [vmem:[#allocation7 + $0x28] sm:$0xff]
        %v868 = vld [vmem:[#allocation7 + $0x30] sm:$0xff]
        %v869 = vld [vmem:[#allocation7 + $0x38] sm:$0xff]
        %v870 = vld [vmem:[#allocation7 + $0x40] sm:$0xff]
        %v871 = vld [vmem:[#allocation7 + $0x48] sm:$0xff]
        %v872 = vld [vmem:[#allocation7 + $0x50] sm:$0xff]
        %v873 = vld [vmem:[#allocation7 + $0x58] sm:$0xff]
        %v874 = vld [vmem:[#allocation7 + $0x60] sm:$0xff]
        %v875 = vld [vmem:[#allocation7 + $0x68] sm:$0xff]
        %v876 = vld [vmem:[#allocation7 + $0x70] sm:$0xff]
        %v877 = vld [vmem:[#allocation7 + $0x78] sm:$0xff]
        %v878 = vld [vmem:[#allocation7 + $0x80] sm:$0xff]
        %v879 = vld [vmem:[#allocation7 + $0x88] sm:$0xff]
        %v880 = vld [vmem:[#allocation7 + $0x90] sm:$0xff]
        %v881 = vld [vmem:[#allocation7 + $0x98] sm:$0xff]
        %v882 = vld [vmem:[#allocation7 + $0xa0] sm:$0xff]
        %v883 = vld [vmem:[#allocation7 + $0xa8] sm:$0xff]
        %v884 = vld [vmem:[#allocation7 + $0xb0] sm:$0xff]
        %v885 = vld [vmem:[#allocation7 + $0xb8] sm:$0xff]
        %v886 = vld [vmem:[#allocation7 + $0xc0] sm:$0xff]
        %v887 = vld [vmem:[#allocation7 + $0xc8] sm:$0xff]
        %v888 = vld [vmem:[#allocation7 + $0xd0] sm:$0xff]
        %v889 = vld [vmem:[#allocation7 + $0xd8] sm:$0xff]
        %v890 = vld [vmem:[#allocation7 + $0xe0] sm:$0xff]
        %v891 = vld [vmem:[#allocation7 + $0xe8] sm:$0xff]
        %v892 = vld [vmem:[#allocation7 + $0xf0] sm:$0xff]
        %v893 = vld [vmem:[#allocation7 + $0xf8] sm:$0xff]
        %v894 = vld [vmem:[%s4] sm:$0x1]
        %v896 = vlaneseq
        %v897 = vshrl.u32 %v896, 7
        %v898 = vsub.s32 0, %v897
        %v899 = vrot.slane %v894, %v898
        %901 = vmatprep.subr.mxu0 0.0
        %902 = vmatpush1.msra.mxu0 %v862
        %903 = vmatprep.subr.mxu0 0.0
        %904 = vmatpush1.msra.mxu0 %v863
        %905 = vmatprep.subr.mxu0 0.0
        %906 = vmatpush1.msra.mxu0 %v864
        %907 = vmatprep.subr.mxu0 0.0
        %908 = vmatpush1.msra.mxu0 %v865
        %909 = vmatprep.subr.mxu0 0.0
        %910 = vmatpush1.msra.mxu0 %v866
        %911 = vmatprep.subr.mxu0 0.0
        %912 = vmatpush1.msra.mxu0 %v867
        %913 = vmatprep.subr.mxu0 0.0
        %914 = vmatpush1.msra.mxu0 %v868
        %915 = vmatprep.subr.mxu0 0.0
        %916 = vmatpush1.msra.mxu0 %v869
        %917 = vmatprep.subr.mxu0 0.0
        %918 = vmatpush1.msra.mxu0 %v870
        %919 = vmatprep.subr.mxu0 0.0
        %920 = vmatpush1.msra.mxu0 %v871
        %921 = vmatprep.subr.mxu0 0.0
        %922 = vmatpush1.msra.mxu0 %v872
        %923 = vmatprep.subr.mxu0 0.0
        %924 = vmatpush1.msra.mxu0 %v873
        %925 = vmatprep.subr.mxu0 0.0
        %926 = vmatpush1.msra.mxu0 %v874
        %927 = vmatprep.subr.mxu0 0.0
        %928 = vmatpush1.msra.mxu0 %v875
        %929 = vmatprep.subr.mxu0 0.0
        %930 = vmatpush1.msra.mxu0 %v876
        %931 = vmatprep.subr.mxu0 0.0
        %932 = vmatpush1.msra.mxu0 %v877
        %933 = vmatprep.subr.mxu0 0.0
        %934 = vmatpush1.msra.mxu0 %v878
        %935 = vmatprep.subr.mxu0 0.0
        %936 = vmatpush1.msra.mxu0 %v879
        %937 = vmatprep.subr.mxu0 0.0
        %938 = vmatpush1.msra.mxu0 %v880
        %939 = vmatprep.subr.mxu0 0.0
        %940 = vmatpush1.msra.mxu0 %v881
        %941 = vmatprep.subr.mxu0 0.0
        %942 = vmatpush1.msra.mxu0 %v882
        %943 = vmatprep.subr.mxu0 0.0
        %944 = vmatpush1.msra.mxu0 %v883
        %945 = vmatprep.subr.mxu0 0.0
        %946 = vmatpush1.msra.mxu0 %v884
        %947 = vmatprep.subr.mxu0 0.0
        %948 = vmatpush1.msra.mxu0 %v885
        %949 = vmatprep.subr.mxu0 0.0
        %950 = vmatpush1.msra.mxu0 %v886
        %951 = vmatprep.subr.mxu0 0.0
        %952 = vmatpush1.msra.mxu0 %v887
        %953 = vmatprep.subr.mxu0 0.0
        %954 = vmatpush1.msra.mxu0 %v888
        %955 = vmatprep.subr.mxu0 0.0
        %956 = vmatpush1.msra.mxu0 %v889
        %957 = vmatprep.subr.mxu0 0.0
        %958 = vmatpush1.msra.mxu0 %v890
        %959 = vmatprep.subr.mxu0 0.0
        %960 = vmatpush1.msra.mxu0 %v891
        %961 = vmatprep.subr.mxu0 0.0
        %962 = vmatpush1.msra.mxu0 %v892
        %963 = vmatprep.subr.mxu0 0.0
        %964 = vmatpush1.msra.mxu0 %v893
        %965 = vmatprep.mubr.f32.mxu0 %v859
        %966 = vmatmul.mubr.f32.gmra.mrb[0].mxu0 %v858
        %v967 = vpop.f32.mrb[0].mxu0
        %v968 = vadd.f32 %v899, %v967
        %v969 = vpop.f32.mrb[0].mxu0
        %970 = vmatprep.mubr.f32.mxu0 %v861
        %971 = vmatmul.mubr.f32.gmra.mrb[0].mxu0 %v860
        %v972 = vpop.f32.mrb[0].mxu0
        %v973 = vadd.f32 %v899, %v972
        %v974 = vpop.f32.mrb[0].mxu0
        %975 = vdwg.mxu0
        %v976 = vmax.f32 %v968, 0.0
        %v977 = vmax.f32 %v973, 0.0
        %v978 = vsel %vm697, %v657, -inf
        %v979 = vsel %vm697, %v658, -inf
        %v980 = vmax.f32 %v978, %v979
        %v981 = vrot.slane %v980, 4
        %v982 = vmax.f32 %v980, %v981
        %v983 = vrot.slane %v982, 2
        %v984 = vmax.f32 %v982, %v983
        %v985 = vrot.slane %v984, 1
        %v986 = vmax.f32 %v984, %v985
        %v987 = vld [vmem:[#allocation8] sm:$0xff]
        %v988 = vld [vmem:[#allocation8 + $0x8] sm:$0xff]
        %v989 = vld [vmem:[#allocation8 + $0x10] sm:$0xff]
        %v990 = vld [vmem:[#allocation8 + $0x18] sm:$0xff]
        %v991 = vld [vmem:[#allocation8 + $0x20] sm:$0xff]
        %v992 = vld [vmem:[#allocation8 + $0x28] sm:$0xff]
        %v993 = vld [vmem:[#allocation8 + $0x30] sm:$0xff]
        %v994 = vld [vmem:[#allocation8 + $0x38] sm:$0xff]
        %v995 = vld [vmem:[%s6] sm:$0x3]
        %v997 = vlaneseq
        %v998 = vshrl.u32 %v997, 7
        %v999 = vsub.s32 0, %v998
        %v1000 = vrot.slane %v995, %v999
        %v1001 = vlaneseq
        %v1002 = vshrl.u32 %v1001, 7
        %v1003 = vsub.s32 1, %v1002
        %v1004 = vrot.slane %v995, %v1003
        %v1008 = vsel %vm697, %v986, 0
        %1010 = vmatprep.subr.mxu0 %v988
        %1011 = vmatpush1.msra.mxu0 %v987
        %1012 = vmatprep.subr.mxu0 %v990
        %1013 = vmatpush1.msra.mxu0 %v989
        %1014 = vmatprep.subr.mxu0 %v992
        %1015 = vmatpush1.msra.mxu0 %v991
        %1016 = vmatprep.subr.mxu0 %v994
        %1017 = vmatpush1.msra.mxu0 %v993
        %1018 = vmatprep.subr.mxu0 0.0
        %1019 = vmatpush1.msra.mxu0 0.0
        %1020 = vmatprep.subr.mxu0 0.0
        %1021 = vmatpush1.msra.mxu0 0.0
        %1022 = vmatprep.subr.mxu0 0.0
        %1023 = vmatpush1.msra.mxu0 0.0
        %1024 = vmatprep.subr.mxu0 0.0
        %1025 = vmatpush1.msra.mxu0 0.0
        %1026 = vmatprep.subr.mxu0 0.0
        %1027 = vmatpush1.msra.mxu0 0.0
        %1028 = vmatprep.subr.mxu0 0.0
        %1029 = vmatpush1.msra.mxu0 0.0
        %1030 = vmatprep.subr.mxu0 0.0
        %1031 = vmatpush1.msra.mxu0 0.0
        %1032 = vmatprep.subr.mxu0 0.0
        %1033 = vmatpush1.msra.mxu0 0.0
        %1034 = vmatprep.subr.mxu0 0.0
        %1035 = vmatpush1.msra.mxu0 0.0
        %1036 = vmatprep.subr.mxu0 0.0
        %1037 = vmatpush1.msra.mxu0 0.0
        %1038 = vmatprep.subr.mxu0 0.0
        %1039 = vmatpush1.msra.mxu0 0.0
        %1040 = vmatprep.subr.mxu0 0.0
        %1041 = vmatpush1.msra.mxu0 0.0
        %1042 = vmatprep.subr.mxu0 0.0
        %1043 = vmatpush1.msra.mxu0 0.0
        %1044 = vmatprep.subr.mxu0 0.0
        %1045 = vmatpush1.msra.mxu0 0.0
        %1046 = vmatprep.subr.mxu0 0.0
        %1047 = vmatpush1.msra.mxu0 0.0
        %1048 = vmatprep.subr.mxu0 0.0
        %1049 = vmatpush1.msra.mxu0 0.0
        %1050 = vmatprep.subr.mxu0 0.0
        %1051 = vmatpush1.msra.mxu0 0.0
        %1052 = vmatprep.subr.mxu0 0.0
        %1053 = vmatpush1.msra.mxu0 0.0
        %1054 = vmatprep.subr.mxu0 0.0
        %1055 = vmatpush1.msra.mxu0 0.0
        %1056 = vmatprep.subr.mxu0 0.0
        %1057 = vmatpush1.msra.mxu0 0.0
        %1058 = vmatprep.subr.mxu0 0.0
        %1059 = vmatpush1.msra.mxu0 0.0
        %1060 = vmatprep.subr.mxu0 0.0
        %1061 = vmatpush1.msra.mxu0 0.0
        %1062 = vmatprep.subr.mxu0 0.0
        %1063 = vmatpush1.msra.mxu0 0.0
        %1064 = vmatprep.subr.mxu0 0.0
        %1065 = vmatpush1.msra.mxu0 0.0
        %1066 = vmatprep.subr.mxu0 0.0
        %1067 = vmatpush1.msra.mxu0 0.0
        %1068 = vmatprep.subr.mxu0 0.0
        %1069 = vmatpush1.msra.mxu0 0.0
        %1070 = vmatprep.subr.mxu0 0.0
        %1071 = vmatpush1.msra.mxu0 0.0
        %1072 = vmatprep.subr.mxu0 0.0
        %1073 = vmatpush1.msra.mxu0 0.0
        %1074 = vmatprep.mubr.f32.mxu0 0.0
        %1075 = vmatmul.mubr.f32.gmra.mrb[0].mxu0 %v1008
        %v1076 = vpop.f32.mrb[0].mxu0
        %v1077 = vadd.f32 %v1000, %v1076
        %v1078 = vpop.f32.mrb[0].mxu0
        %v1079 = vadd.f32 %v1004, %v1078
        %1080 = vdwg.mxu0
        %v1081 = vmax.f32 %v1077, 0.0
        %v1082 = vmax.f32 %v1079, 0.0
        %v1083 = vld [vmem:[#allocation10] sm:$0xff]
        %v1084 = vld [vmem:[#allocation10 + $0x8] sm:$0xff]
        %v1085 = vld [vmem:[#allocation10 + $0x10] sm:$0xff]
        %v1086 = vld [vmem:[#allocation10 + $0x18] sm:$0xff]
        %v1087 = vld [vmem:[#allocation10 + $0x20] sm:$0xff]
        %v1088 = vld [vmem:[#allocation10 + $0x28] sm:$0xff]
        %v1089 = vld [vmem:[#allocation10 + $0x30] sm:$0xff]
        %v1090 = vld [vmem:[#allocation10 + $0x38] sm:$0xff]
        %v1091 = vld [vmem:[#allocation10 + $0x40] sm:$0xff]
        %v1092 = vld [vmem:[#allocation10 + $0x48] sm:$0xff]
        %v1093 = vld [vmem:[#allocation10 + $0x50] sm:$0xff]
        %v1094 = vld [vmem:[#allocation10 + $0x58] sm:$0xff]
        %v1095 = vld [vmem:[#allocation10 + $0x60] sm:$0xff]
        %v1096 = vld [vmem:[#allocation10 + $0x68] sm:$0xff]
        %v1097 = vld [vmem:[#allocation10 + $0x70] sm:$0xff]
        %v1098 = vld [vmem:[#allocation10 + $0x78] sm:$0xff]
        %v1099 = vld [vmem:[#allocation10 + $0x80] sm:$0xff]
        %v1100 = vld [vmem:[#allocation10 + $0x88] sm:$0xff]
        %v1101 = vld [vmem:[#allocation10 + $0x90] sm:$0xff]
        %v1102 = vld [vmem:[#allocation10 + $0x98] sm:$0xff]
        %v1103 = vld [vmem:[#allocation10 + $0xa0] sm:$0xff]
        %v1104 = vld [vmem:[#allocation10 + $0xa8] sm:$0xff]
        %v1105 = vld [vmem:[#allocation10 + $0xb0] sm:$0xff]
        %v1106 = vld [vmem:[#allocation10 + $0xb8] sm:$0xff]
        %v1107 = vld [vmem:[#allocation10 + $0xc0] sm:$0xff]
        %v1108 = vld [vmem:[#allocation10 + $0xc8] sm:$0xff]
        %v1109 = vld [vmem:[#allocation10 + $0xd0] sm:$0xff]
        %v1110 = vld [vmem:[#allocation10 + $0xd8] sm:$0xff]
        %v1111 = vld [vmem:[#allocation10 + $0xe0] sm:$0xff]
        %v1112 = vld [vmem:[#allocation10 + $0xe8] sm:$0xff]
        %v1113 = vld [vmem:[#allocation10 + $0xf0] sm:$0xff]
        %v1114 = vld [vmem:[#allocation10 + $0xf8] sm:$0xff]
        %v1115 = vld [vmem:[%s8] sm:$0x1]
        %1116 = vmatprep.subr.mxu0 0.0
        %1117 = vmatpush1.msra.mxu0 %v1083
        %1118 = vmatprep.subr.mxu0 0.0
        %1119 = vmatpush1.msra.mxu0 %v1084
        %1120 = vmatprep.subr.mxu0 0.0
        %1121 = vmatpush1.msra.mxu0 %v1085
        %1122 = vmatprep.subr.mxu0 0.0
        %1123 = vmatpush1.msra.mxu0 %v1086
        %1124 = vmatprep.subr.mxu0 0.0
        %1125 = vmatpush1.msra.mxu0 %v1087
        %1126 = vmatprep.subr.mxu0 0.0
        %1127 = vmatpush1.msra.mxu0 %v1088
        %1128 = vmatprep.subr.mxu0 0.0
        %1129 = vmatpush1.msra.mxu0 %v1089
        %1130 = vmatprep.subr.mxu0 0.0
        %1131 = vmatpush1.msra.mxu0 %v1090
        %1132 = vmatprep.subr.mxu0 0.0
        %1133 = vmatpush1.msra.mxu0 %v1091
        %1134 = vmatprep.subr.mxu0 0.0
        %1135 = vmatpush1.msra.mxu0 %v1092
        %1136 = vmatprep.subr.mxu0 0.0
        %1137 = vmatpush1.msra.mxu0 %v1093
        %1138 = vmatprep.subr.mxu0 0.0
        %1139 = vmatpush1.msra.mxu0 %v1094
        %1140 = vmatprep.subr.mxu0 0.0
        %1141 = vmatpush1.msra.mxu0 %v1095
        %1142 = vmatprep.subr.mxu0 0.0
        %1143 = vmatpush1.msra.mxu0 %v1096
        %1144 = vmatprep.subr.mxu0 0.0
        %1145 = vmatpush1.msra.mxu0 %v1097
        %1146 = vmatprep.subr.mxu0 0.0
        %1147 = vmatpush1.msra.mxu0 %v1098
        %1148 = vmatprep.subr.mxu0 0.0
        %1149 = vmatpush1.msra.mxu0 %v1099
        %1150 = vmatprep.subr.mxu0 0.0
        %1151 = vmatpush1.msra.mxu0 %v1100
        %1152 = vmatprep.subr.mxu0 0.0
        %1153 = vmatpush1.msra.mxu0 %v1101
        %1154 = vmatprep.subr.mxu0 0.0
        %1155 = vmatpush1.msra.mxu0 %v1102
        %1156 = vmatprep.subr.mxu0 0.0
        %1157 = vmatpush1.msra.mxu0 %v1103
        %1158 = vmatprep.subr.mxu0 0.0
        %1159 = vmatpush1.msra.mxu0 %v1104
        %1160 = vmatprep.subr.mxu0 0.0
        %1161 = vmatpush1.msra.mxu0 %v1105
        %1162 = vmatprep.subr.mxu0 0.0
        %1163 = vmatpush1.msra.mxu0 %v1106
        %1164 = vmatprep.subr.mxu0 0.0
        %1165 = vmatpush1.msra.mxu0 %v1107
        %1166 = vmatprep.subr.mxu0 0.0
        %1167 = vmatpush1.msra.mxu0 %v1108
        %1168 = vmatprep.subr.mxu0 0.0
        %1169 = vmatpush1.msra.mxu0 %v1109
        %1170 = vmatprep.subr.mxu0 0.0
        %1171 = vmatpush1.msra.mxu0 %v1110
        %1172 = vmatprep.subr.mxu0 0.0
        %1173 = vmatpush1.msra.mxu0 %v1111
        %1174 = vmatprep.subr.mxu0 0.0
        %1175 = vmatpush1.msra.mxu0 %v1112
        %1176 = vmatprep.subr.mxu0 0.0
        %1177 = vmatpush1.msra.mxu0 %v1113
        %1178 = vmatprep.subr.mxu0 0.0
        %1179 = vmatpush1.msra.mxu0 %v1114
        %1180 = vmatprep.mubr.f32.mxu0 %v1082
        %1181 = vmatmul.mubr.f32.gmra.mrb[0].mxu0 %v1081
        %v1182 = vpop.f32.mrb[0].mxu0
        %v1183 = vadd.f32 %v1115, %v1182
        %v1184 = vpop.f32.mrb[0].mxu0
        %1185 = vdwg.mxu0
        %v1186 = vmax.f32 %v1183, 0.0
        %v1187 = vld [vmem:[#allocation13] sm:$0xff]
        %v1188 = vld [vmem:[#allocation13 + $0x8] sm:$0xff]
        %v1189 = vld [vmem:[#allocation13 + $0x10] sm:$0xff]
        %v1190 = vld [vmem:[#allocation13 + $0x18] sm:$0xff]
        %v1191 = vld [vmem:[#allocation13 + $0x20] sm:$0xff]
        %v1192 = vld [vmem:[#allocation13 + $0x28] sm:$0xff]
        %v1193 = vld [vmem:[#allocation13 + $0x30] sm:$0xff]
        %v1194 = vld [vmem:[#allocation13 + $0x38] sm:$0xff]
        %v1195 = vld [vmem:[#allocation13 + $0x40] sm:$0xff]
        %v1196 = vld [vmem:[#allocation13 + $0x48] sm:$0xff]
        %v1197 = vld [vmem:[#allocation13 + $0x50] sm:$0xff]
        %v1198 = vld [vmem:[#allocation13 + $0x58] sm:$0xff]
        %v1199 = vld [vmem:[#allocation13 + $0x60] sm:$0xff]
        %v1200 = vld [vmem:[#allocation13 + $0x68] sm:$0xff]
        %v1201 = vld [vmem:[#allocation13 + $0x70] sm:$0xff]
        %v1202 = vld [vmem:[#allocation13 + $0x78] sm:$0xff]
        %v1203 = vld [vmem:[#allocation13 + $0x80] sm:$0xff]
        %v1204 = vld [vmem:[#allocation13 + $0x88] sm:$0xff]
        %v1205 = vld [vmem:[#allocation13 + $0x90] sm:$0xff]
        %v1206 = vld [vmem:[#allocation13 + $0x98] sm:$0xff]
        %v1207 = vld [vmem:[#allocation13 + $0xa0] sm:$0xff]
        %v1208 = vld [vmem:[#allocation13 + $0xa8] sm:$0xff]
        %v1209 = vld [vmem:[#allocation13 + $0xb0] sm:$0xff]
        %v1210 = vld [vmem:[#allocation13 + $0xb8] sm:$0xff]
        %v1211 = vld [vmem:[#allocation13 + $0xc0] sm:$0xff]
        %v1212 = vld [vmem:[#allocation13 + $0xc8] sm:$0xff]
        %v1213 = vld [vmem:[#allocation13 + $0xd0] sm:$0xff]
        %v1214 = vld [vmem:[#allocation13 + $0xd8] sm:$0xff]
        %v1215 = vld [vmem:[#allocation13 + $0xe0] sm:$0xff]
        %v1216 = vld [vmem:[#allocation13 + $0xe8] sm:$0xff]
        %v1217 = vld [vmem:[#allocation13 + $0xf0] sm:$0xff]
        %v1218 = vld [vmem:[#allocation13 + $0xf8] sm:$0xff]
        %v1219 = vld [vmem:[#allocation13 + $0x100] sm:$0xff]
        %v1220 = vld [vmem:[#allocation13 + $0x108] sm:$0xff]
        %v1221 = vld [vmem:[#allocation13 + $0x110] sm:$0xff]
        %v1222 = vld [vmem:[#allocation13 + $0x118] sm:$0xff]
        %v1223 = vld [vmem:[#allocation13 + $0x120] sm:$0xff]
        %v1224 = vld [vmem:[#allocation13 + $0x128] sm:$0xff]
        %v1225 = vld [vmem:[#allocation13 + $0x130] sm:$0xff]
        %v1226 = vld [vmem:[#allocation13 + $0x138] sm:$0xff]
        %v1227 = vld [vmem:[#allocation13 + $0x140] sm:$0xff]
        %v1228 = vld [vmem:[#allocation13 + $0x148] sm:$0xff]
        %v1229 = vld [vmem:[#allocation13 + $0x150] sm:$0xff]
        %v1230 = vld [vmem:[#allocation13 + $0x158] sm:$0xff]
        %v1231 = vld [vmem:[#allocation13 + $0x160] sm:$0xff]
        %v1232 = vld [vmem:[#allocation13 + $0x168] sm:$0xff]
        %v1233 = vld [vmem:[#allocation13 + $0x170] sm:$0xff]
        %v1234 = vld [vmem:[#allocation13 + $0x178] sm:$0xff]
        %v1235 = vld [vmem:[#allocation13 + $0x180] sm:$0xff]
        %v1236 = vld [vmem:[#allocation13 + $0x188] sm:$0xff]
        %v1237 = vld [vmem:[#allocation13 + $0x190] sm:$0xff]
        %v1238 = vld [vmem:[#allocation13 + $0x198] sm:$0xff]
        %v1239 = vld [vmem:[#allocation13 + $0x1a0] sm:$0xff]
        %v1240 = vld [vmem:[#allocation13 + $0x1a8] sm:$0xff]
        %v1241 = vld [vmem:[#allocation13 + $0x1b0] sm:$0xff]
        %v1242 = vld [vmem:[#allocation13 + $0x1b8] sm:$0xff]
        %v1243 = vld [vmem:[#allocation13 + $0x1c0] sm:$0xff]
        %v1244 = vld [vmem:[#allocation13 + $0x1c8] sm:$0xff]
        %v1245 = vld [vmem:[#allocation13 + $0x1d0] sm:$0xff]
        %v1246 = vld [vmem:[#allocation13 + $0x1d8] sm:$0xff]
        %v1247 = vld [vmem:[#allocation13 + $0x1e0] sm:$0xff]
        %v1248 = vld [vmem:[#allocation13 + $0x1e8] sm:$0xff]
        %v1249 = vld [vmem:[#allocation13 + $0x1f0] sm:$0xff]
        %v1250 = vld [vmem:[#allocation13 + $0x1f8] sm:$0xff]
        %v1251 = vld [vmem:[#allocation13 + $0x200] sm:$0xff]
        %v1252 = vld [vmem:[#allocation13 + $0x208] sm:$0xff]
        %v1253 = vld [vmem:[#allocation13 + $0x210] sm:$0xff]
        %v1254 = vld [vmem:[#allocation13 + $0x218] sm:$0xff]
        %v1255 = vld [vmem:[#allocation13 + $0x220] sm:$0xff]
        %v1256 = vld [vmem:[#allocation13 + $0x228] sm:$0xff]
        %v1257 = vld [vmem:[#allocation13 + $0x230] sm:$0xff]
        %v1258 = vld [vmem:[#allocation13 + $0x238] sm:$0xff]
        %v1259 = vld [vmem:[#allocation13 + $0x240] sm:$0xff]
        %v1260 = vld [vmem:[#allocation13 + $0x248] sm:$0xff]
        %v1261 = vld [vmem:[#allocation13 + $0x250] sm:$0xff]
        %v1262 = vld [vmem:[#allocation13 + $0x258] sm:$0xff]
        %v1263 = vld [vmem:[#allocation13 + $0x260] sm:$0xff]
        %v1264 = vld [vmem:[#allocation13 + $0x268] sm:$0xff]
        %v1265 = vld [vmem:[#allocation13 + $0x270] sm:$0xff]
        %v1266 = vld [vmem:[#allocation13 + $0x278] sm:$0xff]
        %v1267 = vld [vmem:[#allocation13 + $0x280] sm:$0xff]
        %v1268 = vld [vmem:[#allocation13 + $0x288] sm:$0xff]
        %v1269 = vld [vmem:[#allocation13 + $0x290] sm:$0xff]
        %v1270 = vld [vmem:[#allocation13 + $0x298] sm:$0xff]
        %v1271 = vld [vmem:[#allocation13 + $0x2a0] sm:$0xff]
        %v1272 = vld [vmem:[#allocation13 + $0x2a8] sm:$0xff]
        %v1273 = vld [vmem:[#allocation13 + $0x2b0] sm:$0xff]
        %v1274 = vld [vmem:[#allocation13 + $0x2b8] sm:$0xff]
        %v1275 = vld [vmem:[#allocation13 + $0x2c0] sm:$0xff]
        %v1276 = vld [vmem:[#allocation13 + $0x2c8] sm:$0xff]
        %v1277 = vld [vmem:[#allocation13 + $0x2d0] sm:$0xff]
        %v1278 = vld [vmem:[#allocation13 + $0x2d8] sm:$0xff]
        %v1279 = vld [vmem:[#allocation13 + $0x2e0] sm:$0xff]
        %v1280 = vld [vmem:[#allocation13 + $0x2e8] sm:$0xff]
        %v1281 = vld [vmem:[#allocation13 + $0x2f0] sm:$0xff]
        %v1282 = vld [vmem:[#allocation13 + $0x2f8] sm:$0xff]
        %v1283 = vld [vmem:[%s11] sm:$0x3f]
        %v1285 = vlaneseq
        %v1286 = vshrl.u32 %v1285, 7
        %v1287 = vsub.s32 0, %v1286
        %v1288 = vrot.slane %v1283, %v1287
        %v1289 = vlaneseq
        %v1290 = vshrl.u32 %v1289, 7
        %v1291 = vsub.s32 1, %v1290
        %v1292 = vrot.slane %v1283, %v1291
        %v1293 = vlaneseq
        %v1294 = vshrl.u32 %v1293, 7
        %v1295 = vsub.s32 2, %v1294
        %v1296 = vrot.slane %v1283, %v1295
        %v1297 = vlaneseq
        %v1298 = vshrl.u32 %v1297, 7
        %v1299 = vsub.s32 3, %v1298
        %v1300 = vrot.slane %v1283, %v1299
        %v1301 = vlaneseq
        %v1302 = vshrl.u32 %v1301, 7
        %v1303 = vsub.s32 4, %v1302
        %v1304 = vrot.slane %v1283, %v1303
        %v1305 = vlaneseq
        %v1306 = vshrl.u32 %v1305, 7
        %v1307 = vsub.s32 5, %v1306
        %v1308 = vrot.slane %v1283, %v1307
        %1315 = vmatprep.subr.mxu0 %v1188
        %1316 = vmatpush1.msra.mxu0 %v1187
        %1317 = vmatprep.subr.mxu0 %v1194
        %1318 = vmatpush1.msra.mxu0 %v1193
        %1319 = vmatprep.subr.mxu0 %v1200
        %1320 = vmatpush1.msra.mxu0 %v1199
        %1321 = vmatprep.subr.mxu0 %v1206
        %1322 = vmatpush1.msra.mxu0 %v1205
        %1323 = vmatprep.subr.mxu0 %v1212
        %1324 = vmatpush1.msra.mxu0 %v1211
        %1325 = vmatprep.subr.mxu0 %v1218
        %1326 = vmatpush1.msra.mxu0 %v1217
        %1327 = vmatprep.subr.mxu0 %v1224
        %1328 = vmatpush1.msra.mxu0 %v1223
        %1329 = vmatprep.subr.mxu0 %v1230
        %1330 = vmatpush1.msra.mxu0 %v1229
        %1331 = vmatprep.subr.mxu0 %v1236
        %1332 = vmatpush1.msra.mxu0 %v1235
        %1333 = vmatprep.subr.mxu0 %v1242
        %1334 = vmatpush1.msra.mxu0 %v1241
        %1335 = vmatprep.subr.mxu0 %v1248
        %1336 = vmatpush1.msra.mxu0 %v1247
        %1337 = vmatprep.subr.mxu0 %v1254
        %1338 = vmatpush1.msra.mxu0 %v1253
        %1339 = vmatprep.subr.mxu0 %v1260
        %1340 = vmatpush1.msra.mxu0 %v1259
        %1341 = vmatprep.subr.mxu0 %v1266
        %1342 = vmatpush1.msra.mxu0 %v1265
        %1343 = vmatprep.subr.mxu0 %v1272
        %1344 = vmatpush1.msra.mxu0 %v1271
        %1345 = vmatprep.subr.mxu0 %v1278
        %1346 = vmatpush1.msra.mxu0 %v1277
        %1347 = vmatprep.subr.mxu0 0.0
        %1348 = vmatpush1.msra.mxu0 0.0
        %1349 = vmatprep.subr.mxu0 0.0
        %1350 = vmatpush1.msra.mxu0 0.0
        %1351 = vmatprep.subr.mxu0 0.0
        %1352 = vmatpush1.msra.mxu0 0.0
        %1353 = vmatprep.subr.mxu0 0.0
        %1354 = vmatpush1.msra.mxu0 0.0
        %1355 = vmatprep.subr.mxu0 0.0
        %1356 = vmatpush1.msra.mxu0 0.0
        %1357 = vmatprep.subr.mxu0 0.0
        %1358 = vmatpush1.msra.mxu0 0.0
        %1359 = vmatprep.subr.mxu0 0.0
        %1360 = vmatpush1.msra.mxu0 0.0
        %1361 = vmatprep.subr.mxu0 0.0
        %1362 = vmatpush1.msra.mxu0 0.0
        %1363 = vmatprep.subr.mxu0 0.0
        %1364 = vmatpush1.msra.mxu0 0.0
        %1365 = vmatprep.subr.mxu0 0.0
        %1366 = vmatpush1.msra.mxu0 0.0
        %1367 = vmatprep.subr.mxu0 0.0
        %1368 = vmatpush1.msra.mxu0 0.0
        %1369 = vmatprep.subr.mxu0 0.0
        %1370 = vmatpush1.msra.mxu0 0.0
        %1371 = vmatprep.subr.mxu0 0.0
        %1372 = vmatpush1.msra.mxu0 0.0
        %1373 = vmatprep.subr.mxu0 0.0
        %1374 = vmatpush1.msra.mxu0 0.0
        %1375 = vmatprep.subr.mxu0 0.0
        %1376 = vmatpush1.msra.mxu0 0.0
        %1377 = vmatprep.subr.mxu0 0.0
        %1378 = vmatpush1.msra.mxu0 0.0
        %1379 = vmatprep.mubr.f32.mxu0 0.0
        %1380 = vmatmul.mubr.f32.gmra.mrb[0].mxu0 %v1186
        %v1381 = vpop.f32.mrb[0].mxu0
        %v1382 = vadd.f32 %v1288, %v1381
        %v1383 = vpop.f32.mrb[0].mxu0
        %v1384 = vadd.f32 %v1292, %v1383
        %1385 = vdwg.mxu0
        %1386 = vmatprep.subr.mxu0 %v1190
        %1387 = vmatpush1.msra.mxu0 %v1189
        %1388 = vmatprep.subr.mxu0 %v1196
        %1389 = vmatpush1.msra.mxu0 %v1195
        %1390 = vmatprep.subr.mxu0 %v1202
        %1391 = vmatpush1.msra.mxu0 %v1201
        %1392 = vmatprep.subr.mxu0 %v1208
        %1393 = vmatpush1.msra.mxu0 %v1207
        %1394 = vmatprep.subr.mxu0 %v1214
        %1395 = vmatpush1.msra.mxu0 %v1213
        %1396 = vmatprep.subr.mxu0 %v1220
        %1397 = vmatpush1.msra.mxu0 %v1219
        %1398 = vmatprep.subr.mxu0 %v1226
        %1399 = vmatpush1.msra.mxu0 %v1225
        %1400 = vmatprep.subr.mxu0 %v1232
        %1401 = vmatpush1.msra.mxu0 %v1231
        %1402 = vmatprep.subr.mxu0 %v1238
        %1403 = vmatpush1.msra.mxu0 %v1237
        %1404 = vmatprep.subr.mxu0 %v1244
        %1405 = vmatpush1.msra.mxu0 %v1243
        %1406 = vmatprep.subr.mxu0 %v1250
        %1407 = vmatpush1.msra.mxu0 %v1249
        %1408 = vmatprep.subr.mxu0 %v1256
        %1409 = vmatpush1.msra.mxu0 %v1255
        %1410 = vmatprep.subr.mxu0 %v1262
        %1411 = vmatpush1.msra.mxu0 %v1261
        %1412 = vmatprep.subr.mxu0 %v1268
        %1413 = vmatpush1.msra.mxu0 %v1267
        %1414 = vmatprep.subr.mxu0 %v1274
        %1415 = vmatpush1.msra.mxu0 %v1273
        %1416 = vmatprep.subr.mxu0 %v1280
        %1417 = vmatpush1.msra.mxu0 %v1279
        %1418 = vmatprep.subr.mxu0 0.0
        %1419 = vmatpush1.msra.mxu0 0.0
        %1420 = vmatprep.subr.mxu0 0.0
        %1421 = vmatpush1.msra.mxu0 0.0
        %1422 = vmatprep.subr.mxu0 0.0
        %1423 = vmatpush1.msra.mxu0 0.0
        %1424 = vmatprep.subr.mxu0 0.0
        %1425 = vmatpush1.msra.mxu0 0.0
        %1426 = vmatprep.subr.mxu0 0.0
        %1427 = vmatpush1.msra.mxu0 0.0
        %1428 = vmatprep.subr.mxu0 0.0
        %1429 = vmatpush1.msra.mxu0 0.0
        %1430 = vmatprep.subr.mxu0 0.0
        %1431 = vmatpush1.msra.mxu0 0.0
        %1432 = vmatprep.subr.mxu0 0.0
        %1433 = vmatpush1.msra.mxu0 0.0
        %1434 = vmatprep.subr.mxu0 0.0
        %1435 = vmatpush1.msra.mxu0 0.0
        %1436 = vmatprep.subr.mxu0 0.0
        %1437 = vmatpush1.msra.mxu0 0.0
        %1438 = vmatprep.subr.mxu0 0.0
        %1439 = vmatpush1.msra.mxu0 0.0
        %1440 = vmatprep.subr.mxu0 0.0
        %1441 = vmatpush1.msra.mxu0 0.0
        %1442 = vmatprep.subr.mxu0 0.0
        %1443 = vmatpush1.msra.mxu0 0.0
        %1444 = vmatprep.subr.mxu0 0.0
        %1445 = vmatpush1.msra.mxu0 0.0
        %1446 = vmatprep.subr.mxu0 0.0
        %1447 = vmatpush1.msra.mxu0 0.0
        %1448 = vmatprep.subr.mxu0 0.0
        %1449 = vmatpush1.msra.mxu0 0.0
        %1450 = vmatprep.mubr.f32.mxu0 0.0
        %1451 = vmatmul.mubr.f32.gmra.mrb[0].mxu0 %v1186
        %v1452 = vpop.f32.mrb[0].mxu0
        %v1453 = vadd.f32 %v1296, %v1452
        %v1454 = vpop.f32.mrb[0].mxu0
        %v1455 = vadd.f32 %v1300, %v1454
        %1456 = vdwg.mxu0
        %1457 = vmatprep.subr.mxu0 %v1192
        %1458 = vmatpush1.msra.mxu0 %v1191
        %1459 = vmatprep.subr.mxu0 %v1198
        %1460 = vmatpush1.msra.mxu0 %v1197
        %1461 = vmatprep.subr.mxu0 %v1204
        %1462 = vmatpush1.msra.mxu0 %v1203
        %1463 = vmatprep.subr.mxu0 %v1210
        %1464 = vmatpush1.msra.mxu0 %v1209
        %1465 = vmatprep.subr.mxu0 %v1216
        %1466 = vmatpush1.msra.mxu0 %v1215
        %1467 = vmatprep.subr.mxu0 %v1222
        %1468 = vmatpush1.msra.mxu0 %v1221
        %1469 = vmatprep.subr.mxu0 %v1228
        %1470 = vmatpush1.msra.mxu0 %v1227
        %1471 = vmatprep.subr.mxu0 %v1234
        %1472 = vmatpush1.msra.mxu0 %v1233
        %1473 = vmatprep.subr.mxu0 %v1240
        %1474 = vmatpush1.msra.mxu0 %v1239
        %1475 = vmatprep.subr.mxu0 %v1246
        %1476 = vmatpush1.msra.mxu0 %v1245
        %1477 = vmatprep.subr.mxu0 %v1252
        %1478 = vmatpush1.msra.mxu0 %v1251
        %1479 = vmatprep.subr.mxu0 %v1258
        %1480 = vmatpush1.msra.mxu0 %v1257
        %1481 = vmatprep.subr.mxu0 %v1264
        %1482 = vmatpush1.msra.mxu0 %v1263
        %1483 = vmatprep.subr.mxu0 %v1270
        %1484 = vmatpush1.msra.mxu0 %v1269
        %1485 = vmatprep.subr.mxu0 %v1276
        %1486 = vmatpush1.msra.mxu0 %v1275
        %1487 = vmatprep.subr.mxu0 %v1282
        %1488 = vmatpush1.msra.mxu0 %v1281
        %1489 = vmatprep.subr.mxu0 0.0
        %1490 = vmatpush1.msra.mxu0 0.0
        %1491 = vmatprep.subr.mxu0 0.0
        %1492 = vmatpush1.msra.mxu0 0.0
        %1493 = vmatprep.subr.mxu0 0.0
        %1494 = vmatpush1.msra.mxu0 0.0
        %1495 = vmatprep.subr.mxu0 0.0
        %1496 = vmatpush1.msra.mxu0 0.0
        %1497 = vmatprep.subr.mxu0 0.0
        %1498 = vmatpush1.msra.mxu0 0.0
        %1499 = vmatprep.subr.mxu0 0.0
        %1500 = vmatpush1.msra.mxu0 0.0
        %1501 = vmatprep.subr.mxu0 0.0
        %1502 = vmatpush1.msra.mxu0 0.0
        %1503 = vmatprep.subr.mxu0 0.0
        %1504 = vmatpush1.msra.mxu0 0.0
        %1505 = vmatprep.subr.mxu0 0.0
        %1506 = vmatpush1.msra.mxu0 0.0
        %1507 = vmatprep.subr.mxu0 0.0
        %1508 = vmatpush1.msra.mxu0 0.0
        %1509 = vmatprep.subr.mxu0 0.0
        %1510 = vmatpush1.msra.mxu0 0.0
        %1511 = vmatprep.subr.mxu0 0.0
        %1512 = vmatpush1.msra.mxu0 0.0
        %1513 = vmatprep.subr.mxu0 0.0
        %1514 = vmatpush1.msra.mxu0 0.0
        %1515 = vmatprep.subr.mxu0 0.0
        %1516 = vmatpush1.msra.mxu0 0.0
        %1517 = vmatprep.subr.mxu0 0.0
        %1518 = vmatpush1.msra.mxu0 0.0
        %1519 = vmatprep.subr.mxu0 0.0
        %1520 = vmatpush1.msra.mxu0 0.0
        %1521 = vmatprep.mubr.f32.mxu0 0.0
        %1522 = vmatmul.mubr.f32.gmra.mrb[0].mxu0 %v1186
        %v1523 = vpop.f32.mrb[0].mxu0
        %v1524 = vadd.f32 %v1304, %v1523
        %v1525 = vpop.f32.mrb[0].mxu0
        %v1526 = vadd.f32 %v1308, %v1525
        %1527 = vdwg.mxu0
        %v1528 = vld [vmem:[#allocation11] sm:$0xff]
        %v1529 = vld [vmem:[#allocation11 + $0x8] sm:$0xff]
        %v1530 = vld [vmem:[#allocation11 + $0x10] sm:$0xff]
        %v1531 = vld [vmem:[#allocation11 + $0x18] sm:$0xff]
        %v1532 = vld [vmem:[#allocation11 + $0x20] sm:$0xff]
        %v1533 = vld [vmem:[#allocation11 + $0x28] sm:$0xff]
        %v1534 = vld [vmem:[#allocation11 + $0x30] sm:$0xff]
        %v1535 = vld [vmem:[#allocation11 + $0x38] sm:$0xff]
        %v1536 = vld [vmem:[#allocation11 + $0x40] sm:$0xff]
        %v1537 = vld [vmem:[#allocation11 + $0x48] sm:$0xff]
        %v1538 = vld [vmem:[#allocation11 + $0x50] sm:$0xff]
        %v1539 = vld [vmem:[#allocation11 + $0x58] sm:$0xff]
        %v1540 = vld [vmem:[#allocation11 + $0x60] sm:$0xff]
        %v1541 = vld [vmem:[#allocation11 + $0x68] sm:$0xff]
        %v1542 = vld [vmem:[#allocation11 + $0x70] sm:$0xff]
        %v1543 = vld [vmem:[#allocation11 + $0x78] sm:$0xff]
        %v1544 = vld [vmem:[#allocation11 + $0x80] sm:$0xff]
        %v1545 = vld [vmem:[#allocation11 + $0x88] sm:$0xff]
        %v1546 = vld [vmem:[#allocation11 + $0x90] sm:$0xff]
        %v1547 = vld [vmem:[#allocation11 + $0x98] sm:$0xff]
        %v1548 = vld [vmem:[#allocation11 + $0xa0] sm:$0xff]
        %v1549 = vld [vmem:[#allocation11 + $0xa8] sm:$0xff]
        %v1550 = vld [vmem:[#allocation11 + $0xb0] sm:$0xff]
        %v1551 = vld [vmem:[#allocation11 + $0xb8] sm:$0xff]
        %v1552 = vld [vmem:[#allocation11 + $0xc0] sm:$0xff]
        %v1553 = vld [vmem:[#allocation11 + $0xc8] sm:$0xff]
        %v1554 = vld [vmem:[#allocation11 + $0xd0] sm:$0xff]
        %v1555 = vld [vmem:[#allocation11 + $0xd8] sm:$0xff]
        %v1556 = vld [vmem:[#allocation11 + $0xe0] sm:$0xff]
        %v1557 = vld [vmem:[#allocation11 + $0xe8] sm:$0xff]
        %v1558 = vld [vmem:[#allocation11 + $0xf0] sm:$0xff]
        %v1559 = vld [vmem:[#allocation11 + $0xf8] sm:$0xff]
        %v1560 = vld [vmem:[#allocation11 + $0x100] sm:$0xff]
        %v1561 = vld [vmem:[#allocation11 + $0x108] sm:$0xff]
        %v1562 = vld [vmem:[#allocation11 + $0x110] sm:$0xff]
        %v1563 = vld [vmem:[#allocation11 + $0x118] sm:$0xff]
        %v1564 = vld [vmem:[#allocation11 + $0x120] sm:$0xff]
        %v1565 = vld [vmem:[#allocation11 + $0x128] sm:$0xff]
        %v1566 = vld [vmem:[#allocation11 + $0x130] sm:$0xff]
        %v1567 = vld [vmem:[#allocation11 + $0x138] sm:$0xff]
        %v1568 = vld [vmem:[#allocation11 + $0x140] sm:$0xff]
        %v1569 = vld [vmem:[#allocation11 + $0x148] sm:$0xff]
        %v1570 = vld [vmem:[#allocation11 + $0x150] sm:$0xff]
        %v1571 = vld [vmem:[#allocation11 + $0x158] sm:$0xff]
        %v1572 = vld [vmem:[#allocation11 + $0x160] sm:$0xff]
        %v1573 = vld [vmem:[#allocation11 + $0x168] sm:$0xff]
        %v1574 = vld [vmem:[#allocation11 + $0x170] sm:$0xff]
        %v1575 = vld [vmem:[#allocation11 + $0x178] sm:$0xff]
        %v1576 = vld [vmem:[#allocation11 + $0x180] sm:$0xff]
        %v1577 = vld [vmem:[#allocation11 + $0x188] sm:$0xff]
        %v1578 = vld [vmem:[#allocation11 + $0x190] sm:$0xff]
        %v1579 = vld [vmem:[#allocation11 + $0x198] sm:$0xff]
        %v1580 = vld [vmem:[#allocation11 + $0x1a0] sm:$0xff]
        %v1581 = vld [vmem:[#allocation11 + $0x1a8] sm:$0xff]
        %v1582 = vld [vmem:[#allocation11 + $0x1b0] sm:$0xff]
        %v1583 = vld [vmem:[#allocation11 + $0x1b8] sm:$0xff]
        %v1584 = vld [vmem:[#allocation11 + $0x1c0] sm:$0xff]
        %v1585 = vld [vmem:[#allocation11 + $0x1c8] sm:$0xff]
        %v1586 = vld [vmem:[#allocation11 + $0x1d0] sm:$0xff]
        %v1587 = vld [vmem:[#allocation11 + $0x1d8] sm:$0xff]
        %v1588 = vld [vmem:[#allocation11 + $0x1e0] sm:$0xff]
        %v1589 = vld [vmem:[#allocation11 + $0x1e8] sm:$0xff]
        %v1590 = vld [vmem:[#allocation11 + $0x1f0] sm:$0xff]
        %v1591 = vld [vmem:[#allocation11 + $0x1f8] sm:$0xff]
        %v1592 = vld [vmem:[#allocation11 + $0x200] sm:$0xff]
        %v1593 = vld [vmem:[#allocation11 + $0x208] sm:$0xff]
        %v1594 = vld [vmem:[#allocation11 + $0x210] sm:$0xff]
        %v1595 = vld [vmem:[#allocation11 + $0x218] sm:$0xff]
        %v1596 = vld [vmem:[#allocation11 + $0x220] sm:$0xff]
        %v1597 = vld [vmem:[#allocation11 + $0x228] sm:$0xff]
        %v1598 = vld [vmem:[#allocation11 + $0x230] sm:$0xff]
        %v1599 = vld [vmem:[#allocation11 + $0x238] sm:$0xff]
        %v1600 = vld [vmem:[#allocation11 + $0x240] sm:$0xff]
        %v1601 = vld [vmem:[#allocation11 + $0x248] sm:$0xff]
        %v1602 = vld [vmem:[#allocation11 + $0x250] sm:$0xff]
        %v1603 = vld [vmem:[#allocation11 + $0x258] sm:$0xff]
        %v1604 = vld [vmem:[#allocation11 + $0x260] sm:$0xff]
        %v1605 = vld [vmem:[#allocation11 + $0x268] sm:$0xff]
        %v1606 = vld [vmem:[#allocation11 + $0x270] sm:$0xff]
        %v1607 = vld [vmem:[#allocation11 + $0x278] sm:$0xff]
        %v1608 = vld [vmem:[#allocation11 + $0x280] sm:$0xff]
        %v1609 = vld [vmem:[#allocation11 + $0x288] sm:$0xff]
        %v1610 = vld [vmem:[#allocation11 + $0x290] sm:$0xff]
        %v1611 = vld [vmem:[#allocation11 + $0x298] sm:$0xff]
        %v1612 = vld [vmem:[#allocation11 + $0x2a0] sm:$0xff]
        %v1613 = vld [vmem:[#allocation11 + $0x2a8] sm:$0xff]
        %v1614 = vld [vmem:[#allocation11 + $0x2b0] sm:$0xff]
        %v1615 = vld [vmem:[#allocation11 + $0x2b8] sm:$0xff]
        %v1616 = vld [vmem:[#allocation11 + $0x2c0] sm:$0xff]
        %v1617 = vld [vmem:[#allocation11 + $0x2c8] sm:$0xff]
        %v1618 = vld [vmem:[#allocation11 + $0x2d0] sm:$0xff]
        %v1619 = vld [vmem:[#allocation11 + $0x2d8] sm:$0xff]
        %v1620 = vld [vmem:[#allocation11 + $0x2e0] sm:$0xff]
        %v1621 = vld [vmem:[#allocation11 + $0x2e8] sm:$0xff]
        %v1622 = vld [vmem:[#allocation11 + $0x2f0] sm:$0xff]
        %v1623 = vld [vmem:[#allocation11 + $0x2f8] sm:$0xff]
        %v1624 = vlaneseq
        %v1625 = vshrl.u32 %v1624, 7
        %v1626 = vsub.s32 0, %v1625
        %v1627 = vrot.slane %v1382, %v1626
        %v1628 = vlaneseq
        %v1629 = vshrl.u32 %v1628, 7
        %v1630 = vsub.s32 0, %v1629
        %v1631 = vrot.slane %v1384, %v1630
        %v1632 = vlaneseq
        %v1633 = vshrl.u32 %v1632, 7
        %v1634 = vsub.s32 0, %v1633
        %v1635 = vrot.slane %v1453, %v1634
        %v1636 = vlaneseq
        %v1637 = vshrl.u32 %v1636, 7
        %v1638 = vsub.s32 0, %v1637
        %v1639 = vrot.slane %v1455, %v1638
        %v1640 = vlaneseq
        %v1641 = vshrl.u32 %v1640, 7
        %v1642 = vsub.s32 0, %v1641
        %v1643 = vrot.slane %v1524, %v1642
        %v1644 = vlaneseq
        %v1645 = vshrl.u32 %v1644, 7
        %v1646 = vsub.s32 0, %v1645
        %v1647 = vrot.slane %v1526, %v1646
        %1648 = vmatprep.subr.mxu0 %v1529
        %1649 = vmatpush1.msra.mxu0 %v1528
        %1650 = vmatprep.subr.mxu0 %v1535
        %1651 = vmatpush1.msra.mxu0 %v1534
        %1652 = vmatprep.subr.mxu0 %v1541
        %1653 = vmatpush1.msra.mxu0 %v1540
        %1654 = vmatprep.subr.mxu0 %v1547
        %1655 = vmatpush1.msra.mxu0 %v1546
        %1656 = vmatprep.subr.mxu0 %v1553
        %1657 = vmatpush1.msra.mxu0 %v1552
        %1658 = vmatprep.subr.mxu0 %v1559
        %1659 = vmatpush1.msra.mxu0 %v1558
        %1660 = vmatprep.subr.mxu0 %v1565
        %1661 = vmatpush1.msra.mxu0 %v1564
        %1662 = vmatprep.subr.mxu0 %v1571
        %1663 = vmatpush1.msra.mxu0 %v1570
        %1664 = vmatprep.subr.mxu0 %v1577
        %1665 = vmatpush1.msra.mxu0 %v1576
        %1666 = vmatprep.subr.mxu0 %v1583
        %1667 = vmatpush1.msra.mxu0 %v1582
        %1668 = vmatprep.subr.mxu0 %v1589
        %1669 = vmatpush1.msra.mxu0 %v1588
        %1670 = vmatprep.subr.mxu0 %v1595
        %1671 = vmatpush1.msra.mxu0 %v1594
        %1672 = vmatprep.subr.mxu0 %v1601
        %1673 = vmatpush1.msra.mxu0 %v1600
        %1674 = vmatprep.subr.mxu0 %v1607
        %1675 = vmatpush1.msra.mxu0 %v1606
        %1676 = vmatprep.subr.mxu0 %v1613
        %1677 = vmatpush1.msra.mxu0 %v1612
        %1678 = vmatprep.subr.mxu0 %v1619
        %1679 = vmatpush1.msra.mxu0 %v1618
        %1680 = vmatprep.subr.mxu0 0.0
        %1681 = vmatpush1.msra.mxu0 0.0
        %1682 = vmatprep.subr.mxu0 0.0
        %1683 = vmatpush1.msra.mxu0 0.0
        %1684 = vmatprep.subr.mxu0 0.0
        %1685 = vmatpush1.msra.mxu0 0.0
        %1686 = vmatprep.subr.mxu0 0.0
        %1687 = vmatpush1.msra.mxu0 0.0
        %1688 = vmatprep.subr.mxu0 0.0
        %1689 = vmatpush1.msra.mxu0 0.0
        %1690 = vmatprep.subr.mxu0 0.0
        %1691 = vmatpush1.msra.mxu0 0.0
        %1692 = vmatprep.subr.mxu0 0.0
        %1693 = vmatpush1.msra.mxu0 0.0
        %1694 = vmatprep.subr.mxu0 0.0
        %1695 = vmatpush1.msra.mxu0 0.0
        %1696 = vmatprep.subr.mxu0 0.0
        %1697 = vmatpush1.msra.mxu0 0.0
        %1698 = vmatprep.subr.mxu0 0.0
        %1699 = vmatpush1.msra.mxu0 0.0
        %1700 = vmatprep.subr.mxu0 0.0
        %1701 = vmatpush1.msra.mxu0 0.0
        %1702 = vmatprep.subr.mxu0 0.0
        %1703 = vmatpush1.msra.mxu0 0.0
        %1704 = vmatprep.subr.mxu0 0.0
        %1705 = vmatpush1.msra.mxu0 0.0
        %1706 = vmatprep.subr.mxu0 0.0
        %1707 = vmatpush1.msra.mxu0 0.0
        %1708 = vmatprep.subr.mxu0 0.0
        %1709 = vmatpush1.msra.mxu0 0.0
        %1710 = vmatprep.subr.mxu0 0.0
        %1711 = vmatpush1.msra.mxu0 0.0
        %1712 = vmatprep.mubr.f32.mxu0 0.0
        %1713 = vmatmul.mubr.f32.gmra.mrb[0].mxu0 %v976
        %v1714 = vpop.f32.mrb[0].mxu0
        %v1715 = vadd.f32 %v1627, %v1714
        %v1716 = vpop.f32.mrb[0].mxu0
        %v1717 = vadd.f32 %v1631, %v1716
        %1718 = vmatprep.mubr.f32.mxu0 0.0
        %1719 = vmatmul.mubr.f32.gmra.mrb[0].mxu0 %v977
        %v1720 = vpop.f32.mrb[0].mxu0
        %v1721 = vadd.f32 %v1627, %v1720
        %v1722 = vpop.f32.mrb[0].mxu0
        %v1723 = vadd.f32 %v1631, %v1722
        %1724 = vdwg.mxu0
        %1725 = vmatprep.subr.mxu0 %v1531
        %1726 = vmatpush1.msra.mxu0 %v1530
        %1727 = vmatprep.subr.mxu0 %v1537
        %1728 = vmatpush1.msra.mxu0 %v1536
        %1729 = vmatprep.subr.mxu0 %v1543
        %1730 = vmatpush1.msra.mxu0 %v1542
        %1731 = vmatprep.subr.mxu0 %v1549
        %1732 = vmatpush1.msra.mxu0 %v1548
        %1733 = vmatprep.subr.mxu0 %v1555
        %1734 = vmatpush1.msra.mxu0 %v1554
        %1735 = vmatprep.subr.mxu0 %v1561
        %1736 = vmatpush1.msra.mxu0 %v1560
        %1737 = vmatprep.subr.mxu0 %v1567
        %1738 = vmatpush1.msra.mxu0 %v1566
        %1739 = vmatprep.subr.mxu0 %v1573
        %1740 = vmatpush1.msra.mxu0 %v1572
        %1741 = vmatprep.subr.mxu0 %v1579
        %1742 = vmatpush1.msra.mxu0 %v1578
        %1743 = vmatprep.subr.mxu0 %v1585
        %1744 = vmatpush1.msra.mxu0 %v1584
        %1745 = vmatprep.subr.mxu0 %v1591
        %1746 = vmatpush1.msra.mxu0 %v1590
        %1747 = vmatprep.subr.mxu0 %v1597
        %1748 = vmatpush1.msra.mxu0 %v1596
        %1749 = vmatprep.subr.mxu0 %v1603
        %1750 = vmatpush1.msra.mxu0 %v1602
        %1751 = vmatprep.subr.mxu0 %v1609
        %1752 = vmatpush1.msra.mxu0 %v1608
        %1753 = vmatprep.subr.mxu0 %v1615
        %1754 = vmatpush1.msra.mxu0 %v1614
        %1755 = vmatprep.subr.mxu0 %v1621
        %1756 = vmatpush1.msra.mxu0 %v1620
        %1757 = vmatprep.subr.mxu0 0.0
        %1758 = vmatpush1.msra.mxu0 0.0
        %1759 = vmatprep.subr.mxu0 0.0
        %1760 = vmatpush1.msra.mxu0 0.0
        %1761 = vmatprep.subr.mxu0 0.0
        %1762 = vmatpush1.msra.mxu0 0.0
        %1763 = vmatprep.subr.mxu0 0.0
        %1764 = vmatpush1.msra.mxu0 0.0
        %1765 = vmatprep.subr.mxu0 0.0
        %1766 = vmatpush1.msra.mxu0 0.0
        %1767 = vmatprep.subr.mxu0 0.0
        %1768 = vmatpush1.msra.mxu0 0.0
        %1769 = vmatprep.subr.mxu0 0.0
        %1770 = vmatpush1.msra.mxu0 0.0
        %1771 = vmatprep.subr.mxu0 0.0
        %1772 = vmatpush1.msra.mxu0 0.0
        %1773 = vmatprep.subr.mxu0 0.0
        %1774 = vmatpush1.msra.mxu0 0.0
        %1775 = vmatprep.subr.mxu0 0.0
        %1776 = vmatpush1.msra.mxu0 0.0
        %1777 = vmatprep.subr.mxu0 0.0
        %1778 = vmatpush1.msra.mxu0 0.0
        %1779 = vmatprep.subr.mxu0 0.0
        %1780 = vmatpush1.msra.mxu0 0.0
        %1781 = vmatprep.subr.mxu0 0.0
        %1782 = vmatpush1.msra.mxu0 0.0
        %1783 = vmatprep.subr.mxu0 0.0
        %1784 = vmatpush1.msra.mxu0 0.0
        %1785 = vmatprep.subr.mxu0 0.0
        %1786 = vmatpush1.msra.mxu0 0.0
        %1787 = vmatprep.subr.mxu0 0.0
        %1788 = vmatpush1.msra.mxu0 0.0
        %1789 = vmatprep.mubr.f32.mxu0 0.0
        %1790 = vmatmul.mubr.f32.gmra.mrb[0].mxu0 %v976
        %v1791 = vpop.f32.mrb[0].mxu0
        %v1792 = vadd.f32 %v1635, %v1791
        %v1793 = vpop.f32.mrb[0].mxu0
        %v1794 = vadd.f32 %v1639, %v1793
        %1795 = vmatprep.mubr.f32.mxu0 0.0
        %1796 = vmatmul.mubr.f32.gmra.mrb[0].mxu0 %v977
        %v1797 = vpop.f32.mrb[0].mxu0
        %v1798 = vadd.f32 %v1635, %v1797
        %v1799 = vpop.f32.mrb[0].mxu0
        %v1800 = vadd.f32 %v1639, %v1799
        %1801 = vdwg.mxu0
        %1802 = vmatprep.subr.mxu0 %v1533
        %1803 = vmatpush1.msra.mxu0 %v1532
        %1804 = vmatprep.subr.mxu0 %v1539
        %1805 = vmatpush1.msra.mxu0 %v1538
        %1806 = vmatprep.subr.mxu0 %v1545
        %1807 = vmatpush1.msra.mxu0 %v1544
        %1808 = vmatprep.subr.mxu0 %v1551
        %1809 = vmatpush1.msra.mxu0 %v1550
        %1810 = vmatprep.subr.mxu0 %v1557
        %1811 = vmatpush1.msra.mxu0 %v1556
        %1812 = vmatprep.subr.mxu0 %v1563
        %1813 = vmatpush1.msra.mxu0 %v1562
        %1814 = vmatprep.subr.mxu0 %v1569
        %1815 = vmatpush1.msra.mxu0 %v1568
        %1816 = vmatprep.subr.mxu0 %v1575
        %1817 = vmatpush1.msra.mxu0 %v1574
        %1818 = vmatprep.subr.mxu0 %v1581
        %1819 = vmatpush1.msra.mxu0 %v1580
        %1820 = vmatprep.subr.mxu0 %v1587
        %1821 = vmatpush1.msra.mxu0 %v1586
        %1822 = vmatprep.subr.mxu0 %v1593
        %1823 = vmatpush1.msra.mxu0 %v1592
        %1824 = vmatprep.subr.mxu0 %v1599
        %1825 = vmatpush1.msra.mxu0 %v1598
        %1826 = vmatprep.subr.mxu0 %v1605
        %1827 = vmatpush1.msra.mxu0 %v1604
        %1828 = vmatprep.subr.mxu0 %v1611
        %1829 = vmatpush1.msra.mxu0 %v1610
        %1830 = vmatprep.subr.mxu0 %v1617
        %1831 = vmatpush1.msra.mxu0 %v1616
        %1832 = vmatprep.subr.mxu0 %v1623
        %1833 = vmatpush1.msra.mxu0 %v1622
        %1834 = vmatprep.subr.mxu0 0.0
        %1835 = vmatpush1.msra.mxu0 0.0
        %1836 = vmatprep.subr.mxu0 0.0
        %1837 = vmatpush1.msra.mxu0 0.0
        %1838 = vmatprep.subr.mxu0 0.0
        %1839 = vmatpush1.msra.mxu0 0.0
        %1840 = vmatprep.subr.mxu0 0.0
        %1841 = vmatpush1.msra.mxu0 0.0
        %1842 = vmatprep.subr.mxu0 0.0
        %1843 = vmatpush1.msra.mxu0 0.0
        %1844 = vmatprep.subr.mxu0 0.0
        %1845 = vmatpush1.msra.mxu0 0.0
        %1846 = vmatprep.subr.mxu0 0.0
        %1847 = vmatpush1.msra.mxu0 0.0
        %1848 = vmatprep.subr.mxu0 0.0
        %1849 = vmatpush1.msra.mxu0 0.0
        %1850 = vmatprep.subr.mxu0 0.0
        %1851 = vmatpush1.msra.mxu0 0.0
        %1852 = vmatprep.subr.mxu0 0.0
        %1853 = vmatpush1.msra.mxu0 0.0
        %1854 = vmatprep.subr.mxu0 0.0
        %1855 = vmatpush1.msra.mxu0 0.0
        %1856 = vmatprep.subr.mxu0 0.0
        %1857 = vmatpush1.msra.mxu0 0.0
        %1858 = vmatprep.subr.mxu0 0.0
        %1859 = vmatpush1.msra.mxu0 0.0
        %1860 = vmatprep.subr.mxu0 0.0
        %1861 = vmatpush1.msra.mxu0 0.0
        %1862 = vmatprep.subr.mxu0 0.0
        %1863 = vmatpush1.msra.mxu0 0.0
        %1864 = vmatprep.subr.mxu0 0.0
        %1865 = vmatpush1.msra.mxu0 0.0
        %1866 = vmatprep.mubr.f32.mxu0 0.0
        %1867 = vmatmul.mubr.f32.gmra.mrb[0].mxu0 %v976
        %v1868 = vpop.f32.mrb[0].mxu0
        %v1869 = vadd.f32 %v1643, %v1868
        %v1870 = vpop.f32.mrb[0].mxu0
        %v1871 = vadd.f32 %v1647, %v1870
        %1872 = vmatprep.mubr.f32.mxu0 0.0
        %1873 = vmatmul.mubr.f32.gmra.mrb[0].mxu0 %v977
        %v1874 = vpop.f32.mrb[0].mxu0
        %v1875 = vadd.f32 %v1643, %v1874
        %v1876 = vpop.f32.mrb[0].mxu0
        %v1877 = vadd.f32 %v1647, %v1876
        %1878 = vdwg.mxu0
        %v1879 = vpack.c.bf16 %v1721, %v1715
        %v1880 = vpack.c.bf16 %v1723, %v1717
        %v1881 = vpack.c.bf16 %v1798, %v1792
        %v1882 = vpack.c.bf16 %v1800, %v1794
        %v1883 = vpack.c.bf16 %v1875, %v1869
        %v1884 = vpack.c.bf16 %v1877, %v1871
        %v1885 = vld [vmem:[#allocation14] sm:$0xff]
        %v1886 = vld [vmem:[#allocation14 + $0x8] sm:$0xff]
        %v1887 = vld [vmem:[#allocation14 + $0x10] sm:$0xff]
        %v1888 = vld [vmem:[#allocation14 + $0x18] sm:$0xff]
        %v1889 = vld [vmem:[#allocation14 + $0x20] sm:$0xff]
        %v1890 = vld [vmem:[#allocation14 + $0x28] sm:$0xff]
        %v1891 = vld [vmem:[#allocation14 + $0x30] sm:$0xff]
        %v1892 = vld [vmem:[#allocation14 + $0x38] sm:$0xff]
        %v1893 = vld [vmem:[#allocation14 + $0x40] sm:$0xff]
        %v1894 = vld [vmem:[#allocation14 + $0x48] sm:$0xff]
        %v1895 = vld [vmem:[#allocation14 + $0x50] sm:$0xff]
        %v1896 = vld [vmem:[#allocation14 + $0x58] sm:$0xff]
        %v1897 = vld [vmem:[#allocation14 + $0x60] sm:$0xff]
        %v1898 = vld [vmem:[#allocation14 + $0x68] sm:$0xff]
        %v1899 = vld [vmem:[#allocation14 + $0x70] sm:$0xff]
        %v1900 = vld [vmem:[#allocation14 + $0x78] sm:$0xff]
        %v1901 = vld [vmem:[#allocation14 + $0x80] sm:$0xff]
        %v1902 = vld [vmem:[#allocation14 + $0x88] sm:$0xff]
        %v1903 = vld [vmem:[#allocation14 + $0x90] sm:$0xff]
        %v1904 = vld [vmem:[#allocation14 + $0x98] sm:$0xff]
        %v1905 = vld [vmem:[#allocation14 + $0xa0] sm:$0xff]
        %v1906 = vld [vmem:[#allocation14 + $0xa8] sm:$0xff]
        %v1907 = vld [vmem:[#allocation14 + $0xb0] sm:$0xff]
        %v1908 = vld [vmem:[#allocation14 + $0xb8] sm:$0xff]
        %v1909 = vld [vmem:[#allocation14 + $0xc0] sm:$0xff]
        %v1910 = vld [vmem:[#allocation14 + $0xc8] sm:$0xff]
        %v1911 = vld [vmem:[#allocation14 + $0xd0] sm:$0xff]
        %v1912 = vld [vmem:[#allocation14 + $0xd8] sm:$0xff]
        %v1913 = vld [vmem:[#allocation14 + $0xe0] sm:$0xff]
        %v1914 = vld [vmem:[#allocation14 + $0xe8] sm:$0xff]
        %v1915 = vld [vmem:[#allocation14 + $0xf0] sm:$0xff]
        %v1916 = vld [vmem:[#allocation14 + $0xf8] sm:$0xff]
        %v1917 = vld [vmem:[#allocation14 + $0x100] sm:$0xff]
        %v1918 = vld [vmem:[#allocation14 + $0x108] sm:$0xff]
        %v1919 = vld [vmem:[#allocation14 + $0x110] sm:$0xff]
        %v1920 = vld [vmem:[#allocation14 + $0x118] sm:$0xff]
        %v1921 = vld [vmem:[#allocation14 + $0x120] sm:$0xff]
        %v1922 = vld [vmem:[#allocation14 + $0x128] sm:$0xff]
        %v1923 = vld [vmem:[#allocation14 + $0x130] sm:$0xff]
        %v1924 = vld [vmem:[#allocation14 + $0x138] sm:$0xff]
        %v1925 = vld [vmem:[#allocation14 + $0x140] sm:$0xff]
        %v1926 = vld [vmem:[#allocation14 + $0x148] sm:$0xff]
        %v1927 = vld [vmem:[#allocation14 + $0x150] sm:$0xff]
        %v1928 = vld [vmem:[#allocation14 + $0x158] sm:$0xff]
        %v1929 = vld [vmem:[#allocation14 + $0x160] sm:$0xff]
        %v1930 = vld [vmem:[#allocation14 + $0x168] sm:$0xff]
        %v1931 = vld [vmem:[#allocation14 + $0x170] sm:$0xff]
        %v1932 = vld [vmem:[#allocation14 + $0x178] sm:$0xff]
        %v1933 = vld [vmem:[#allocation14 + $0x180] sm:$0xff]
        %v1934 = vld [vmem:[#allocation14 + $0x188] sm:$0xff]
        %v1935 = vld [vmem:[#allocation14 + $0x190] sm:$0xff]
        %v1936 = vld [vmem:[#allocation14 + $0x198] sm:$0xff]
        %v1937 = vld [vmem:[#allocation14 + $0x1a0] sm:$0xff]
        %v1938 = vld [vmem:[#allocation14 + $0x1a8] sm:$0xff]
        %v1939 = vld [vmem:[#allocation14 + $0x1b0] sm:$0xff]
        %v1940 = vld [vmem:[#allocation14 + $0x1b8] sm:$0xff]
        %v1941 = vld [vmem:[#allocation14 + $0x1c0] sm:$0xff]
        %v1942 = vld [vmem:[#allocation14 + $0x1c8] sm:$0xff]
        %v1943 = vld [vmem:[#allocation14 + $0x1d0] sm:$0xff]
        %v1944 = vld [vmem:[#allocation14 + $0x1d8] sm:$0xff]
        %v1945 = vld [vmem:[#allocation14 + $0x1e0] sm:$0xff]
        %v1946 = vld [vmem:[#allocation14 + $0x1e8] sm:$0xff]
        %v1947 = vld [vmem:[#allocation14 + $0x1f0] sm:$0xff]
        %v1948 = vld [vmem:[#allocation14 + $0x1f8] sm:$0xff]
        %vm1949 = vcmask 523264
        %v1951 = vsel %vm1949, %v1879, 0
        %v1954 = vsel %vm1949, %v1881, 0
        %1956 = vmatprep.subr.bf16.mxu0 0
        %1957 = vmatpush1.bf16.xpose.msra.mxu0 %v1954
        %1958 = vmatprep.subr.bf16.mxu0 0
        %1959 = vmatpush1.bf16.xpose.msra.mxu0 0
        %1960 = vmatprep.subr.bf16.mxu0 0
        %1961 = vmatpush1.bf16.xpose.msra.mxu0 0
        %1962 = vmatprep.subr.bf16.mxu0 0
        %1963 = vmatpush1.bf16.xpose.msra.mxu0 0
        %1964 = vmatprep.subr.bf16.mxu0 0
        %1965 = vmatpush1.bf16.xpose.msra.mxu0 0
        %1966 = vmatprep.subr.bf16.mxu0 0
        %1967 = vmatpush1.bf16.xpose.msra.mxu0 0
        %1968 = vmatprep.subr.bf16.mxu0 0
        %1969 = vmatpush1.bf16.xpose.msra.mxu0 0
        %1970 = vmatprep.subr.bf16.mxu0 0
        %1971 = vmatpush1.bf16.xpose.msra.mxu0 0
        %1972 = vmatprep.subr.bf16.mxu0 0
        %1973 = vmatpush1.bf16.xpose.msra.mxu0 0
        %1974 = vmatprep.subr.bf16.mxu0 0
        %1975 = vmatpush1.bf16.xpose.msra.mxu0 0
        %1976 = vmatprep.subr.bf16.mxu0 0
        %1977 = vmatpush1.bf16.xpose.msra.mxu0 0
        %1978 = vmatprep.subr.bf16.mxu0 0
        %1979 = vmatpush1.bf16.xpose.msra.mxu0 0
        %1980 = vmatprep.subr.bf16.mxu0 0
        %1981 = vmatpush1.bf16.xpose.msra.mxu0 0
        %1982 = vmatprep.subr.bf16.mxu0 0
        %1983 = vmatpush1.bf16.xpose.msra.mxu0 0
        %1984 = vmatprep.subr.bf16.mxu0 0
        %1985 = vmatpush1.bf16.xpose.msra.mxu0 0
        %1986 = vmatprep.subr.bf16.mxu0 0
        %1987 = vmatpush1.bf16.xpose.msra.mxu0 0
        %1988 = vmatprep.mubr.bf16.mxu0 0
        %1989 = vmatmul.mubr.bf16.gmra.mrb[0].mxu0 %v1951
        %v1990 = vpop.f32.mrb[0].mxu0
        %v1991 = vadd.f32 0.0, %v1990
        %v1992 = vpop.f32.mrb[0].mxu0
        %v1993 = vpop.f32.mrb[0].mxu0
        %v1994 = vadd.f32 0.0, %v1993
        %v1995 = vpop.f32.mrb[0].mxu0
        %1996 = vdwg.mxu0
        %vm1997 = vcmask 130048
        %v1998 = vsel %vm1997, %v1991, -inf
        %1999 = vmax.xlane.f32.xlu0 %v1998
        %v2000 = vpop.xlane.xlu0 %1999
        %v2001 = vsel %vm1997, %v1994, -inf
        %2002 = vmax.xlane.f32.xlu0 %v2001
        %v2003 = vpop.xlane.xlu0 %2002
        %v2004 = vsub.f32 -inf, %v2000
        %v2005 = vsub.f32 -inf, %v2003
        %v2006 = vmul.f32 %v2004, 1.442695
        %v2007 = vpow.pop %v2006
        %v2008 = vmul.f32 %v2005, 1.442695
        %v2009 = vpow.pop %v2008
        %v2010 = vsub.f32 %v1991, %v2000
        %v2011 = vsub.f32 %v1994, %v2003
        %v2012 = vmul.f32 %v2010, 1.442695
        %v2013 = vpow.pop %v2012
        %v2014 = vmul.f32 %v2011, 1.442695
        %v2015 = vpow.pop %v2014
        %v2016 = vmul.f32 %v2007, 0.0
        %v2017 = vmul.f32 %v2009, 0.0
        %v2018 = vsel %vm1997, %v2013, 0.0
        %2019 = vadd.xlane.f32.xlu0 %v2018
        %v2020 = vpop.xlane.xlu0 %2019
        %v2021 = vsel %vm1997, %v2015, 0.0
        %2022 = vadd.xlane.f32.xlu0 %v2021
        %v2023 = vpop.xlane.xlu0 %2022
        %v2024 = vadd.f32 %v2016, %v2020
        %v2025 = vadd.f32 %v2017, %v2023
        %v2026 = vpack.c.bf16 %v2015, %v2013
        %v2028 = vsel %vm1997, %v2026, 0
        %2030 = vmatprep.subr.bf16.mxu0 0
        %2031 = vmatpush1.bf16.msra.mxu0 %v1883
        %2032 = vmatprep.subr.bf16.mxu0 0
        %2033 = vmatpush1.bf16.msra.mxu0 0
        %2034 = vmatprep.subr.bf16.mxu0 0
        %2035 = vmatpush1.bf16.msra.mxu0 0
        %2036 = vmatprep.subr.bf16.mxu0 0
        %2037 = vmatpush1.bf16.msra.mxu0 0
        %2038 = vmatprep.subr.bf16.mxu0 0
        %2039 = vmatpush1.bf16.msra.mxu0 0
        %2040 = vmatprep.subr.bf16.mxu0 0
        %2041 = vmatpush1.bf16.msra.mxu0 0
        %2042 = vmatprep.subr.bf16.mxu0 0
        %2043 = vmatpush1.bf16.msra.mxu0 0
        %2044 = vmatprep.subr.bf16.mxu0 0
        %2045 = vmatpush1.bf16.msra.mxu0 0
        %2046 = vmatprep.subr.bf16.mxu0 0
        %2047 = vmatpush1.bf16.msra.mxu0 0
        %2048 = vmatprep.subr.bf16.mxu0 0
        %2049 = vmatpush1.bf16.msra.mxu0 0
        %2050 = vmatprep.subr.bf16.mxu0 0
        %2051 = vmatpush1.bf16.msra.mxu0 0
        %2052 = vmatprep.subr.bf16.mxu0 0
        %2053 = vmatpush1.bf16.msra.mxu0 0
        %2054 = vmatprep.subr.bf16.mxu0 0
        %2055 = vmatpush1.bf16.msra.mxu0 0
        %2056 = vmatprep.subr.bf16.mxu0 0
        %2057 = vmatpush1.bf16.msra.mxu0 0
        %2058 = vmatprep.subr.bf16.mxu0 0
        %2059 = vmatpush1.bf16.msra.mxu0 0
        %2060 = vmatprep.subr.bf16.mxu0 0
        %2061 = vmatpush1.bf16.msra.mxu0 0
        %2062 = vmatprep.mubr.bf16.mxu0 0
        %2063 = vmatmul.mubr.bf16.gmra.mrb[0].mxu0 %v2028
        %v2064 = vpop.f32.mrb[0].mxu0
        %v2065 = vadd.f32 0.0, %v2064
        %v2066 = vpop.f32.mrb[0].mxu0
        %v2067 = vpop.f32.mrb[0].mxu0
        %v2068 = vadd.f32 0.0, %v2067
        %v2069 = vpop.f32.mrb[0].mxu0
        %2070 = vdwg.mxu0
        %v2071 = vadd.f32 %v2016, %v2065
        %v2072 = vadd.f32 %v2017, %v2068
        %v2073 = vrcp.pop %v2024
        %v2074 = vrcp.pop %v2025
        %v2075 = vmul.f32 %v2071, %v2073
        %v2076 = vmul.f32 %v2072, %v2074
        %2078 = vrot.lane.b32.xlu0 %v1879, 64
        %v2079 = vpop.permute.xlu0 %2078
        %2081 = vrot.lane.b32.xlu0 %v1881, 64
        %v2082 = vpop.permute.xlu0 %2081
        %v2084 = vsel %vm1949, %v2079, 0
        %v2087 = vsel %vm1949, %v2082, 0
        %2089 = vmatprep.subr.bf16.mxu0 0
        %2090 = vmatpush1.bf16.xpose.msra.mxu0 %v2087
        %2091 = vmatprep.subr.bf16.mxu0 0
        %2092 = vmatpush1.bf16.xpose.msra.mxu0 0
        %2093 = vmatprep.subr.bf16.mxu0 0
        %2094 = vmatpush1.bf16.xpose.msra.mxu0 0
        %2095 = vmatprep.subr.bf16.mxu0 0
        %2096 = vmatpush1.bf16.xpose.msra.mxu0 0
        %2097 = vmatprep.subr.bf16.mxu0 0
        %2098 = vmatpush1.bf16.xpose.msra.mxu0 0
        %2099 = vmatprep.subr.bf16.mxu0 0
        %2100 = vmatpush1.bf16.xpose.msra.mxu0 0
        %2101 = vmatprep.subr.bf16.mxu0 0
        %2102 = vmatpush1.bf16.xpose.msra.mxu0 0
        %2103 = vmatprep.subr.bf16.mxu0 0
        %2104 = vmatpush1.bf16.xpose.msra.mxu0 0
        %2105 = vmatprep.subr.bf16.mxu0 0
        %2106 = vmatpush1.bf16.xpose.msra.mxu0 0
        %2107 = vmatprep.subr.bf16.mxu0 0
        %2108 = vmatpush1.bf16.xpose.msra.mxu0 0
        %2109 = vmatprep.subr.bf16.mxu0 0
        %2110 = vmatpush1.bf16.xpose.msra.mxu0 0
        %2111 = vmatprep.subr.bf16.mxu0 0
        %2112 = vmatpush1.bf16.xpose.msra.mxu0 0
        %2113 = vmatprep.subr.bf16.mxu0 0
        %2114 = vmatpush1.bf16.xpose.msra.mxu0 0
        %2115 = vmatprep.subr.bf16.mxu0 0
        %2116 = vmatpush1.bf16.xpose.msra.mxu0 0
        %2117 = vmatprep.subr.bf16.mxu0 0
        %2118 = vmatpush1.bf16.xpose.msra.mxu0 0
        %2119 = vmatprep.subr.bf16.mxu0 0
        %2120 = vmatpush1.bf16.xpose.msra.mxu0 0
        %2121 = vmatprep.mubr.bf16.mxu0 0
        %2122 = vmatmul.mubr.bf16.gmra.mrb[0].mxu0 %v2084
        %v2123 = vpop.f32.mrb[0].mxu0
        %v2124 = vadd.f32 0.0, %v2123
        %v2125 = vpop.f32.mrb[0].mxu0
        %v2126 = vpop.f32.mrb[0].mxu0
        %v2127 = vadd.f32 0.0, %v2126
        %v2128 = vpop.f32.mrb[0].mxu0
        %2129 = vdwg.mxu0
        %v2130 = vsel %vm1997, %v2124, -inf
        %2131 = vmax.xlane.f32.xlu0 %v2130
        %v2132 = vpop.xlane.xlu0 %2131
        %v2133 = vsel %vm1997, %v2127, -inf
        %2134 = vmax.xlane.f32.xlu0 %v2133
        %v2135 = vpop.xlane.xlu0 %2134
        %v2136 = vsub.f32 -inf, %v2132
        %v2137 = vsub.f32 -inf, %v2135
        %v2138 = vmul.f32 %v2136, 1.442695
        %v2139 = vpow.pop %v2138
        %v2140 = vmul.f32 %v2137, 1.442695
        %v2141 = vpow.pop %v2140
        %v2142 = vsub.f32 %v2124, %v2132
        %v2143 = vsub.f32 %v2127, %v2135
        %v2144 = vmul.f32 %v2142, 1.442695
        %v2145 = vpow.pop %v2144
        %v2146 = vmul.f32 %v2143, 1.442695
        %v2147 = vpow.pop %v2146
        %v2148 = vmul.f32 %v2139, 0.0
        %v2149 = vmul.f32 %v2141, 0.0
        %v2150 = vsel %vm1997, %v2145, 0.0
        %2151 = vadd.xlane.f32.xlu0 %v2150
        %v2152 = vpop.xlane.xlu0 %2151
        %v2153 = vsel %vm1997, %v2147, 0.0
        %2154 = vadd.xlane.f32.xlu0 %v2153
        %v2155 = vpop.xlane.xlu0 %2154
        %v2156 = vadd.f32 %v2148, %v2152
        %v2157 = vadd.f32 %v2149, %v2155
        %v2158 = vpack.c.bf16 %v2147, %v2145
        %2160 = vrot.lane.b32.xlu0 %v1883, 64
        %v2161 = vpop.permute.xlu0 %2160
        %v2164 = vsel %vm1997, %v2158, 0
        %2166 = vmatprep.subr.bf16.mxu0 0
        %2167 = vmatpush1.bf16.msra.mxu0 %v2161
        %2168 = vmatprep.subr.bf16.mxu0 0
        %2169 = vmatpush1.bf16.msra.mxu0 0
        %2170 = vmatprep.subr.bf16.mxu0 0
        %2171 = vmatpush1.bf16.msra.mxu0 0
        %2172 = vmatprep.subr.bf16.mxu0 0
        %2173 = vmatpush1.bf16.msra.mxu0 0
        %2174 = vmatprep.subr.bf16.mxu0 0
        %2175 = vmatpush1.bf16.msra.mxu0 0
        %2176 = vmatprep.subr.bf16.mxu0 0
        %2177 = vmatpush1.bf16.msra.mxu0 0
        %2178 = vmatprep.subr.bf16.mxu0 0
        %2179 = vmatpush1.bf16.msra.mxu0 0
        %2180 = vmatprep.subr.bf16.mxu0 0
        %2181 = vmatpush1.bf16.msra.mxu0 0
        %2182 = vmatprep.subr.bf16.mxu0 0
        %2183 = vmatpush1.bf16.msra.mxu0 0
        %2184 = vmatprep.subr.bf16.mxu0 0
        %2185 = vmatpush1.bf16.msra.mxu0 0
        %2186 = vmatprep.subr.bf16.mxu0 0
        %2187 = vmatpush1.bf16.msra.mxu0 0
        %2188 = vmatprep.subr.bf16.mxu0 0
        %2189 = vmatpush1.bf16.msra.mxu0 0
        %2190 = vmatprep.subr.bf16.mxu0 0
        %2191 = vmatpush1.bf16.msra.mxu0 0
        %2192 = vmatprep.subr.bf16.mxu0 0
        %2193 = vmatpush1.bf16.msra.mxu0 0
        %2194 = vmatprep.subr.bf16.mxu0 0
        %2195 = vmatpush1.bf16.msra.mxu0 0
        %2196 = vmatprep.subr.bf16.mxu0 0
        %2197 = vmatpush1.bf16.msra.mxu0 0
        %2198 = vmatprep.mubr.bf16.mxu0 0
        %2199 = vmatmul.mubr.bf16.gmra.mrb[0].mxu0 %v2164
        %v2200 = vpop.f32.mrb[0].mxu0
        %v2201 = vadd.f32 0.0, %v2200
        %v2202 = vpop.f32.mrb[0].mxu0
        %v2203 = vpop.f32.mrb[0].mxu0
        %v2204 = vadd.f32 0.0, %v2203
        %v2205 = vpop.f32.mrb[0].mxu0
        %2206 = vdwg.mxu0
        %v2207 = vadd.f32 %v2148, %v2201
        %v2208 = vadd.f32 %v2149, %v2204
        %v2209 = vrcp.pop %v2156
        %v2210 = vrcp.pop %v2157
        %v2211 = vmul.f32 %v2207, %v2209
        %v2212 = vmul.f32 %v2208, %v2210
        %v2214 = vsel %vm1949, %v2211, 0
        %v2217 = vsel %vm1949, %v2212, 0
        %2219 = vmatprep.subr.mxu0 %v1902
        %2220 = vmatpush1.msra.mxu0 %v1901
        %2221 = vmatprep.subr.mxu0 %v1904
        %2222 = vmatpush1.msra.mxu0 %v1903
        %2223 = vmatprep.subr.mxu0 %v1906
        %2224 = vmatpush1.msra.mxu0 %v1905
        %2225 = vmatprep.subr.mxu0 %v1908
        %2226 = vmatpush1.msra.mxu0 %v1907
        %2227 = vmatprep.subr.mxu0 %v1910
        %2228 = vmatpush1.msra.mxu0 %v1909
        %2229 = vmatprep.subr.mxu0 %v1912
        %2230 = vmatpush1.msra.mxu0 %v1911
        %2231 = vmatprep.subr.mxu0 %v1914
        %2232 = vmatpush1.msra.mxu0 %v1913
        %2233 = vmatprep.subr.mxu0 %v1916
        %2234 = vmatpush1.msra.mxu0 %v1915
        %2235 = vmatprep.subr.mxu0 0.0
        %2236 = vmatpush1.msra.mxu0 0.0
        %2237 = vmatprep.subr.mxu0 0.0
        %2238 = vmatpush1.msra.mxu0 0.0
        %2239 = vmatprep.subr.mxu0 0.0
        %2240 = vmatpush1.msra.mxu0 0.0
        %2241 = vmatprep.subr.mxu0 0.0
        %2242 = vmatpush1.msra.mxu0 0.0
        %2243 = vmatprep.subr.mxu0 0.0
        %2244 = vmatpush1.msra.mxu0 0.0
        %2245 = vmatprep.subr.mxu0 0.0
        %2246 = vmatpush1.msra.mxu0 0.0
        %2247 = vmatprep.subr.mxu0 0.0
        %2248 = vmatpush1.msra.mxu0 0.0
        %2249 = vmatprep.subr.mxu0 0.0
        %2250 = vmatpush1.msra.mxu0 0.0
        %2251 = vmatprep.subr.mxu0 0.0
        %2252 = vmatpush1.msra.mxu0 0.0
        %2253 = vmatprep.subr.mxu0 0.0
        %2254 = vmatpush1.msra.mxu0 0.0
        %2255 = vmatprep.subr.mxu0 0.0
        %2256 = vmatpush1.msra.mxu0 0.0
        %2257 = vmatprep.subr.mxu0 0.0
        %2258 = vmatpush1.msra.mxu0 0.0
        %2259 = vmatprep.subr.mxu0 0.0
        %2260 = vmatpush1.msra.mxu0 0.0
        %2261 = vmatprep.subr.mxu0 0.0
        %2262 = vmatpush1.msra.mxu0 0.0
        %2263 = vmatprep.subr.mxu0 0.0
        %2264 = vmatpush1.msra.mxu0 0.0
        %2265 = vmatprep.subr.mxu0 0.0
        %2266 = vmatpush1.msra.mxu0 0.0
        %2267 = vmatprep.subr.mxu0 0.0
        %2268 = vmatpush1.msra.mxu0 0.0
        %2269 = vmatprep.subr.mxu0 0.0
        %2270 = vmatpush1.msra.mxu0 0.0
        %2271 = vmatprep.subr.mxu0 0.0
        %2272 = vmatpush1.msra.mxu0 0.0
        %2273 = vmatprep.subr.mxu0 0.0
        %2274 = vmatpush1.msra.mxu0 0.0
        %2275 = vmatprep.subr.mxu0 0.0
        %2276 = vmatpush1.msra.mxu0 0.0
        %2277 = vmatprep.subr.mxu0 0.0
        %2278 = vmatpush1.msra.mxu0 0.0
        %2279 = vmatprep.subr.mxu0 0.0
        %2280 = vmatpush1.msra.mxu0 0.0
        %2281 = vmatprep.subr.mxu0 0.0
        %2282 = vmatpush1.msra.mxu0 0.0
        %2283 = vmatprep.mubr.f32.mxu0 0.0
        %2284 = vmatmul.mubr.f32.gmra.mrb[0].mxu0 %v2214
        %v2285 = vpop.f32.mrb[0].mxu0
        %v2286 = vadd.f32 0.0, %v2285
        %v2287 = vpop.f32.mrb[0].mxu0
        %v2288 = vadd.f32 0.0, %v2287
        %2289 = vmatprep.mubr.f32.mxu0 0.0
        %2290 = vmatmul.mubr.f32.gmra.mrb[0].mxu0 %v2217
        %v2291 = vpop.f32.mrb[0].mxu0
        %v2292 = vadd.f32 0.0, %v2291
        %v2293 = vpop.f32.mrb[0].mxu0
        %v2294 = vadd.f32 0.0, %v2293
        %2295 = vdwg.mxu0
        %v2297 = vsel %vm1949, %v2075, 0
        %v2300 = vsel %vm1949, %v2076, 0
        %2302 = vmatprep.subr.mxu0 %v1886
        %2303 = vmatpush1.msra.mxu0 %v1885
        %2304 = vmatprep.subr.mxu0 %v1888
        %2305 = vmatpush1.msra.mxu0 %v1887
        %2306 = vmatprep.subr.mxu0 %v1890
        %2307 = vmatpush1.msra.mxu0 %v1889
        %2308 = vmatprep.subr.mxu0 %v1892
        %2309 = vmatpush1.msra.mxu0 %v1891
        %2310 = vmatprep.subr.mxu0 %v1894
        %2311 = vmatpush1.msra.mxu0 %v1893
        %2312 = vmatprep.subr.mxu0 %v1896
        %2313 = vmatpush1.msra.mxu0 %v1895
        %2314 = vmatprep.subr.mxu0 %v1898
        %2315 = vmatpush1.msra.mxu0 %v1897
        %2316 = vmatprep.subr.mxu0 %v1900
        %2317 = vmatpush1.msra.mxu0 %v1899
        %2318 = vmatprep.subr.mxu0 0.0
        %2319 = vmatpush1.msra.mxu0 0.0
        %2320 = vmatprep.subr.mxu0 0.0
        %2321 = vmatpush1.msra.mxu0 0.0
        %2322 = vmatprep.subr.mxu0 0.0
        %2323 = vmatpush1.msra.mxu0 0.0
        %2324 = vmatprep.subr.mxu0 0.0
        %2325 = vmatpush1.msra.mxu0 0.0
        %2326 = vmatprep.subr.mxu0 0.0
        %2327 = vmatpush1.msra.mxu0 0.0
        %2328 = vmatprep.subr.mxu0 0.0
        %2329 = vmatpush1.msra.mxu0 0.0
        %2330 = vmatprep.subr.mxu0 0.0
        %2331 = vmatpush1.msra.mxu0 0.0
        %2332 = vmatprep.subr.mxu0 0.0
        %2333 = vmatpush1.msra.mxu0 0.0
        %2334 = vmatprep.subr.mxu0 0.0
        %2335 = vmatpush1.msra.mxu0 0.0
        %2336 = vmatprep.subr.mxu0 0.0
        %2337 = vmatpush1.msra.mxu0 0.0
        %2338 = vmatprep.subr.mxu0 0.0
        %2339 = vmatpush1.msra.mxu0 0.0
        %2340 = vmatprep.subr.mxu0 0.0
        %2341 = vmatpush1.msra.mxu0 0.0
        %2342 = vmatprep.subr.mxu0 0.0
        %2343 = vmatpush1.msra.mxu0 0.0
        %2344 = vmatprep.subr.mxu0 0.0
        %2345 = vmatpush1.msra.mxu0 0.0
        %2346 = vmatprep.subr.mxu0 0.0
        %2347 = vmatpush1.msra.mxu0 0.0
        %2348 = vmatprep.subr.mxu0 0.0
        %2349 = vmatpush1.msra.mxu0 0.0
        %2350 = vmatprep.subr.mxu0 0.0
        %2351 = vmatpush1.msra.mxu0 0.0
        %2352 = vmatprep.subr.mxu0 0.0
        %2353 = vmatpush1.msra.mxu0 0.0
        %2354 = vmatprep.subr.mxu0 0.0
        %2355 = vmatpush1.msra.mxu0 0.0
        %2356 = vmatprep.subr.mxu0 0.0
        %2357 = vmatpush1.msra.mxu0 0.0
        %2358 = vmatprep.subr.mxu0 0.0
        %2359 = vmatpush1.msra.mxu0 0.0
        %2360 = vmatprep.subr.mxu0 0.0
        %2361 = vmatpush1.msra.mxu0 0.0
        %2362 = vmatprep.subr.mxu0 0.0
        %2363 = vmatpush1.msra.mxu0 0.0
        %2364 = vmatprep.subr.mxu0 0.0
        %2365 = vmatpush1.msra.mxu0 0.0
        %2366 = vmatprep.mubr.f32.mxu0 0.0
        %2367 = vmatmul.mubr.f32.gmra.mrb[0].mxu0 %v2297
        %v2368 = vpop.f32.mrb[0].mxu0
        %v2369 = vadd.f32 %v2286, %v2368
        %v2370 = vpop.f32.mrb[0].mxu0
        %v2371 = vadd.f32 %v2288, %v2370
        %2372 = vmatprep.mubr.f32.mxu0 0.0
        %2373 = vmatmul.mubr.f32.gmra.mrb[0].mxu0 %v2300
        %v2374 = vpop.f32.mrb[0].mxu0
        %v2375 = vadd.f32 %v2292, %v2374
        %v2376 = vpop.f32.mrb[0].mxu0
        %v2377 = vadd.f32 %v2294, %v2376
        %2378 = vdwg.mxu0
        %v2380 = vsel %vm1949, %v1880, 0
        %v2383 = vsel %vm1949, %v1882, 0
        %2385 = vmatprep.subr.bf16.mxu0 0
        %2386 = vmatpush1.bf16.xpose.msra.mxu0 %v2383
        %2387 = vmatprep.subr.bf16.mxu0 0
        %2388 = vmatpush1.bf16.xpose.msra.mxu0 0
        %2389 = vmatprep.subr.bf16.mxu0 0
        %2390 = vmatpush1.bf16.xpose.msra.mxu0 0
        %2391 = vmatprep.subr.bf16.mxu0 0
        %2392 = vmatpush1.bf16.xpose.msra.mxu0 0
        %2393 = vmatprep.subr.bf16.mxu0 0
        %2394 = vmatpush1.bf16.xpose.msra.mxu0 0
        %2395 = vmatprep.subr.bf16.mxu0 0
        %2396 = vmatpush1.bf16.xpose.msra.mxu0 0
        %2397 = vmatprep.subr.bf16.mxu0 0
        %2398 = vmatpush1.bf16.xpose.msra.mxu0 0
        %2399 = vmatprep.subr.bf16.mxu0 0
        %2400 = vmatpush1.bf16.xpose.msra.mxu0 0
        %2401 = vmatprep.subr.bf16.mxu0 0
        %2402 = vmatpush1.bf16.xpose.msra.mxu0 0
        %2403 = vmatprep.subr.bf16.mxu0 0
        %2404 = vmatpush1.bf16.xpose.msra.mxu0 0
        %2405 = vmatprep.subr.bf16.mxu0 0
        %2406 = vmatpush1.bf16.xpose.msra.mxu0 0
        %2407 = vmatprep.subr.bf16.mxu0 0
        %2408 = vmatpush1.bf16.xpose.msra.mxu0 0
        %2409 = vmatprep.subr.bf16.mxu0 0
        %2410 = vmatpush1.bf16.xpose.msra.mxu0 0
        %2411 = vmatprep.subr.bf16.mxu0 0
        %2412 = vmatpush1.bf16.xpose.msra.mxu0 0
        %2413 = vmatprep.subr.bf16.mxu0 0
        %2414 = vmatpush1.bf16.xpose.msra.mxu0 0
        %2415 = vmatprep.subr.bf16.mxu0 0
        %2416 = vmatpush1.bf16.xpose.msra.mxu0 0
        %2417 = vmatprep.mubr.bf16.mxu0 0
        %2418 = vmatmul.mubr.bf16.gmra.mrb[0].mxu0 %v2380
        %v2419 = vpop.f32.mrb[0].mxu0
        %v2420 = vadd.f32 0.0, %v2419
        %v2421 = vpop.f32.mrb[0].mxu0
        %v2422 = vpop.f32.mrb[0].mxu0
        %v2423 = vadd.f32 0.0, %v2422
        %v2424 = vpop.f32.mrb[0].mxu0
        %2425 = vdwg.mxu0
        %v2426 = vsel %vm1997, %v2420, -inf
        %2427 = vmax.xlane.f32.xlu0 %v2426
        %v2428 = vpop.xlane.xlu0 %2427
        %v2429 = vsel %vm1997, %v2423, -inf
        %2430 = vmax.xlane.f32.xlu0 %v2429
        %v2431 = vpop.xlane.xlu0 %2430
        %v2432 = vsub.f32 -inf, %v2428
        %v2433 = vsub.f32 -inf, %v2431
        %v2434 = vmul.f32 %v2432, 1.442695
        %v2435 = vpow.pop %v2434
        %v2436 = vmul.f32 %v2433, 1.442695
        %v2437 = vpow.pop %v2436
        %v2438 = vsub.f32 %v2420, %v2428
        %v2439 = vsub.f32 %v2423, %v2431
        %v2440 = vmul.f32 %v2438, 1.442695
        %v2441 = vpow.pop %v2440
        %v2442 = vmul.f32 %v2439, 1.442695
        %v2443 = vpow.pop %v2442
        %v2444 = vmul.f32 %v2435, 0.0
        %v2445 = vmul.f32 %v2437, 0.0
        %v2446 = vsel %vm1997, %v2441, 0.0
        %2447 = vadd.xlane.f32.xlu0 %v2446
        %v2448 = vpop.xlane.xlu0 %2447
        %v2449 = vsel %vm1997, %v2443, 0.0
        %2450 = vadd.xlane.f32.xlu0 %v2449
        %v2451 = vpop.xlane.xlu0 %2450
        %v2452 = vadd.f32 %v2444, %v2448
        %v2453 = vadd.f32 %v2445, %v2451
        %v2454 = vpack.c.bf16 %v2443, %v2441
        %v2456 = vsel %vm1997, %v2454, 0
        %2458 = vmatprep.subr.bf16.mxu0 0
        %2459 = vmatpush1.bf16.msra.mxu0 %v1884
        %2460 = vmatprep.subr.bf16.mxu0 0
        %2461 = vmatpush1.bf16.msra.mxu0 0
        %2462 = vmatprep.subr.bf16.mxu0 0
        %2463 = vmatpush1.bf16.msra.mxu0 0
        %2464 = vmatprep.subr.bf16.mxu0 0
        %2465 = vmatpush1.bf16.msra.mxu0 0
        %2466 = vmatprep.subr.bf16.mxu0 0
        %2467 = vmatpush1.bf16.msra.mxu0 0
        %2468 = vmatprep.subr.bf16.mxu0 0
        %2469 = vmatpush1.bf16.msra.mxu0 0
        %2470 = vmatprep.subr.bf16.mxu0 0
        %2471 = vmatpush1.bf16.msra.mxu0 0
        %2472 = vmatprep.subr.bf16.mxu0 0
        %2473 = vmatpush1.bf16.msra.mxu0 0
        %2474 = vmatprep.subr.bf16.mxu0 0
        %2475 = vmatpush1.bf16.msra.mxu0 0
        %2476 = vmatprep.subr.bf16.mxu0 0
        %2477 = vmatpush1.bf16.msra.mxu0 0
        %2478 = vmatprep.subr.bf16.mxu0 0
        %2479 = vmatpush1.bf16.msra.mxu0 0
        %2480 = vmatprep.subr.bf16.mxu0 0
        %2481 = vmatpush1.bf16.msra.mxu0 0
        %2482 = vmatprep.subr.bf16.mxu0 0
        %2483 = vmatpush1.bf16.msra.mxu0 0
        %2484 = vmatprep.subr.bf16.mxu0 0
        %2485 = vmatpush1.bf16.msra.mxu0 0
        %2486 = vmatprep.subr.bf16.mxu0 0
        %2487 = vmatpush1.bf16.msra.mxu0 0
        %2488 = vmatprep.subr.bf16.mxu0 0
        %2489 = vmatpush1.bf16.msra.mxu0 0
        %2490 = vmatprep.mubr.bf16.mxu0 0
        %2491 = vmatmul.mubr.bf16.gmra.mrb[0].mxu0 %v2456
        %v2492 = vpop.f32.mrb[0].mxu0
        %v2493 = vadd.f32 0.0, %v2492
        %v2494 = vpop.f32.mrb[0].mxu0
        %v2495 = vpop.f32.mrb[0].mxu0
        %v2496 = vadd.f32 0.0, %v2495
        %v2497 = vpop.f32.mrb[0].mxu0
        %2498 = vdwg.mxu0
        %v2499 = vadd.f32 %v2444, %v2493
        %v2500 = vadd.f32 %v2445, %v2496
        %v2501 = vrcp.pop %v2452
        %v2502 = vrcp.pop %v2453
        %v2503 = vmul.f32 %v2499, %v2501
        %v2504 = vmul.f32 %v2500, %v2502
        %v2506 = vsel %vm1949, %v2503, 0
        %v2509 = vsel %vm1949, %v2504, 0
        %2511 = vmatprep.subr.mxu0 %v1918
        %2512 = vmatpush1.msra.mxu0 %v1917
        %2513 = vmatprep.subr.mxu0 %v1920
        %2514 = vmatpush1.msra.mxu0 %v1919
        %2515 = vmatprep.subr.mxu0 %v1922
        %2516 = vmatpush1.msra.mxu0 %v1921
        %2517 = vmatprep.subr.mxu0 %v1924
        %2518 = vmatpush1.msra.mxu0 %v1923
        %2519 = vmatprep.subr.mxu0 %v1926
        %2520 = vmatpush1.msra.mxu0 %v1925
        %2521 = vmatprep.subr.mxu0 %v1928
        %2522 = vmatpush1.msra.mxu0 %v1927
        %2523 = vmatprep.subr.mxu0 %v1930
        %2524 = vmatpush1.msra.mxu0 %v1929
        %2525 = vmatprep.subr.mxu0 %v1932
        %2526 = vmatpush1.msra.mxu0 %v1931
        %2527 = vmatprep.subr.mxu0 0.0
        %2528 = vmatpush1.msra.mxu0 0.0
        %2529 = vmatprep.subr.mxu0 0.0
        %2530 = vmatpush1.msra.mxu0 0.0
        %2531 = vmatprep.subr.mxu0 0.0
        %2532 = vmatpush1.msra.mxu0 0.0
        %2533 = vmatprep.subr.mxu0 0.0
        %2534 = vmatpush1.msra.mxu0 0.0
        %2535 = vmatprep.subr.mxu0 0.0
        %2536 = vmatpush1.msra.mxu0 0.0
        %2537 = vmatprep.subr.mxu0 0.0
        %2538 = vmatpush1.msra.mxu0 0.0
        %2539 = vmatprep.subr.mxu0 0.0
        %2540 = vmatpush1.msra.mxu0 0.0
        %2541 = vmatprep.subr.mxu0 0.0
        %2542 = vmatpush1.msra.mxu0 0.0
        %2543 = vmatprep.subr.mxu0 0.0
        %2544 = vmatpush1.msra.mxu0 0.0
        %2545 = vmatprep.subr.mxu0 0.0
        %2546 = vmatpush1.msra.mxu0 0.0
        %2547 = vmatprep.subr.mxu0 0.0
        %2548 = vmatpush1.msra.mxu0 0.0
        %2549 = vmatprep.subr.mxu0 0.0
        %2550 = vmatpush1.msra.mxu0 0.0
        %2551 = vmatprep.subr.mxu0 0.0
        %2552 = vmatpush1.msra.mxu0 0.0
        %2553 = vmatprep.subr.mxu0 0.0
        %2554 = vmatpush1.msra.mxu0 0.0
        %2555 = vmatprep.subr.mxu0 0.0
        %2556 = vmatpush1.msra.mxu0 0.0
        %2557 = vmatprep.subr.mxu0 0.0
        %2558 = vmatpush1.msra.mxu0 0.0
        %2559 = vmatprep.subr.mxu0 0.0
        %2560 = vmatpush1.msra.mxu0 0.0
        %2561 = vmatprep.subr.mxu0 0.0
        %2562 = vmatpush1.msra.mxu0 0.0
        %2563 = vmatprep.subr.mxu0 0.0
        %2564 = vmatpush1.msra.mxu0 0.0
        %2565 = vmatprep.subr.mxu0 0.0
        %2566 = vmatpush1.msra.mxu0 0.0
        %2567 = vmatprep.subr.mxu0 0.0
        %2568 = vmatpush1.msra.mxu0 0.0
        %2569 = vmatprep.subr.mxu0 0.0
        %2570 = vmatpush1.msra.mxu0 0.0
        %2571 = vmatprep.subr.mxu0 0.0
        %2572 = vmatpush1.msra.mxu0 0.0
        %2573 = vmatprep.subr.mxu0 0.0
        %2574 = vmatpush1.msra.mxu0 0.0
        %2575 = vmatprep.mubr.f32.mxu0 0.0
        %2576 = vmatmul.mubr.f32.gmra.mrb[0].mxu0 %v2506
        %v2577 = vpop.f32.mrb[0].mxu0
        %v2578 = vadd.f32 0.0, %v2577
        %v2579 = vpop.f32.mrb[0].mxu0
        %v2580 = vadd.f32 0.0, %v2579
        %2581 = vmatprep.mubr.f32.mxu0 0.0
        %2582 = vmatmul.mubr.f32.gmra.mrb[0].mxu0 %v2509
        %v2583 = vpop.f32.mrb[0].mxu0
        %v2584 = vadd.f32 0.0, %v2583
        %v2585 = vpop.f32.mrb[0].mxu0
        %v2586 = vadd.f32 0.0, %v2585
        %2587 = vdwg.mxu0
        %v2588 = vadd.f32 %v2369, %v2578
        %v2589 = vadd.f32 %v2371, %v2580
        %v2590 = vadd.f32 %v2375, %v2584
        %v2591 = vadd.f32 %v2377, %v2586
        %2593 = vrot.lane.b32.xlu0 %v1880, 64
        %v2594 = vpop.permute.xlu0 %2593
        %2596 = vrot.lane.b32.xlu0 %v1882, 64
        %v2597 = vpop.permute.xlu0 %2596
        %v2599 = vsel %vm1949, %v2594, 0
        %v2602 = vsel %vm1949, %v2597, 0
        %2604 = vmatprep.subr.bf16.mxu0 0
        %2605 = vmatpush1.bf16.xpose.msra.mxu0 %v2602
        %2606 = vmatprep.subr.bf16.mxu0 0
        %2607 = vmatpush1.bf16.xpose.msra.mxu0 0
        %2608 = vmatprep.subr.bf16.mxu0 0
        %2609 = vmatpush1.bf16.xpose.msra.mxu0 0
        %2610 = vmatprep.subr.bf16.mxu0 0
        %2611 = vmatpush1.bf16.xpose.msra.mxu0 0
        %2612 = vmatprep.subr.bf16.mxu0 0
        %2613 = vmatpush1.bf16.xpose.msra.mxu0 0
        %2614 = vmatprep.subr.bf16.mxu0 0
        %2615 = vmatpush1.bf16.xpose.msra.mxu0 0
        %2616 = vmatprep.subr.bf16.mxu0 0
        %2617 = vmatpush1.bf16.xpose.msra.mxu0 0
        %2618 = vmatprep.subr.bf16.mxu0 0
        %2619 = vmatpush1.bf16.xpose.msra.mxu0 0
        %2620 = vmatprep.subr.bf16.mxu0 0
        %2621 = vmatpush1.bf16.xpose.msra.mxu0 0
        %2622 = vmatprep.subr.bf16.mxu0 0
        %2623 = vmatpush1.bf16.xpose.msra.mxu0 0
        %2624 = vmatprep.subr.bf16.mxu0 0
        %2625 = vmatpush1.bf16.xpose.msra.mxu0 0
        %2626 = vmatprep.subr.bf16.mxu0 0
        %2627 = vmatpush1.bf16.xpose.msra.mxu0 0
        %2628 = vmatprep.subr.bf16.mxu0 0
        %2629 = vmatpush1.bf16.xpose.msra.mxu0 0
        %2630 = vmatprep.subr.bf16.mxu0 0
        %2631 = vmatpush1.bf16.xpose.msra.mxu0 0
        %2632 = vmatprep.subr.bf16.mxu0 0
        %2633 = vmatpush1.bf16.xpose.msra.mxu0 0
        %2634 = vmatprep.subr.bf16.mxu0 0
        %2635 = vmatpush1.bf16.xpose.msra.mxu0 0
        %2636 = vmatprep.mubr.bf16.mxu0 0
        %2637 = vmatmul.mubr.bf16.gmra.mrb[0].mxu0 %v2599
        %v2638 = vpop.f32.mrb[0].mxu0
        %v2639 = vadd.f32 0.0, %v2638
        %v2640 = vpop.f32.mrb[0].mxu0
        %v2641 = vpop.f32.mrb[0].mxu0
        %v2642 = vadd.f32 0.0, %v2641
        %v2643 = vpop.f32.mrb[0].mxu0
        %2644 = vdwg.mxu0
        %v2645 = vsel %vm1997, %v2639, -inf
        %2646 = vmax.xlane.f32.xlu0 %v2645
        %v2647 = vpop.xlane.xlu0 %2646
        %v2648 = vsel %vm1997, %v2642, -inf
        %2649 = vmax.xlane.f32.xlu0 %v2648
        %v2650 = vpop.xlane.xlu0 %2649
        %v2651 = vsub.f32 -inf, %v2647
        %v2652 = vsub.f32 -inf, %v2650
        %v2653 = vmul.f32 %v2651, 1.442695
        %v2654 = vpow.pop %v2653
        %v2655 = vmul.f32 %v2652, 1.442695
        %v2656 = vpow.pop %v2655
        %v2657 = vsub.f32 %v2639, %v2647
        %v2658 = vsub.f32 %v2642, %v2650
        %v2659 = vmul.f32 %v2657, 1.442695
        %v2660 = vpow.pop %v2659
        %v2661 = vmul.f32 %v2658, 1.442695
        %v2662 = vpow.pop %v2661
        %v2663 = vmul.f32 %v2654, 0.0
        %v2664 = vmul.f32 %v2656, 0.0
        %v2665 = vsel %vm1997, %v2660, 0.0
        %2666 = vadd.xlane.f32.xlu0 %v2665
        %v2667 = vpop.xlane.xlu0 %2666
        %v2668 = vsel %vm1997, %v2662, 0.0
        %2669 = vadd.xlane.f32.xlu0 %v2668
        %v2670 = vpop.xlane.xlu0 %2669
        %v2671 = vadd.f32 %v2663, %v2667
        %v2672 = vadd.f32 %v2664, %v2670
        %v2673 = vpack.c.bf16 %v2662, %v2660
        %2675 = vrot.lane.b32.xlu0 %v1884, 64
        %v2676 = vpop.permute.xlu0 %2675
        %v2679 = vsel %vm1997, %v2673, 0
        %2681 = vmatprep.subr.bf16.mxu0 0
        %2682 = vmatpush1.bf16.msra.mxu0 %v2676
        %2683 = vmatprep.subr.bf16.mxu0 0
        %2684 = vmatpush1.bf16.msra.mxu0 0
        %2685 = vmatprep.subr.bf16.mxu0 0
        %2686 = vmatpush1.bf16.msra.mxu0 0
        %2687 = vmatprep.subr.bf16.mxu0 0
        %2688 = vmatpush1.bf16.msra.mxu0 0
        %2689 = vmatprep.subr.bf16.mxu0 0
        %2690 = vmatpush1.bf16.msra.mxu0 0
        %2691 = vmatprep.subr.bf16.mxu0 0
        %2692 = vmatpush1.bf16.msra.mxu0 0
        %2693 = vmatprep.subr.bf16.mxu0 0
        %2694 = vmatpush1.bf16.msra.mxu0 0
        %2695 = vmatprep.subr.bf16.mxu0 0
        %2696 = vmatpush1.bf16.msra.mxu0 0
        %2697 = vmatprep.subr.bf16.mxu0 0
        %2698 = vmatpush1.bf16.msra.mxu0 0
        %2699 = vmatprep.subr.bf16.mxu0 0
        %2700 = vmatpush1.bf16.msra.mxu0 0
        %2701 = vmatprep.subr.bf16.mxu0 0
        %2702 = vmatpush1.bf16.msra.mxu0 0
        %2703 = vmatprep.subr.bf16.mxu0 0
        %2704 = vmatpush1.bf16.msra.mxu0 0
        %2705 = vmatprep.subr.bf16.mxu0 0
        %2706 = vmatpush1.bf16.msra.mxu0 0
        %2707 = vmatprep.subr.bf16.mxu0 0
        %2708 = vmatpush1.bf16.msra.mxu0 0
        %2709 = vmatprep.subr.bf16.mxu0 0
        %2710 = vmatpush1.bf16.msra.mxu0 0
        %2711 = vmatprep.subr.bf16.mxu0 0
        %2712 = vmatpush1.bf16.msra.mxu0 0
        %2713 = vmatprep.mubr.bf16.mxu0 0
        %2714 = vmatmul.mubr.bf16.gmra.mrb[0].mxu0 %v2679
        %v2715 = vpop.f32.mrb[0].mxu0
        %v2716 = vadd.f32 0.0, %v2715
        %v2717 = vpop.f32.mrb[0].mxu0
        %v2718 = vpop.f32.mrb[0].mxu0
        %v2719 = vadd.f32 0.0, %v2718
        %v2720 = vpop.f32.mrb[0].mxu0
        %2721 = vdwg.mxu0
        %v2722 = vadd.f32 %v2663, %v2716
        %v2723 = vadd.f32 %v2664, %v2719
        %v2724 = vrcp.pop %v2671
        %v2725 = vrcp.pop %v2672
        %v2726 = vmul.f32 %v2722, %v2724
        %v2727 = vmul.f32 %v2723, %v2725
        %v2729 = vsel %vm1949, %v2726, 0
        %v2732 = vsel %vm1949, %v2727, 0
        %2734 = vmatprep.subr.mxu0 %v1934
        %2735 = vmatpush1.msra.mxu0 %v1933
        %2736 = vmatprep.subr.mxu0 %v1936
        %2737 = vmatpush1.msra.mxu0 %v1935
        %2738 = vmatprep.subr.mxu0 %v1938
        %2739 = vmatpush1.msra.mxu0 %v1937
        %2740 = vmatprep.subr.mxu0 %v1940
        %2741 = vmatpush1.msra.mxu0 %v1939
        %2742 = vmatprep.subr.mxu0 %v1942
        %2743 = vmatpush1.msra.mxu0 %v1941
        %2744 = vmatprep.subr.mxu0 %v1944
        %2745 = vmatpush1.msra.mxu0 %v1943
        %2746 = vmatprep.subr.mxu0 %v1946
        %2747 = vmatpush1.msra.mxu0 %v1945
        %2748 = vmatprep.subr.mxu0 %v1948
        %2749 = vmatpush1.msra.mxu0 %v1947
        %2750 = vmatprep.subr.mxu0 0.0
        %2751 = vmatpush1.msra.mxu0 0.0
        %2752 = vmatprep.subr.mxu0 0.0
        %2753 = vmatpush1.msra.mxu0 0.0
        %2754 = vmatprep.subr.mxu0 0.0
        %2755 = vmatpush1.msra.mxu0 0.0
        %2756 = vmatprep.subr.mxu0 0.0
        %2757 = vmatpush1.msra.mxu0 0.0
        %2758 = vmatprep.subr.mxu0 0.0
        %2759 = vmatpush1.msra.mxu0 0.0
        %2760 = vmatprep.subr.mxu0 0.0
        %2761 = vmatpush1.msra.mxu0 0.0
        %2762 = vmatprep.subr.mxu0 0.0
        %2763 = vmatpush1.msra.mxu0 0.0
        %2764 = vmatprep.subr.mxu0 0.0
        %2765 = vmatpush1.msra.mxu0 0.0
        %2766 = vmatprep.subr.mxu0 0.0
        %2767 = vmatpush1.msra.mxu0 0.0
        %2768 = vmatprep.subr.mxu0 0.0
        %2769 = vmatpush1.msra.mxu0 0.0
        %2770 = vmatprep.subr.mxu0 0.0
        %2771 = vmatpush1.msra.mxu0 0.0
        %2772 = vmatprep.subr.mxu0 0.0
        %2773 = vmatpush1.msra.mxu0 0.0
        %2774 = vmatprep.subr.mxu0 0.0
        %2775 = vmatpush1.msra.mxu0 0.0
        %2776 = vmatprep.subr.mxu0 0.0
        %2777 = vmatpush1.msra.mxu0 0.0
        %2778 = vmatprep.subr.mxu0 0.0
        %2779 = vmatpush1.msra.mxu0 0.0
        %2780 = vmatprep.subr.mxu0 0.0
        %2781 = vmatpush1.msra.mxu0 0.0
        %2782 = vmatprep.subr.mxu0 0.0
        %2783 = vmatpush1.msra.mxu0 0.0
        %2784 = vmatprep.subr.mxu0 0.0
        %2785 = vmatpush1.msra.mxu0 0.0
        %2786 = vmatprep.subr.mxu0 0.0
        %2787 = vmatpush1.msra.mxu0 0.0
        %2788 = vmatprep.subr.mxu0 0.0
        %2789 = vmatpush1.msra.mxu0 0.0
        %2790 = vmatprep.subr.mxu0 0.0
        %2791 = vmatpush1.msra.mxu0 0.0
        %2792 = vmatprep.subr.mxu0 0.0
        %2793 = vmatpush1.msra.mxu0 0.0
        %2794 = vmatprep.subr.mxu0 0.0
        %2795 = vmatpush1.msra.mxu0 0.0
        %2796 = vmatprep.subr.mxu0 0.0
        %2797 = vmatpush1.msra.mxu0 0.0
        %2798 = vmatprep.mubr.f32.mxu0 0.0
        %2799 = vmatmul.mubr.f32.gmra.mrb[0].mxu0 %v2729
        %v2800 = vpop.f32.mrb[0].mxu0
        %v2801 = vadd.f32 0.0, %v2800
        %v2802 = vpop.f32.mrb[0].mxu0
        %v2803 = vadd.f32 0.0, %v2802
        %2804 = vmatprep.mubr.f32.mxu0 0.0
        %2805 = vmatmul.mubr.f32.gmra.mrb[0].mxu0 %v2732
        %v2806 = vpop.f32.mrb[0].mxu0
        %v2807 = vadd.f32 0.0, %v2806
        %v2808 = vpop.f32.mrb[0].mxu0
        %v2809 = vadd.f32 0.0, %v2808
        %2810 = vdwg.mxu0
        %v2811 = vadd.f32 %v2588, %v2801
        %v2812 = vadd.f32 %v2589, %v2803
        %v2813 = vadd.f32 %v2590, %v2807
        %v2814 = vadd.f32 %v2591, %v2809
        %v2815 = vld [vmem:[%s13] sm:$0x3]
        %v2817 = vlaneseq
        %v2818 = vshrl.u32 %v2817, 7
        %v2819 = vsub.s32 0, %v2818
        %v2820 = vrot.slane %v2815, %v2819
        %v2821 = vlaneseq
        %v2822 = vshrl.u32 %v2821, 7
        %v2823 = vsub.s32 1, %v2822
        %v2824 = vrot.slane %v2815, %v2823
        %v2827 = vadd.f32 %v2811, %v2820
        %v2828 = vadd.f32 %v2812, %v2824
        %v2829 = vadd.f32 %v2813, %v2820
        %v2830 = vadd.f32 %v2814, %v2824
        %v2831 = vadd.f32 %v2827, %v848
        %v2832 = vadd.f32 %v2828, %v850
        %v2833 = vadd.f32 %v2829, %v854
        %v2834 = vadd.f32 %v2830, %v856
        %v2835 = vld [vmem:[#allocation16] sm:$0xff]
        %v2836 = vld [vmem:[#allocation16 + $0x8] sm:$0xff]
        %v2837 = vld [vmem:[#allocation16 + $0x10] sm:$0xff]
        %v2838 = vld [vmem:[#allocation16 + $0x18] sm:$0xff]
        %v2839 = vld [vmem:[#allocation16 + $0x20] sm:$0xff]
        %v2840 = vld [vmem:[#allocation16 + $0x28] sm:$0xff]
        %v2841 = vld [vmem:[#allocation16 + $0x30] sm:$0xff]
        %v2842 = vld [vmem:[#allocation16 + $0x38] sm:$0xff]
        %v2843 = vld [vmem:[#allocation16 + $0x40] sm:$0xff]
        %v2844 = vld [vmem:[#allocation16 + $0x48] sm:$0xff]
        %v2845 = vld [vmem:[#allocation16 + $0x50] sm:$0xff]
        %v2846 = vld [vmem:[#allocation16 + $0x58] sm:$0xff]
        %v2847 = vld [vmem:[#allocation16 + $0x60] sm:$0xff]
        %v2848 = vld [vmem:[#allocation16 + $0x68] sm:$0xff]
        %v2849 = vld [vmem:[#allocation16 + $0x70] sm:$0xff]
        %v2850 = vld [vmem:[#allocation16 + $0x78] sm:$0xff]
        %v2851 = vld [vmem:[#allocation16 + $0x80] sm:$0xff]
        %v2852 = vld [vmem:[#allocation16 + $0x88] sm:$0xff]
        %v2853 = vld [vmem:[#allocation16 + $0x90] sm:$0xff]
        %v2854 = vld [vmem:[#allocation16 + $0x98] sm:$0xff]
        %v2855 = vld [vmem:[#allocation16 + $0xa0] sm:$0xff]
        %v2856 = vld [vmem:[#allocation16 + $0xa8] sm:$0xff]
        %v2857 = vld [vmem:[#allocation16 + $0xb0] sm:$0xff]
        %v2858 = vld [vmem:[#allocation16 + $0xb8] sm:$0xff]
        %v2859 = vld [vmem:[#allocation16 + $0xc0] sm:$0xff]
        %v2860 = vld [vmem:[#allocation16 + $0xc8] sm:$0xff]
        %v2861 = vld [vmem:[#allocation16 + $0xd0] sm:$0xff]
        %v2862 = vld [vmem:[#allocation16 + $0xd8] sm:$0xff]
        %v2863 = vld [vmem:[#allocation16 + $0xe0] sm:$0xff]
        %v2864 = vld [vmem:[#allocation16 + $0xe8] sm:$0xff]
        %v2865 = vld [vmem:[#allocation16 + $0xf0] sm:$0xff]
        %v2866 = vld [vmem:[#allocation16 + $0xf8] sm:$0xff]
        %v2867 = vld [vmem:[%s15] sm:$0x1]
        %v2869 = vlaneseq
        %v2870 = vshrl.u32 %v2869, 7
        %v2871 = vsub.s32 0, %v2870
        %v2872 = vrot.slane %v2867, %v2871
        %2874 = vmatprep.subr.mxu0 0.0
        %2875 = vmatpush1.msra.mxu0 %v2835
        %2876 = vmatprep.subr.mxu0 0.0
        %2877 = vmatpush1.msra.mxu0 %v2836
        %2878 = vmatprep.subr.mxu0 0.0
        %2879 = vmatpush1.msra.mxu0 %v2837
        %2880 = vmatprep.subr.mxu0 0.0
        %2881 = vmatpush1.msra.mxu0 %v2838
        %2882 = vmatprep.subr.mxu0 0.0
        %2883 = vmatpush1.msra.mxu0 %v2839
        %2884 = vmatprep.subr.mxu0 0.0
        %2885 = vmatpush1.msra.mxu0 %v2840
        %2886 = vmatprep.subr.mxu0 0.0
        %2887 = vmatpush1.msra.mxu0 %v2841
        %2888 = vmatprep.subr.mxu0 0.0
        %2889 = vmatpush1.msra.mxu0 %v2842
        %2890 = vmatprep.subr.mxu0 0.0
        %2891 = vmatpush1.msra.mxu0 %v2843
        %2892 = vmatprep.subr.mxu0 0.0
        %2893 = vmatpush1.msra.mxu0 %v2844
        %2894 = vmatprep.subr.mxu0 0.0
        %2895 = vmatpush1.msra.mxu0 %v2845
        %2896 = vmatprep.subr.mxu0 0.0
        %2897 = vmatpush1.msra.mxu0 %v2846
        %2898 = vmatprep.subr.mxu0 0.0
        %2899 = vmatpush1.msra.mxu0 %v2847
        %2900 = vmatprep.subr.mxu0 0.0
        %2901 = vmatpush1.msra.mxu0 %v2848
        %2902 = vmatprep.subr.mxu0 0.0
        %2903 = vmatpush1.msra.mxu0 %v2849
        %2904 = vmatprep.subr.mxu0 0.0
        %2905 = vmatpush1.msra.mxu0 %v2850
        %2906 = vmatprep.subr.mxu0 0.0
        %2907 = vmatpush1.msra.mxu0 %v2851
        %2908 = vmatprep.subr.mxu0 0.0
        %2909 = vmatpush1.msra.mxu0 %v2852
        %2910 = vmatprep.subr.mxu0 0.0
        %2911 = vmatpush1.msra.mxu0 %v2853
        %2912 = vmatprep.subr.mxu0 0.0
        %2913 = vmatpush1.msra.mxu0 %v2854
        %2914 = vmatprep.subr.mxu0 0.0
        %2915 = vmatpush1.msra.mxu0 %v2855
        %2916 = vmatprep.subr.mxu0 0.0
        %2917 = vmatpush1.msra.mxu0 %v2856
        %2918 = vmatprep.subr.mxu0 0.0
        %2919 = vmatpush1.msra.mxu0 %v2857
        %2920 = vmatprep.subr.mxu0 0.0
        %2921 = vmatpush1.msra.mxu0 %v2858
        %2922 = vmatprep.subr.mxu0 0.0
        %2923 = vmatpush1.msra.mxu0 %v2859
        %2924 = vmatprep.subr.mxu0 0.0
        %2925 = vmatpush1.msra.mxu0 %v2860
        %2926 = vmatprep.subr.mxu0 0.0
        %2927 = vmatpush1.msra.mxu0 %v2861
        %2928 = vmatprep.subr.mxu0 0.0
        %2929 = vmatpush1.msra.mxu0 %v2862
        %2930 = vmatprep.subr.mxu0 0.0
        %2931 = vmatpush1.msra.mxu0 %v2863
        %2932 = vmatprep.subr.mxu0 0.0
        %2933 = vmatpush1.msra.mxu0 %v2864
        %2934 = vmatprep.subr.mxu0 0.0
        %2935 = vmatpush1.msra.mxu0 %v2865
        %2936 = vmatprep.subr.mxu0 0.0
        %2937 = vmatpush1.msra.mxu0 %v2866
        %2938 = vmatprep.mubr.f32.mxu0 %v2832
        %2939 = vmatmul.mubr.f32.gmra.mrb[0].mxu0 %v2831
        %v2940 = vpop.f32.mrb[0].mxu0
        %v2941 = vadd.f32 %v2872, %v2940
        %v2942 = vpop.f32.mrb[0].mxu0
        %2943 = vmatprep.mubr.f32.mxu0 %v2834
        %2944 = vmatmul.mubr.f32.gmra.mrb[0].mxu0 %v2833
        %v2945 = vpop.f32.mrb[0].mxu0
        %v2946 = vadd.f32 %v2872, %v2945
        %v2947 = vpop.f32.mrb[0].mxu0
        %2948 = vdwg.mxu0
        %2949 = vst [vmem:[%s655] sm:$0xff] %v2941
        %2950 = vst [vmem:[%s655 + $0x8] sm:$0xff] %v2946
        %s2951 = sand.u32 %s386, 1
        %s2952 = scalar_lea.sflag [#allocation4], %s2951
        %s2953 = sand.u32 %s386, 1
        %s2954 = smul.addr %s2953, 16
        %s2955 = scalar_lea.vmem [#allocation17], %s2954
        // Predicated region
        $region121: #{tpu_custom_call.1} parent=83 // pred_check
          %p2956 = pneg %p396
        $region122: #{tpu_custom_call.1} parent=83 // pred_check_branch
          %2958 = sbr.rel (%p2956) target = $region124
        $region123: #{tpu_custom_call.1} parent=83 // pred_region
          %s2960 = ssub.s32 256, 256
          %2961 = vsyncadd %s2952, %s2960
          %s2962 = smul.addr %s37, 2
          %s2963 = smul.addr %s2962, 128
          %s2964 = scalar_lea.hbm %s16, %s2963
          %s2965 = sshll.u32 %s2955, 4
          %s2966 = int_to_ptr.vmem [resolvable:$true] %s2965
          %2971 = dma.vmem_to_hbm [thread:$0]  %s2966, 256, %s2964, %s2952, 128, 128, 8
        $region124: #{tpu_custom_call.1} parent=83 // pred_fallthru
          _
      $region84: #{tpu_custom_call.1} parent=5 // pred_fallthru
        _
      %p2972 = scmp.le.s32.totalorder 2, %s32
      // Predicated region
      $region125: #{tpu_custom_call.1} parent=5 // pred_check
        %p2973 = pneg %p2972
      $region126: #{tpu_custom_call.1} parent=5 // pred_check_branch
        %2975 = sbr.rel (%p2973) target = $region128
      $region127: #{tpu_custom_call.1} parent=5 // pred_region
        %s2976 = ssub.s32 %s32, 2
        // Predicated region
        $region129: #{tpu_custom_call.1} parent=127 // pred_check
          %p2977 = pneg %p402
        $region130: #{tpu_custom_call.1} parent=127 // pred_check_branch
          %2979 = sbr.rel (%p2977) target = $region132
        $region131: #{tpu_custom_call.1} parent=127 // pred_region
          %s2980 = sand.u32 %s387, 1
          %s2981 = scalar_lea.sflag [#allocation4], %s2980
          %s2982 = sand.u32 %s387, 1
          %s2983 = smul.addr %s2982, 16
          %s2984 = scalar_lea.vmem [#allocation17], %s2983
          %2985 = dma.done %s2981, 256
        $region132: #{tpu_custom_call.1} parent=127 // pred_fallthru
          _
      $region128: #{tpu_custom_call.1} parent=5 // pred_fallthru
        _
    $region6: #{tpu_custom_call.1} parent=1 // loop_footer
      %s36 = sadd.s32 1, %s32
    $region7: #{tpu_custom_call.1} parent=1 // loop_footer_branch
      %31 = sbr.rel target = $region3
    $region8: #{tpu_custom_call.1} parent=1 // loop_exit
      _
    %2986 = vsyncpa [#allocation3], 1
    %s2987 = scalar_lea.sflag [#allocation3], 1
    %2988 = vsyncpa %s2987, 1
    %2989 = vsyncpa [#allocation6], 1
    %2990 = vsyncpa [#allocation9], 1
    %2991 = vsyncpa [#allocation12], 1
    %2992 = vsyncpa [#allocation15], 1
    %2993 = vsyncpa [#allocation4], 1
    %s2994 = scalar_lea.sflag [#allocation4], 1
    %2995 = vsyncpa %s2994, 1

</llo_original>
